<compile_context>
chip_gen: v5e
topology: v5e:2x2
jax: 0.10.0
libtpu: 0.0.40
codegen_flags: <defaults>
</compile_context>

<pallas_src>
import math

import jax
import jax.numpy as jnp
from jax.experimental import pallas as pl
from jax.experimental.pallas import tpu as pltpu


def _gfp_kernel(t_ref, w_ref, p_ref, o_ref):
    # t_ref: (TB, 1) f32   -- time column for this row block
    # w_ref: (1, 2H) f32   -- [2*pi*W | 2*pi*W], resident
    # p_ref: (1, 2H) f32   -- [0 | pi/2] phase row (cos(x) = sin(x + pi/2)), resident
    # o_ref: (TB, 2H) f32
    arg = t_ref[...] * w_ref[...] + p_ref[...]   # VPU broadcast outer product + phase
    o_ref[...] = jnp.sin(arg)                    # single transcendental pass, full-width store


def _choose_tb(batch, half_dim):
    """Row-block size: fits a ~20 MiB VMEM budget, >= 4 blocks when possible."""
    two_h = 2 * half_dim
    # double-buffered output tile + (TB, 2H) argument temporary + t column
    bytes_per_row = 2 * two_h * 4 + two_h * 4 + 8
    budget = 20 * 1024 * 1024   # safe on v5e/v6e (128 MiB) and v7x (64 MiB per TC)
    tb = budget // bytes_per_row
    tb = max(8, min(2048, tb))
    b8 = ((batch + 7) // 8) * 8
    tb = min(tb, b8)
    # Guarantee >= 4 row blocks when the batch allows it: lets
    # dimension_semantics=("parallel",) shard across v7x's two TensorCores
    # and gives the pipeline something to overlap.
    min_blocks = 4
    if (b8 + tb - 1) // tb < min_blocks and b8 >= min_blocks * 8:
        tb = max(8, ((b8 // min_blocks) // 8) * 8)
    tb = max(8, (tb // 8) * 8)
    return int(tb)


def gaussian_fourier_projection(t, W, *, fast_path_rows=128):
    """t: (B,) float, W: (embed_dim//2,) float -> (B, embed_dim) float32."""
    t = jnp.asarray(t, jnp.float32).reshape(-1)
    W = jnp.asarray(W, jnp.float32).reshape(-1)
    B = t.shape[0]
    H = W.shape[0]
    w2pi = W * (2.0 * math.pi)                  # fold the 2*pi scale into W once per call

    if B <= fast_path_rows:
        # Tiny batch: pallas_call launch + pipeline prologue would dominate; let XLA fuse it.
        t_proj = t[:, None] * w2pi[None, :]
        return jnp.concatenate([jnp.sin(t_proj), jnp.cos(t_proj)], axis=-1)

    two_h = 2 * H
    TB = _choose_tb(B, H)
    grid_rows = pl.cdiv(B, TB)
    rows_pad = grid_rows * TB

    # Only the tiny (B, 1) t column is padded (O(B) bytes); the output is exactly (B, 2H)
    # and the partial last row block is handled by Pallas' out-of-bounds write masking.
    t2d = t.reshape(B, 1)
    if rows_pad != B:
        t2d = jnp.pad(t2d, ((0, rows_pad - B), (0, 0)))

    w_ext = jnp.concatenate([w2pi, w2pi]).reshape(1, two_h)
    phase = jnp.concatenate(
        [jnp.zeros((H,), jnp.float32), jnp.full((H,), 0.5 * math.pi, jnp.float32)]
    ).reshape(1, two_h)

    # Explicit scoped-VMEM request sized from the actual tile footprint.
    vmem_bytes = (2 * TB * two_h * 4        # double-buffered output tile
                  + TB * two_h * 4          # argument temporary
                  + 2 * TB * 4              # double-buffered t column
                  + 4 * two_h * 4           # w_ext + phase rows
                  + (2 << 20))              # headroom
    vmem_limit = int(min(48 * 1024 * 1024, max(8 * 1024 * 1024, vmem_bytes)))

    out = pl.pallas_call(
        _gfp_kernel,
        out_shape=jax.ShapeDtypeStruct((B, two_h), jnp.float32),
        grid=(grid_rows,),
        in_specs=[
            pl.BlockSpec((TB, 1), lambda i: (i, 0)),        # t tile marches down the rows
            pl.BlockSpec((1, two_h), lambda i: (0, 0)),     # scaled/duplicated W stays resident
            pl.BlockSpec((1, two_h), lambda i: (0, 0)),     # phase row stays resident
        ],
        out_specs=pl.BlockSpec((TB, two_h), lambda i: (i, 0)),
        compiler_params=pltpu.CompilerParams(
            dimension_semantics=("parallel",),              # independent row blocks (megacore on v7x)
            vmem_limit_bytes=vmem_limit,
        ),
    )(t2d, w_ext, phase)
    return out


def _reference(t, W):
    w2pi = W.astype(jnp.float32) * (2.0 * math.pi)
    t_proj = t.astype(jnp.float32).reshape(-1, 1) * w2pi[None, :]
    return jnp.concatenate([jnp.sin(t_proj), jnp.cos(t_proj)], axis=-1)


if __name__ == "__main__":
    key = jax.random.PRNGKey(0)
    k1, k2, k3, k4, k5 = jax.random.split(key, 5)

    # Case 1: module defaults (embed_dim=256, scale=30), tiny batch -> jnp fast path.
    embed_dim, scale, batch = 256, 30.0, 8
    W = jax.random.normal(k1, (embed_dim // 2,), dtype=jnp.float32) * scale
    t = jax.random.uniform(k2, (batch,), dtype=jnp.float32)
    out = gaussian_fourier_projection(t, W)
    jax.block_until_ready(out)
    assert out.shape == (batch, embed_dim)
    # scale=30 -> |arg| up to a few hundred; f32 sin/cos range-reduction differences
    # between lowerings bound the achievable agreement, so use a 1e-3 absolute tol.
    assert jnp.allclose(out, _reference(t, W), atol=1e-3, rtol=0.0), "case1 mismatch"

    # Case 2: Pallas path, lane-dense output (embed_dim % 128 == 0), batch = 512.
    batch2 = 512
    t2 = jax.random.uniform(k3, (batch2,), dtype=jnp.float32)
    out2 = gaussian_fourier_projection(t2, W)
    jax.block_until_ready(out2)
    assert out2.shape == (batch2, embed_dim)
    assert jnp.allclose(out2, _reference(t2, W), atol=1e-3, rtol=0.0), "case2 mismatch"

    # Case 3: Pallas path, ragged batch (333) and ragged half-dim (H=96, embed_dim=192),
    #         unit scale so arguments are small and the tolerance can be tight.
    embed_dim3, batch3 = 192, 333
    W3 = jax.random.normal(k4, (embed_dim3 // 2,), dtype=jnp.float32)
    t3 = jax.random.uniform(k5, (batch3,), dtype=jnp.float32)
    out3 = gaussian_fourier_projection(t3, W3)
    jax.block_until_ready(out3)
    assert out3.shape == (batch3, embed_dim3)
    assert jnp.allclose(out3, _reference(t3, W3), atol=1e-4, rtol=1e-4), "case3 mismatch"

    print("KERNEL_OK")
</pallas_src>

<mosaic_0001>
module attributes {stable_mosaic.version = 11 : i64} {
  func.func @_gfp_kernel(%arg0: i32, %arg1: memref<128x1xf32, #tpu.memory_space<vmem>>, %arg2: memref<1x256xf32, #tpu.memory_space<vmem>>, %arg3: memref<1x256xf32, #tpu.memory_space<vmem>>, %arg4: memref<128x256xf32, #tpu.memory_space<vmem>>) attributes {dimension_semantics = [#tpu.dimension_semantics<parallel>], iteration_bounds = array<i64: 4>, scalar_prefetch = 0 : i64, scratch_operands = 0 : i64, tpu.core_type = #tpu.core_type<tc>, window_params = [{transform_indices = @transform_0, window_bounds = array<i64: 128, 1>}, {pipeline_mode = #tpu.pipeline_mode<synchronous>, transform_indices = @transform_1, window_bounds = array<i64: 1, 256>}, {pipeline_mode = #tpu.pipeline_mode<synchronous>, transform_indices = @transform_2, window_bounds = array<i64: 1, 256>}, {transform_indices = @transform_3, window_bounds = array<i64: 128, 256>}]} {
    %c0 = arith.constant 0 : index
    %c0_0 = arith.constant 0 : index
    %0 = vector.load %arg1[%c0, %c0_0] : memref<128x1xf32, #tpu.memory_space<vmem>>, vector<128x1xf32>
    %c0_1 = arith.constant 0 : index
    %c0_2 = arith.constant 0 : index
    %1 = vector.load %arg2[%c0_1, %c0_2] : memref<1x256xf32, #tpu.memory_space<vmem>>, vector<1x256xf32>
    %2 = vector.broadcast %0 : vector<128x1xf32> to vector<128x256xf32>
    %3 = vector.broadcast %1 : vector<1x256xf32> to vector<128x256xf32>
    %4 = arith.mulf %2, %3 : vector<128x256xf32>
    %c0_3 = arith.constant 0 : index
    %c0_4 = arith.constant 0 : index
    %5 = vector.load %arg3[%c0_3, %c0_4] : memref<1x256xf32, #tpu.memory_space<vmem>>, vector<1x256xf32>
    %6 = vector.broadcast %5 : vector<1x256xf32> to vector<128x256xf32>
    %7 = arith.addf %4, %6 : vector<128x256xf32>
    %8 = math.sin %7 : vector<128x256xf32>
    %c0_5 = arith.constant 0 : index
    %c0_6 = arith.constant 0 : index
    %9 = vector.load %arg4[%c0_5, %c0_6] : memref<128x256xf32, #tpu.memory_space<vmem>>, vector<128x256xf32>
    tpu.vector_store %arg4[%c0_5, %c0_6], %8 {strides = array<i32>} : memref<128x256xf32, #tpu.memory_space<vmem>>, vector<128x256xf32>,
    return
  }
  func.func @transform_0(%arg0: i32) -> (i32, i32) {
    %c0_i32 = arith.constant 0 : i32
    %c0_i32_0 = arith.constant 0 : i32
    return %arg0, %c0_i32 : i32, i32
  }
  func.func @transform_1(%arg0: i32) -> (i32, i32) {
    %c0_i32 = arith.constant 0 : i32
    %c0_i32_0 = arith.constant 0 : i32
    %c0_i32_1 = arith.constant 0 : i32
    return %c0_i32, %c0_i32_0 : i32, i32
  }
  func.func @transform_2(%arg0: i32) -> (i32, i32) {
    %c0_i32 = arith.constant 0 : i32
    %c0_i32_0 = arith.constant 0 : i32
    %c0_i32_1 = arith.constant 0 : i32
    return %c0_i32, %c0_i32_0 : i32, i32
  }
  func.func @transform_3(%arg0: i32) -> (i32, i32) {
    %c0_i32 = arith.constant 0 : i32
    %c0_i32_0 = arith.constant 0 : i32
    return %arg0, %c0_i32 : i32, i32
  }
}

</mosaic_0001>

<llo_original>
// kernel: tpu_custom_call.1
$region0: #{tpu_custom_call.1}
  #allocation0 [shape = 'u32[]', space=smem, size = 0x4, offset = 0x4, fixed_abs, tag = 'smem constant byte address 0x4 - core index']
  #allocation1 [shape = 'u32[72,128]{1,0:T(1,128)}', space=vmem, size = 0x9000, scoped, tag = 'internal scratch']
  %s0 = inlined_call_operand.vmem [shape: f32[512,1], index: 0, kind: input, shape index: {}]
  %s1 = inlined_call_operand.vmem [shape: f32[1,256], index: 1, kind: input, shape index: {}]
  %s2 = inlined_call_operand.vmem [shape: f32[1,256], index: 2, kind: input, shape index: {}]
  %s3 = inlined_call_operand.hbm [shape: f32[512,256], index: 3, kind: output, shape index: {}]
  %s4 = sld [smem:[#allocation0]]
  $region45: #{tpu_custom_call.1} parent=0
    _
  %s6 = ssub.s32 1, %s4
  %s7 = scalar_select 0, %s6, %s4
  $region1: #{tpu_custom_call.1} parent=0
    #allocation2 [shape = 'u8[262144]{0}', space=vmem, size = 0x40000, scoped, tag = 'output window, operand 0']
    #allocation3 [shape = 's32[2]{0}', space=sflag, size = 0x8, scoped, tag = 'scoped memory for tpu_custom_call.1']
    %8 = vsyncpa [#allocation3], 0
    %s9 = scalar_lea.sflag [#allocation3], 1
    %10 = vsyncpa %s9, 0
    loop: start=0, step=1, limit=6
    $region2: #{tpu_custom_call.1} parent=1 // loop_pre_header
      _
    $region3: #{tpu_custom_call.1} parent=1 // loop_header
      %s12 = sphi 0, %s16
      %p13 = scmp.ge.s32.totalorder %s12, 6
      %s22 = sphi 0, %s24
      %s25 = sphi 0, %s22
      %s26 = sphi 0, %s25
      %s42 = sphi 0, %s26
      %s46 = sphi 0, %s46
      %s48 = sphi 0, %s46
      %s49 = sphi 0, %s48
      %s63 = sphi 0, %s49
      %s67 = sphi 0, %s67
      %s69 = sphi 0, %s67
      %s70 = sphi 0, %s69
      %s84 = sphi 0, %s70
      %s90 = sphi 0, %s92
      %s93 = sphi 0, %s90
      %s94 = sphi 0, %s93
      %s110 = sphi 0, %s94
    $region4: #{tpu_custom_call.1} parent=1 // loop_header_branch
      %15 = sbr.rel (%p13) target = $region8
    $region5: #{tpu_custom_call.1} parent=1 // loop_body
      %s17 = ssub.s32 %s12, 1
      %s18 = ssub.s32 %s12, 2
      %s19 = sadd.s32 %s12, 1
      %s20 = ssub.s32 %s12, %s19
      %p21 = scmp.eq.s32.totalorder %s20, 0
      %s23 = sadd.s32 %s22, 1
      %s24 = scalar_select %p21, %s22, %s23
      %p27 = pneg %p21
      %p28 = scmp.eq.s32.totalorder %s12, 3
      %p29 = por %p27, %p28
      %p30 = scmp.ne.s32.totalorder %s22, %s25
      %p31 = scmp.eq.s32.totalorder %s12, 0
      %p32 = por %p30, %p31
      %p33 = scmp.ne.s32.totalorder %s22, %s25
      %p34 = scmp.eq.s32.totalorder %s17, 3
      %p35 = por %p33, %p34
      %p36 = scmp.ne.s32.totalorder %s25, %s26
      %p37 = scmp.eq.s32.totalorder %s17, 0
      %p38 = por %p36, %p37
      %p39 = scmp.ne.s32.totalorder %s25, %s26
      %p40 = scmp.eq.s32.totalorder %s18, 3
      %p41 = por %p39, %p40
      %p43 = scmp.ne.s32.totalorder %s26, %s42
      %p44 = scmp.eq.s32.totalorder %s18, 0
      %p45 = por %p43, %p44
      %s47 = sadd.s32 %s46, 1
      %p50 = scmp.eq.s32.totalorder %s12, 3
      %p51 = scmp.ne.s32.totalorder %s46, %s48
      %p52 = scmp.eq.s32.totalorder %s12, 0
      %p53 = por %p51, %p52
      %p54 = scmp.ne.s32.totalorder %s46, %s48
      %p55 = scmp.eq.s32.totalorder %s17, 3
      %p56 = por %p54, %p55
      %p57 = scmp.ne.s32.totalorder %s48, %s49
      %p58 = scmp.eq.s32.totalorder %s17, 0
      %p59 = por %p57, %p58
      %p60 = scmp.ne.s32.totalorder %s48, %s49
      %p61 = scmp.eq.s32.totalorder %s18, 3
      %p62 = por %p60, %p61
      %p64 = scmp.ne.s32.totalorder %s49, %s63
      %p65 = scmp.eq.s32.totalorder %s18, 0
      %p66 = por %p64, %p65
      %s68 = sadd.s32 %s67, 1
      %p71 = scmp.eq.s32.totalorder %s12, 3
      %p72 = scmp.ne.s32.totalorder %s67, %s69
      %p73 = scmp.eq.s32.totalorder %s12, 0
      %p74 = por %p72, %p73
      %p75 = scmp.ne.s32.totalorder %s67, %s69
      %p76 = scmp.eq.s32.totalorder %s17, 3
      %p77 = por %p75, %p76
      %p78 = scmp.ne.s32.totalorder %s69, %s70
      %p79 = scmp.eq.s32.totalorder %s17, 0
      %p80 = por %p78, %p79
      %p81 = scmp.ne.s32.totalorder %s69, %s70
      %p82 = scmp.eq.s32.totalorder %s18, 3
      %p83 = por %p81, %p82
      %p85 = scmp.ne.s32.totalorder %s70, %s84
      %p86 = scmp.eq.s32.totalorder %s18, 0
      %p87 = por %p85, %p86
      %s88 = ssub.s32 %s12, %s19
      %p89 = scmp.eq.s32.totalorder %s88, 0
      %s91 = sadd.s32 %s90, 1
      %s92 = scalar_select %p89, %s90, %s91
      %p95 = pneg %p89
      %p96 = scmp.eq.s32.totalorder %s12, 3
      %p97 = por %p95, %p96
      %p98 = scmp.ne.s32.totalorder %s90, %s93
      %p99 = scmp.eq.s32.totalorder %s12, 0
      %p100 = por %p98, %p99
      %p101 = scmp.ne.s32.totalorder %s90, %s93
      %p102 = scmp.eq.s32.totalorder %s17, 3
      %p103 = por %p101, %p102
      %p104 = scmp.ne.s32.totalorder %s93, %s94
      %p105 = scmp.eq.s32.totalorder %s17, 0
      %p106 = por %p104, %p105
      %p107 = scmp.ne.s32.totalorder %s93, %s94
      %p108 = scmp.eq.s32.totalorder %s18, 3
      %p109 = por %p107, %p108
      %p111 = scmp.ne.s32.totalorder %s94, %s110
      %p112 = scmp.eq.s32.totalorder %s18, 0
      %p113 = por %p111, %p112
      %p114 = scmp.le.s32.totalorder 1, %s12
      %p115 = scmp.lt.s32.totalorder %s12, 5
      %p116 = pnand %p114, %p115
      %p117 = pneg %p116
      // Predicated region
      $region9: #{tpu_custom_call.1} parent=5 // pred_check
        _
      $region10: #{tpu_custom_call.1} parent=5 // pred_check_branch
        %119 = sbr.rel (%p116) target = $region12
      $region11: #{tpu_custom_call.1} parent=5 // pred_region
        %s120 = ssub.s32 %s12, 1
        // Predicated region
        $region13: #{tpu_custom_call.1} parent=11 // pred_check
          %p121 = pneg %p59
        $region14: #{tpu_custom_call.1} parent=11 // pred_check_branch
          %123 = sbr.rel (%p121) target = $region16
        $region15: #{tpu_custom_call.1} parent=11 // pred_region
          _
        $region16: #{tpu_custom_call.1} parent=11 // pred_fallthru
          _
        // Predicated region
        $region17: #{tpu_custom_call.1} parent=11 // pred_check
          %p124 = pneg %p80
        $region18: #{tpu_custom_call.1} parent=11 // pred_check_branch
          %126 = sbr.rel (%p124) target = $region20
        $region19: #{tpu_custom_call.1} parent=11 // pred_region
          _
        $region20: #{tpu_custom_call.1} parent=11 // pred_fallthru
          _
      $region12: #{tpu_custom_call.1} parent=5 // pred_fallthru
        _
      %p127 = scmp.lt.s32.totalorder %s12, 4
      // Predicated region
      $region21: #{tpu_custom_call.1} parent=5 // pred_check
        %p128 = pneg %p127
      $region22: #{tpu_custom_call.1} parent=5 // pred_check_branch
        %130 = sbr.rel (%p128) target = $region24
      $region23: #{tpu_custom_call.1} parent=5 // pred_region
        // Predicated region
        $region25: #{tpu_custom_call.1} parent=23 // pred_check
          %p131 = pneg %p32
        $region26: #{tpu_custom_call.1} parent=23 // pred_check_branch
          %133 = sbr.rel (%p131) target = $region28
        $region27: #{tpu_custom_call.1} parent=23 // pred_region
          %s134 = smul.u32 16, %s12
          %p135 = scmp.lt.s32.totalorder %s134, 63
          %s136 = scalar_select %p135, %s134, 63
          %s137 = smul.addr %s136, 8
          %s138 = scalar_lea.vmem %s0, %s137
          %s139 = smul.u32 16, %s12
        $region28: #{tpu_custom_call.1} parent=23 // pred_fallthru
          _
      $region24: #{tpu_custom_call.1} parent=5 // pred_fallthru
        _
      %p140 = scmp.le.s32.totalorder 1, %s12
      %p141 = scmp.lt.s32.totalorder %s12, 5
      %p142 = pnand %p140, %p141
      %p143 = pneg %p142
      // Predicated region
      $region29: #{tpu_custom_call.1} parent=5 // pred_check
        _
      $region30: #{tpu_custom_call.1} parent=5 // pred_check_branch
        %145 = sbr.rel (%p142) target = $region32
      $region31: #{tpu_custom_call.1} parent=5 // pred_region
        %s146 = ssub.s32 %s12, 1
        %s147 = smul.u32 16, %s17
        %p148 = scmp.lt.s32.totalorder %s147, 63
        %s149 = scalar_select %p148, %s147, 63
        %s150 = smul.addr %s149, 8
        %s151 = scalar_lea.vmem %s0, %s150
        %p152 = pneg %p38
        %p153 = pneg %p35
        %p154 = pneg %p59
        %p155 = pneg %p56
        %p156 = pneg %p80
        %p157 = pneg %p77
        %p158 = pneg %p106
        %p159 = pneg %p103
        %s160 = sand.u32 %s93, 1
        %s161 = scalar_lea.sflag [#allocation3], %s160
        %s162 = sand.u32 %s93, 1
        %s163 = smul.addr %s162, 256
        %s164 = scalar_lea.vmem [#allocation2], %s163
        %s165 = smul.u32 16, %s17
        %p166 = scmp.lt.s32.totalorder %s165, 63
        %s167 = scalar_select %p166, %s165, 63
        %s168 = smul.addr %s167, 8
        %s169 = scalar_lea.vmem %s0, %s168
        %s170 = smul.u32 16, %s17
        %s171 = smul.u32 16, %s17
        %v172 = vld [vmem:[%s169] sm:$0xff]
        %v173 = vld [vmem:[%s169 + $0x8] sm:$0xff]
        %v174 = vld [vmem:[%s169 + $0x10] sm:$0xff]
        %v175 = vld [vmem:[%s169 + $0x18] sm:$0xff]
        %v176 = vld [vmem:[%s169 + $0x20] sm:$0xff]
        %v177 = vld [vmem:[%s169 + $0x28] sm:$0xff]
        %v178 = vld [vmem:[%s169 + $0x30] sm:$0xff]
        %v179 = vld [vmem:[%s169 + $0x38] sm:$0xff]
        %v180 = vld [vmem:[%s169 + $0x40] sm:$0xff]
        %v181 = vld [vmem:[%s169 + $0x48] sm:$0xff]
        %v182 = vld [vmem:[%s169 + $0x50] sm:$0xff]
        %v183 = vld [vmem:[%s169 + $0x58] sm:$0xff]
        %v184 = vld [vmem:[%s169 + $0x60] sm:$0xff]
        %v185 = vld [vmem:[%s169 + $0x68] sm:$0xff]
        %v186 = vld [vmem:[%s169 + $0x70] sm:$0xff]
        %v187 = vld [vmem:[%s169 + $0x78] sm:$0xff]
        %v188 = vld [vmem:[%s1] sm:$0x3]
        %190 = vset.pattern.permute.xlu0 0
        %191 = vperm.xlu0 %190, %v172
        %v192 = vpop.permute.xlu0 %191
        %195 = vset.pattern.permute.xlu0 0
        %196 = vperm.xlu0 %195, %v173
        %v197 = vpop.permute.xlu0 %196
        %200 = vset.pattern.permute.xlu0 0
        %201 = vperm.xlu0 %200, %v174
        %v202 = vpop.permute.xlu0 %201
        %205 = vset.pattern.permute.xlu0 0
        %206 = vperm.xlu0 %205, %v175
        %v207 = vpop.permute.xlu0 %206
        %210 = vset.pattern.permute.xlu0 0
        %211 = vperm.xlu0 %210, %v176
        %v212 = vpop.permute.xlu0 %211
        %215 = vset.pattern.permute.xlu0 0
        %216 = vperm.xlu0 %215, %v177
        %v217 = vpop.permute.xlu0 %216
        %220 = vset.pattern.permute.xlu0 0
        %221 = vperm.xlu0 %220, %v178
        %v222 = vpop.permute.xlu0 %221
        %225 = vset.pattern.permute.xlu0 0
        %226 = vperm.xlu0 %225, %v179
        %v227 = vpop.permute.xlu0 %226
        %230 = vset.pattern.permute.xlu0 0
        %231 = vperm.xlu0 %230, %v180
        %v232 = vpop.permute.xlu0 %231
        %235 = vset.pattern.permute.xlu0 0
        %236 = vperm.xlu0 %235, %v181
        %v237 = vpop.permute.xlu0 %236
        %240 = vset.pattern.permute.xlu0 0
        %241 = vperm.xlu0 %240, %v182
        %v242 = vpop.permute.xlu0 %241
        %245 = vset.pattern.permute.xlu0 0
        %246 = vperm.xlu0 %245, %v183
        %v247 = vpop.permute.xlu0 %246
        %250 = vset.pattern.permute.xlu0 0
        %251 = vperm.xlu0 %250, %v184
        %v252 = vpop.permute.xlu0 %251
        %255 = vset.pattern.permute.xlu0 0
        %256 = vperm.xlu0 %255, %v185
        %v257 = vpop.permute.xlu0 %256
        %260 = vset.pattern.permute.xlu0 0
        %261 = vperm.xlu0 %260, %v186
        %v262 = vpop.permute.xlu0 %261
        %265 = vset.pattern.permute.xlu0 0
        %266 = vperm.xlu0 %265, %v187
        %v267 = vpop.permute.xlu0 %266
        %v270 = vperm.slane %v188, 0
        %v271 = vperm.slane %v188, 1
        %v274 = vmul.f32 %v192, %v270
        %v275 = vmul.f32 %v192, %v271
        %v276 = vmul.f32 %v197, %v270
        %v277 = vmul.f32 %v197, %v271
        %v278 = vmul.f32 %v202, %v270
        %v279 = vmul.f32 %v202, %v271
        %v280 = vmul.f32 %v207, %v270
        %v281 = vmul.f32 %v207, %v271
        %v282 = vmul.f32 %v212, %v270
        %v283 = vmul.f32 %v212, %v271
        %v284 = vmul.f32 %v217, %v270
        %v285 = vmul.f32 %v217, %v271
        %v286 = vmul.f32 %v222, %v270
        %v287 = vmul.f32 %v222, %v271
        %v288 = vmul.f32 %v227, %v270
        %v289 = vmul.f32 %v227, %v271
        %v290 = vmul.f32 %v232, %v270
        %v291 = vmul.f32 %v232, %v271
        %v292 = vmul.f32 %v237, %v270
        %v293 = vmul.f32 %v237, %v271
        %v294 = vmul.f32 %v242, %v270
        %v295 = vmul.f32 %v242, %v271
        %v296 = vmul.f32 %v247, %v270
        %v297 = vmul.f32 %v247, %v271
        %v298 = vmul.f32 %v252, %v270
        %v299 = vmul.f32 %v252, %v271
        %v300 = vmul.f32 %v257, %v270
        %v301 = vmul.f32 %v257, %v271
        %v302 = vmul.f32 %v262, %v270
        %v303 = vmul.f32 %v262, %v271
        %v304 = vmul.f32 %v267, %v270
        %v305 = vmul.f32 %v267, %v271
        %v306 = vld [vmem:[%s2] sm:$0x3]
        %v308 = vperm.slane %v306, 0
        %v309 = vperm.slane %v306, 1
        %v312 = vadd.f32 %v274, %v308
        %v313 = vadd.f32 %v275, %v309
        %v314 = vadd.f32 %v276, %v308
        %v315 = vadd.f32 %v277, %v309
        %v316 = vadd.f32 %v278, %v308
        %v317 = vadd.f32 %v279, %v309
        %v318 = vadd.f32 %v280, %v308
        %v319 = vadd.f32 %v281, %v309
        %v320 = vadd.f32 %v282, %v308
        %v321 = vadd.f32 %v283, %v309
        %v322 = vadd.f32 %v284, %v308
        %v323 = vadd.f32 %v285, %v309
        %v324 = vadd.f32 %v286, %v308
        %v325 = vadd.f32 %v287, %v309
        %v326 = vadd.f32 %v288, %v308
        %v327 = vadd.f32 %v289, %v309
        %v328 = vadd.f32 %v290, %v308
        %v329 = vadd.f32 %v291, %v309
        %v330 = vadd.f32 %v292, %v308
        %v331 = vadd.f32 %v293, %v309
        %v332 = vadd.f32 %v294, %v308
        %v333 = vadd.f32 %v295, %v309
        %v334 = vadd.f32 %v296, %v308
        %v335 = vadd.f32 %v297, %v309
        %v336 = vadd.f32 %v298, %v308
        %v337 = vadd.f32 %v299, %v309
        %v338 = vadd.f32 %v300, %v308
        %v339 = vadd.f32 %v301, %v309
        %v340 = vadd.f32 %v302, %v308
        %v341 = vadd.f32 %v303, %v309
        %v342 = vadd.f32 %v304, %v308
        %v343 = vadd.f32 %v305, %v309
        %v344 = vand.u32 2147483647, %v312
        %vm345 = vcmp.le.f32.partialorder %v344, 0.7853982
        %vm346 = vcmp.lt.s32.totalorder %v312, 0
        %v347 = vand.u32 %v312, 2139095040
        %v348 = vshrl.u32 %v347, 23
        %v349 = vsub.s32 %v348, 127
        %v350 = vand.u32 2147483647, %v312
        %v351 = vand.u32 %v350, 8388607
        %v352 = vor.u32 %v351, 8388608
        %v353 = vsub.s32 0, %v352
        %v354 = vadd.s32 %v349, 1
        %vm355 = vcmp.gt.s32.totalorder %v354, 0
        %v356 = vsel %vm355, %v354, 0
        %v357 = vshrl.u32 %v356, 5
        %v358 = vand.u32 %v356, 31
        %v359 = vsub.s32 32, %v358
        %v360 = vshrl.u32 683565275, %v359
        %v361 = vshll.u32 683565275, %v358
        %v362 = vshrl.u32 2475754826, %v359
        %v363 = vor.u32 %v361, %v362
        %v364 = vshll.u32 2475754826, %v358
        %v365 = vshrl.u32 2131351028, %v359
        %v366 = vor.u32 %v364, %v365
        %v367 = vshll.u32 2131351028, %v358
        %v368 = vshrl.u32 2102212464, %v359
        %v369 = vor.u32 %v367, %v368
        %v370 = vshll.u32 2102212464, %v358
        %v371 = vshrl.u32 920167782, %v359
        %v372 = vor.u32 %v370, %v371
        %v373 = vshll.u32 920167782, %v358
        %v374 = vshrl.u32 1326507024, %v359
        %v375 = vor.u32 %v373, %v374
        %vm376 = vcmp.lt.s32.totalorder %v357, 1
        %vm377 = vcmp.lt.s32.totalorder %v357, 2
        %vm378 = vcmp.lt.s32.totalorder %v357, 3
        %vm379 = vcmp.lt.s32.totalorder %v357, 4
        %v380 = vsel %vm376, %v360, %v363
        %v381 = vsel %vm379, %v369, 2102212464
        %v382 = vsel %vm378, %v366, %v381
        %v383 = vsel %vm377, %v380, %v382
        %v384 = vsel %vm376, %v363, %v366
        %v385 = vsel %vm379, %v372, 920167782
        %v386 = vsel %vm378, %v369, %v385
        %v387 = vsel %vm377, %v384, %v386
        %v388 = vsel %vm376, %v366, %v369
        %v389 = vsel %vm379, %v375, 1326507024
        %v390 = vsel %vm378, %v372, %v389
        %v391 = vsel %vm377, %v388, %v390
        %v392 = vshll.u32 %v352, 8
        %v393 = vand.u32 %v392, 65535
        %v394 = vshrl.u32 %v392, 16
        %v395 = vand.u32 %v391, 65535
        %v396 = vshrl.u32 %v391, 16
        %v397 = vmul.u32 %v393, %v395
        %v398 = vmul.u32 %v393, %v396
        %v399 = vmul.u32 %v394, %v395
        %v400 = vmul.u32 %v394, %v396
        %v401 = vshll.u32 %v398, 16
        %v402 = vshrl.u32 %v398, 16
        %v403 = vshll.u32 %v399, 16
        %v404 = vshrl.u32 %v399, 16
        %vm405 = vc.u32 %v397, %v401
        %v406 = vsel %vm405, 1, 0
        %v407 = vadd.s32 %v397, %v401
        %v408 = vadd.s32 %v400, %v406
        %vm409 = vc.u32 %v407, %v403
        %v410 = vsel %vm409, 1, 0
        %v411 = vadd.s32 %v407, %v403
        %v412 = vadd.s32 %v408, %v410
        %v413 = vadd.s32 %v412, %v402
        %v414 = vadd.s32 %v413, %v404
        %v415 = vand.u32 %v392, 65535
        %v416 = vshrl.u32 %v392, 16
        %v417 = vand.u32 %v387, 65535
        %v418 = vshrl.u32 %v387, 16
        %v419 = vmul.u32 %v415, %v417
        %v420 = vmul.u32 %v415, %v418
        %v421 = vmul.u32 %v416, %v417
        %v422 = vmul.u32 %v416, %v418
        %v423 = vshll.u32 %v420, 16
        %v424 = vshrl.u32 %v420, 16
        %v425 = vshll.u32 %v421, 16
        %v426 = vshrl.u32 %v421, 16
        %vm427 = vc.u32 %v419, %v423
        %v428 = vsel %vm427, 1, 0
        %v429 = vadd.s32 %v419, %v423
        %v430 = vadd.s32 %v422, %v428
        %vm431 = vc.u32 %v429, %v425
        %v432 = vsel %vm431, 1, 0
        %v433 = vadd.s32 %v429, %v425
        %v434 = vadd.s32 %v430, %v432
        %v435 = vadd.s32 %v434, %v424
        %v436 = vadd.s32 %v435, %v426
        %v437 = vmul.u32 %v392, %v383
        %v438 = vadd.s32 %v414, %v433
        %vm439 = vc.u32 %v414, %v433
        %v440 = vadd.s32 %v436, 1
        %v441 = vsel %vm439, %v440, %v436
        %v442 = vadd.s32 %v437, %v441
        %v443 = vadd.s32 %v442, 536870912
        %v444 = vshrl.u32 %v443, 30
        %v445 = vshll.u32 %v444, 30
        %v446 = vsub.s32 %v442, %v445
        %vm447 = vcmp.lt.s32.totalorder %v446, 0
        %v448 = vsub.s32 0, %v446
        %v449 = vsel %vm447, %v448, %v446
        %v450 = vclz %v449
        %v451 = vsub.s32 %v450, 2
        %vm452 = vcmp.gt.s32.totalorder 0, %v451
        %v453 = vsel %vm452, 0, %v451
        %v454 = vsub.s32 32, %v453
        %v455 = vshll.u32 %v446, %v453
        %v456 = vshrl.u32 %v438, %v454
        %v457 = vor.u32 %v455, %v456
        %v458 = vsub.s32 4294967266, %v453
        %v459 = vadd.s32 %v458, 127
        %v460 = vshll.u32 %v459, 23
        %v461 = vor.u32 4788187, %v460
        %v462 = vand.u32 2147483647, %v461
        %v464 = vcvt.s32.f32 %v457
        %v465 = vmul.f32 %v464, %v462
        %v466 = vxor.u32 %v465, 2147483648
        %v467 = vsel %vm346, %v466, %v465
        %v468 = vsub.s32 4, %v444
        %v469 = vsel %vm346, %v468, %v444
        %v470 = vsel %vm345, %v312, %v467
        %v471 = vsel %vm345, 0, %v469
        %v472 = vmul.f32 %v470, %v470
        %v473 = vmul.f32 %v472, -0.001358992
        %v474 = vadd.f32 %v473, 0.041655596
        %v475 = vmul.f32 %v472, %v474
        %v476 = vadd.f32 %v475, -0.4999988
        %v477 = vmul.f32 %v472, %v476
        %v478 = vadd.f32 1.0, %v477
        %v479 = vmul.f32 %v470, %v470
        %v480 = vmul.f32 %v479, -0.00019511016
        %v481 = vadd.f32 %v480, 0.008332121
        %v482 = vmul.f32 %v479, %v481
        %v483 = vadd.f32 %v482, -0.16666654
        %v484 = vmul.f32 %v479, %v483
        %v485 = vadd.f32 %v484, 1.0
        %v486 = vmul.f32 %v485, %v470
        %vm487 = vweird.f32 %v312
        %v488 = vadd.s32 %v471, 3
        %v489 = vand.u32 %v488, 3
        %vm490 = vcmp.lt.s32.totalorder %v489, 2
        %vm491 = vcmp.eq.s32.totalorder %v489, 0
        %v492 = vxor.u32 %v486, 2147483648
        %v493 = vsel %vm491, %v478, %v492
        %vm494 = vcmp.eq.s32.totalorder %v489, 2
        %v495 = vxor.u32 %v478, 2147483648
        %v496 = vsel %vm494, %v495, %v486
        %v497 = vsel %vm490, %v493, %v496
        %v498 = vsel %vm487, nan, %v497
        %v499 = vand.u32 2147483647, %v313
        %vm500 = vcmp.le.f32.partialorder %v499, 0.7853982
        %vm501 = vcmp.lt.s32.totalorder %v313, 0
        %v502 = vand.u32 %v313, 2139095040
        %v503 = vshrl.u32 %v502, 23
        %v504 = vsub.s32 %v503, 127
        %v505 = vand.u32 2147483647, %v313
        %v506 = vand.u32 %v505, 8388607
        %v507 = vor.u32 %v506, 8388608
        %v508 = vsub.s32 0, %v507
        %v509 = vadd.s32 %v504, 1
        %vm510 = vcmp.gt.s32.totalorder %v509, 0
        %v511 = vsel %vm510, %v509, 0
        %v512 = vshrl.u32 %v511, 5
        %v513 = vand.u32 %v511, 31
        %v514 = vsub.s32 32, %v513
        %v515 = vshrl.u32 683565275, %v514
        %v516 = vshll.u32 683565275, %v513
        %v517 = vshrl.u32 2475754826, %v514
        %v518 = vor.u32 %v516, %v517
        %v519 = vshll.u32 2475754826, %v513
        %v520 = vshrl.u32 2131351028, %v514
        %v521 = vor.u32 %v519, %v520
        %v522 = vshll.u32 2131351028, %v513
        %v523 = vshrl.u32 2102212464, %v514
        %v524 = vor.u32 %v522, %v523
        %v525 = vshll.u32 2102212464, %v513
        %v526 = vshrl.u32 920167782, %v514
        %v527 = vor.u32 %v525, %v526
        %v528 = vshll.u32 920167782, %v513
        %v529 = vshrl.u32 1326507024, %v514
        %v530 = vor.u32 %v528, %v529
        %vm531 = vcmp.lt.s32.totalorder %v512, 1
        %vm532 = vcmp.lt.s32.totalorder %v512, 2
        %vm533 = vcmp.lt.s32.totalorder %v512, 3
        %vm534 = vcmp.lt.s32.totalorder %v512, 4
        %v535 = vsel %vm531, %v515, %v518
        %v536 = vsel %vm534, %v524, 2102212464
        %v537 = vsel %vm533, %v521, %v536
        %v538 = vsel %vm532, %v535, %v537
        %v539 = vsel %vm531, %v518, %v521
        %v540 = vsel %vm534, %v527, 920167782
        %v541 = vsel %vm533, %v524, %v540
        %v542 = vsel %vm532, %v539, %v541
        %v543 = vsel %vm531, %v521, %v524
        %v544 = vsel %vm534, %v530, 1326507024
        %v545 = vsel %vm533, %v527, %v544
        %v546 = vsel %vm532, %v543, %v545
        %v547 = vshll.u32 %v507, 8
        %v548 = vand.u32 %v547, 65535
        %v549 = vshrl.u32 %v547, 16
        %v550 = vand.u32 %v546, 65535
        %v551 = vshrl.u32 %v546, 16
        %v552 = vmul.u32 %v548, %v550
        %v553 = vmul.u32 %v548, %v551
        %v554 = vmul.u32 %v549, %v550
        %v555 = vmul.u32 %v549, %v551
        %v556 = vshll.u32 %v553, 16
        %v557 = vshrl.u32 %v553, 16
        %v558 = vshll.u32 %v554, 16
        %v559 = vshrl.u32 %v554, 16
        %vm560 = vc.u32 %v552, %v556
        %v561 = vsel %vm560, 1, 0
        %v562 = vadd.s32 %v552, %v556
        %v563 = vadd.s32 %v555, %v561
        %vm564 = vc.u32 %v562, %v558
        %v565 = vsel %vm564, 1, 0
        %v566 = vadd.s32 %v562, %v558
        %v567 = vadd.s32 %v563, %v565
        %v568 = vadd.s32 %v567, %v557
        %v569 = vadd.s32 %v568, %v559
        %v570 = vand.u32 %v547, 65535
        %v571 = vshrl.u32 %v547, 16
        %v572 = vand.u32 %v542, 65535
        %v573 = vshrl.u32 %v542, 16
        %v574 = vmul.u32 %v570, %v572
        %v575 = vmul.u32 %v570, %v573
        %v576 = vmul.u32 %v571, %v572
        %v577 = vmul.u32 %v571, %v573
        %v578 = vshll.u32 %v575, 16
        %v579 = vshrl.u32 %v575, 16
        %v580 = vshll.u32 %v576, 16
        %v581 = vshrl.u32 %v576, 16
        %vm582 = vc.u32 %v574, %v578
        %v583 = vsel %vm582, 1, 0
        %v584 = vadd.s32 %v574, %v578
        %v585 = vadd.s32 %v577, %v583
        %vm586 = vc.u32 %v584, %v580
        %v587 = vsel %vm586, 1, 0
        %v588 = vadd.s32 %v584, %v580
        %v589 = vadd.s32 %v585, %v587
        %v590 = vadd.s32 %v589, %v579
        %v591 = vadd.s32 %v590, %v581
        %v592 = vmul.u32 %v547, %v538
        %v593 = vadd.s32 %v569, %v588
        %vm594 = vc.u32 %v569, %v588
        %v595 = vadd.s32 %v591, 1
        %v596 = vsel %vm594, %v595, %v591
        %v597 = vadd.s32 %v592, %v596
        %v598 = vadd.s32 %v597, 536870912
        %v599 = vshrl.u32 %v598, 30
        %v600 = vshll.u32 %v599, 30
        %v601 = vsub.s32 %v597, %v600
        %vm602 = vcmp.lt.s32.totalorder %v601, 0
        %v603 = vsub.s32 0, %v601
        %v604 = vsel %vm602, %v603, %v601
        %v605 = vclz %v604
        %v606 = vsub.s32 %v605, 2
        %vm607 = vcmp.gt.s32.totalorder 0, %v606
        %v608 = vsel %vm607, 0, %v606
        %v609 = vsub.s32 32, %v608
        %v610 = vshll.u32 %v601, %v608
        %v611 = vshrl.u32 %v593, %v609
        %v612 = vor.u32 %v610, %v611
        %v613 = vsub.s32 4294967266, %v608
        %v614 = vadd.s32 %v613, 127
        %v615 = vshll.u32 %v614, 23
        %v616 = vor.u32 4788187, %v615
        %v617 = vand.u32 2147483647, %v616
        %v619 = vcvt.s32.f32 %v612
        %v620 = vmul.f32 %v619, %v617
        %v621 = vxor.u32 %v620, 2147483648
        %v622 = vsel %vm501, %v621, %v620
        %v623 = vsub.s32 4, %v599
        %v624 = vsel %vm501, %v623, %v599
        %v625 = vsel %vm500, %v313, %v622
        %v626 = vsel %vm500, 0, %v624
        %v627 = vmul.f32 %v625, %v625
        %v628 = vmul.f32 %v627, -0.001358992
        %v629 = vadd.f32 %v628, 0.041655596
        %v630 = vmul.f32 %v627, %v629
        %v631 = vadd.f32 %v630, -0.4999988
        %v632 = vmul.f32 %v627, %v631
        %v633 = vadd.f32 1.0, %v632
        %v634 = vmul.f32 %v625, %v625
        %v635 = vmul.f32 %v634, -0.00019511016
        %v636 = vadd.f32 %v635, 0.008332121
        %v637 = vmul.f32 %v634, %v636
        %v638 = vadd.f32 %v637, -0.16666654
        %v639 = vmul.f32 %v634, %v638
        %v640 = vadd.f32 %v639, 1.0
        %v641 = vmul.f32 %v640, %v625
        %vm642 = vweird.f32 %v313
        %v643 = vadd.s32 %v626, 3
        %v644 = vand.u32 %v643, 3
        %vm645 = vcmp.lt.s32.totalorder %v644, 2
        %vm646 = vcmp.eq.s32.totalorder %v644, 0
        %v647 = vxor.u32 %v641, 2147483648
        %v648 = vsel %vm646, %v633, %v647
        %vm649 = vcmp.eq.s32.totalorder %v644, 2
        %v650 = vxor.u32 %v633, 2147483648
        %v651 = vsel %vm649, %v650, %v641
        %v652 = vsel %vm645, %v648, %v651
        %v653 = vsel %vm642, nan, %v652
        %v654 = vand.u32 2147483647, %v314
        %vm655 = vcmp.le.f32.partialorder %v654, 0.7853982
        %vm656 = vcmp.lt.s32.totalorder %v314, 0
        %v657 = vand.u32 %v314, 2139095040
        %v658 = vshrl.u32 %v657, 23
        %v659 = vsub.s32 %v658, 127
        %v660 = vand.u32 2147483647, %v314
        %v661 = vand.u32 %v660, 8388607
        %v662 = vor.u32 %v661, 8388608
        %v663 = vsub.s32 0, %v662
        %v664 = vadd.s32 %v659, 1
        %vm665 = vcmp.gt.s32.totalorder %v664, 0
        %v666 = vsel %vm665, %v664, 0
        %v667 = vshrl.u32 %v666, 5
        %v668 = vand.u32 %v666, 31
        %v669 = vsub.s32 32, %v668
        %v670 = vshrl.u32 683565275, %v669
        %v671 = vshll.u32 683565275, %v668
        %v672 = vshrl.u32 2475754826, %v669
        %v673 = vor.u32 %v671, %v672
        %v674 = vshll.u32 2475754826, %v668
        %v675 = vshrl.u32 2131351028, %v669
        %v676 = vor.u32 %v674, %v675
        %v677 = vshll.u32 2131351028, %v668
        %v678 = vshrl.u32 2102212464, %v669
        %v679 = vor.u32 %v677, %v678
        %v680 = vshll.u32 2102212464, %v668
        %v681 = vshrl.u32 920167782, %v669
        %v682 = vor.u32 %v680, %v681
        %v683 = vshll.u32 920167782, %v668
        %v684 = vshrl.u32 1326507024, %v669
        %v685 = vor.u32 %v683, %v684
        %vm686 = vcmp.lt.s32.totalorder %v667, 1
        %vm687 = vcmp.lt.s32.totalorder %v667, 2
        %vm688 = vcmp.lt.s32.totalorder %v667, 3
        %vm689 = vcmp.lt.s32.totalorder %v667, 4
        %v690 = vsel %vm686, %v670, %v673
        %v691 = vsel %vm689, %v679, 2102212464
        %v692 = vsel %vm688, %v676, %v691
        %v693 = vsel %vm687, %v690, %v692
        %v694 = vsel %vm686, %v673, %v676
        %v695 = vsel %vm689, %v682, 920167782
        %v696 = vsel %vm688, %v679, %v695
        %v697 = vsel %vm687, %v694, %v696
        %v698 = vsel %vm686, %v676, %v679
        %v699 = vsel %vm689, %v685, 1326507024
        %v700 = vsel %vm688, %v682, %v699
        %v701 = vsel %vm687, %v698, %v700
        %v702 = vshll.u32 %v662, 8
        %v703 = vand.u32 %v702, 65535
        %v704 = vshrl.u32 %v702, 16
        %v705 = vand.u32 %v701, 65535
        %v706 = vshrl.u32 %v701, 16
        %v707 = vmul.u32 %v703, %v705
        %v708 = vmul.u32 %v703, %v706
        %v709 = vmul.u32 %v704, %v705
        %v710 = vmul.u32 %v704, %v706
        %v711 = vshll.u32 %v708, 16
        %v712 = vshrl.u32 %v708, 16
        %v713 = vshll.u32 %v709, 16
        %v714 = vshrl.u32 %v709, 16
        %vm715 = vc.u32 %v707, %v711
        %v716 = vsel %vm715, 1, 0
        %v717 = vadd.s32 %v707, %v711
        %v718 = vadd.s32 %v710, %v716
        %vm719 = vc.u32 %v717, %v713
        %v720 = vsel %vm719, 1, 0
        %v721 = vadd.s32 %v717, %v713
        %v722 = vadd.s32 %v718, %v720
        %v723 = vadd.s32 %v722, %v712
        %v724 = vadd.s32 %v723, %v714
        %v725 = vand.u32 %v702, 65535
        %v726 = vshrl.u32 %v702, 16
        %v727 = vand.u32 %v697, 65535
        %v728 = vshrl.u32 %v697, 16
        %v729 = vmul.u32 %v725, %v727
        %v730 = vmul.u32 %v725, %v728
        %v731 = vmul.u32 %v726, %v727
        %v732 = vmul.u32 %v726, %v728
        %v733 = vshll.u32 %v730, 16
        %v734 = vshrl.u32 %v730, 16
        %v735 = vshll.u32 %v731, 16
        %v736 = vshrl.u32 %v731, 16
        %vm737 = vc.u32 %v729, %v733
        %v738 = vsel %vm737, 1, 0
        %v739 = vadd.s32 %v729, %v733
        %v740 = vadd.s32 %v732, %v738
        %vm741 = vc.u32 %v739, %v735
        %v742 = vsel %vm741, 1, 0
        %v743 = vadd.s32 %v739, %v735
        %v744 = vadd.s32 %v740, %v742
        %v745 = vadd.s32 %v744, %v734
        %v746 = vadd.s32 %v745, %v736
        %v747 = vmul.u32 %v702, %v693
        %v748 = vadd.s32 %v724, %v743
        %vm749 = vc.u32 %v724, %v743
        %v750 = vadd.s32 %v746, 1
        %v751 = vsel %vm749, %v750, %v746
        %v752 = vadd.s32 %v747, %v751
        %v753 = vadd.s32 %v752, 536870912
        %v754 = vshrl.u32 %v753, 30
        %v755 = vshll.u32 %v754, 30
        %v756 = vsub.s32 %v752, %v755
        %vm757 = vcmp.lt.s32.totalorder %v756, 0
        %v758 = vsub.s32 0, %v756
        %v759 = vsel %vm757, %v758, %v756
        %v760 = vclz %v759
        %v761 = vsub.s32 %v760, 2
        %vm762 = vcmp.gt.s32.totalorder 0, %v761
        %v763 = vsel %vm762, 0, %v761
        %v764 = vsub.s32 32, %v763
        %v765 = vshll.u32 %v756, %v763
        %v766 = vshrl.u32 %v748, %v764
        %v767 = vor.u32 %v765, %v766
        %v768 = vsub.s32 4294967266, %v763
        %v769 = vadd.s32 %v768, 127
        %v770 = vshll.u32 %v769, 23
        %v771 = vor.u32 4788187, %v770
        %v772 = vand.u32 2147483647, %v771
        %v774 = vcvt.s32.f32 %v767
        %v775 = vmul.f32 %v774, %v772
        %v776 = vxor.u32 %v775, 2147483648
        %v777 = vsel %vm656, %v776, %v775
        %v778 = vsub.s32 4, %v754
        %v779 = vsel %vm656, %v778, %v754
        %v780 = vsel %vm655, %v314, %v777
        %v781 = vsel %vm655, 0, %v779
        %v782 = vmul.f32 %v780, %v780
        %v783 = vmul.f32 %v782, -0.001358992
        %v784 = vadd.f32 %v783, 0.041655596
        %v785 = vmul.f32 %v782, %v784
        %v786 = vadd.f32 %v785, -0.4999988
        %v787 = vmul.f32 %v782, %v786
        %v788 = vadd.f32 1.0, %v787
        %v789 = vmul.f32 %v780, %v780
        %v790 = vmul.f32 %v789, -0.00019511016
        %v791 = vadd.f32 %v790, 0.008332121
        %v792 = vmul.f32 %v789, %v791
        %v793 = vadd.f32 %v792, -0.16666654
        %v794 = vmul.f32 %v789, %v793
        %v795 = vadd.f32 %v794, 1.0
        %v796 = vmul.f32 %v795, %v780
        %vm797 = vweird.f32 %v314
        %v798 = vadd.s32 %v781, 3
        %v799 = vand.u32 %v798, 3
        %vm800 = vcmp.lt.s32.totalorder %v799, 2
        %vm801 = vcmp.eq.s32.totalorder %v799, 0
        %v802 = vxor.u32 %v796, 2147483648
        %v803 = vsel %vm801, %v788, %v802
        %vm804 = vcmp.eq.s32.totalorder %v799, 2
        %v805 = vxor.u32 %v788, 2147483648
        %v806 = vsel %vm804, %v805, %v796
        %v807 = vsel %vm800, %v803, %v806
        %v808 = vsel %vm797, nan, %v807
        %v809 = vand.u32 2147483647, %v315
        %vm810 = vcmp.le.f32.partialorder %v809, 0.7853982
        %vm811 = vcmp.lt.s32.totalorder %v315, 0
        %v812 = vand.u32 %v315, 2139095040
        %v813 = vshrl.u32 %v812, 23
        %v814 = vsub.s32 %v813, 127
        %v815 = vand.u32 2147483647, %v315
        %v816 = vand.u32 %v815, 8388607
        %v817 = vor.u32 %v816, 8388608
        %v818 = vsub.s32 0, %v817
        %v819 = vadd.s32 %v814, 1
        %vm820 = vcmp.gt.s32.totalorder %v819, 0
        %v821 = vsel %vm820, %v819, 0
        %v822 = vshrl.u32 %v821, 5
        %v823 = vand.u32 %v821, 31
        %v824 = vsub.s32 32, %v823
        %v825 = vshrl.u32 683565275, %v824
        %v826 = vshll.u32 683565275, %v823
        %v827 = vshrl.u32 2475754826, %v824
        %v828 = vor.u32 %v826, %v827
        %v829 = vshll.u32 2475754826, %v823
        %v830 = vshrl.u32 2131351028, %v824
        %v831 = vor.u32 %v829, %v830
        %v832 = vshll.u32 2131351028, %v823
        %v833 = vshrl.u32 2102212464, %v824
        %v834 = vor.u32 %v832, %v833
        %v835 = vshll.u32 2102212464, %v823
        %v836 = vshrl.u32 920167782, %v824
        %v837 = vor.u32 %v835, %v836
        %v838 = vshll.u32 920167782, %v823
        %v839 = vshrl.u32 1326507024, %v824
        %v840 = vor.u32 %v838, %v839
        %vm841 = vcmp.lt.s32.totalorder %v822, 1
        %vm842 = vcmp.lt.s32.totalorder %v822, 2
        %vm843 = vcmp.lt.s32.totalorder %v822, 3
        %vm844 = vcmp.lt.s32.totalorder %v822, 4
        %v845 = vsel %vm841, %v825, %v828
        %v846 = vsel %vm844, %v834, 2102212464
        %v847 = vsel %vm843, %v831, %v846
        %v848 = vsel %vm842, %v845, %v847
        %v849 = vsel %vm841, %v828, %v831
        %v850 = vsel %vm844, %v837, 920167782
        %v851 = vsel %vm843, %v834, %v850
        %v852 = vsel %vm842, %v849, %v851
        %v853 = vsel %vm841, %v831, %v834
        %v854 = vsel %vm844, %v840, 1326507024
        %v855 = vsel %vm843, %v837, %v854
        %v856 = vsel %vm842, %v853, %v855
        %v857 = vshll.u32 %v817, 8
        %v858 = vand.u32 %v857, 65535
        %v859 = vshrl.u32 %v857, 16
        %v860 = vand.u32 %v856, 65535
        %v861 = vshrl.u32 %v856, 16
        %v862 = vmul.u32 %v858, %v860
        %v863 = vmul.u32 %v858, %v861
        %v864 = vmul.u32 %v859, %v860
        %v865 = vmul.u32 %v859, %v861
        %v866 = vshll.u32 %v863, 16
        %v867 = vshrl.u32 %v863, 16
        %v868 = vshll.u32 %v864, 16
        %v869 = vshrl.u32 %v864, 16
        %vm870 = vc.u32 %v862, %v866
        %v871 = vsel %vm870, 1, 0
        %v872 = vadd.s32 %v862, %v866
        %v873 = vadd.s32 %v865, %v871
        %vm874 = vc.u32 %v872, %v868
        %v875 = vsel %vm874, 1, 0
        %v876 = vadd.s32 %v872, %v868
        %v877 = vadd.s32 %v873, %v875
        %v878 = vadd.s32 %v877, %v867
        %v879 = vadd.s32 %v878, %v869
        %v880 = vand.u32 %v857, 65535
        %v881 = vshrl.u32 %v857, 16
        %v882 = vand.u32 %v852, 65535
        %v883 = vshrl.u32 %v852, 16
        %v884 = vmul.u32 %v880, %v882
        %v885 = vmul.u32 %v880, %v883
        %v886 = vmul.u32 %v881, %v882
        %v887 = vmul.u32 %v881, %v883
        %v888 = vshll.u32 %v885, 16
        %v889 = vshrl.u32 %v885, 16
        %v890 = vshll.u32 %v886, 16
        %v891 = vshrl.u32 %v886, 16
        %vm892 = vc.u32 %v884, %v888
        %v893 = vsel %vm892, 1, 0
        %v894 = vadd.s32 %v884, %v888
        %v895 = vadd.s32 %v887, %v893
        %vm896 = vc.u32 %v894, %v890
        %v897 = vsel %vm896, 1, 0
        %v898 = vadd.s32 %v894, %v890
        %v899 = vadd.s32 %v895, %v897
        %v900 = vadd.s32 %v899, %v889
        %v901 = vadd.s32 %v900, %v891
        %v902 = vmul.u32 %v857, %v848
        %v903 = vadd.s32 %v879, %v898
        %vm904 = vc.u32 %v879, %v898
        %v905 = vadd.s32 %v901, 1
        %v906 = vsel %vm904, %v905, %v901
        %v907 = vadd.s32 %v902, %v906
        %v908 = vadd.s32 %v907, 536870912
        %v909 = vshrl.u32 %v908, 30
        %v910 = vshll.u32 %v909, 30
        %v911 = vsub.s32 %v907, %v910
        %vm912 = vcmp.lt.s32.totalorder %v911, 0
        %v913 = vsub.s32 0, %v911
        %v914 = vsel %vm912, %v913, %v911
        %v915 = vclz %v914
        %v916 = vsub.s32 %v915, 2
        %vm917 = vcmp.gt.s32.totalorder 0, %v916
        %v918 = vsel %vm917, 0, %v916
        %v919 = vsub.s32 32, %v918
        %v920 = vshll.u32 %v911, %v918
        %v921 = vshrl.u32 %v903, %v919
        %v922 = vor.u32 %v920, %v921
        %v923 = vsub.s32 4294967266, %v918
        %v924 = vadd.s32 %v923, 127
        %v925 = vshll.u32 %v924, 23
        %v926 = vor.u32 4788187, %v925
        %v927 = vand.u32 2147483647, %v926
        %v929 = vcvt.s32.f32 %v922
        %v930 = vmul.f32 %v929, %v927
        %v931 = vxor.u32 %v930, 2147483648
        %v932 = vsel %vm811, %v931, %v930
        %v933 = vsub.s32 4, %v909
        %v934 = vsel %vm811, %v933, %v909
        %v935 = vsel %vm810, %v315, %v932
        %v936 = vsel %vm810, 0, %v934
        %v937 = vmul.f32 %v935, %v935
        %v938 = vmul.f32 %v937, -0.001358992
        %v939 = vadd.f32 %v938, 0.041655596
        %v940 = vmul.f32 %v937, %v939
        %v941 = vadd.f32 %v940, -0.4999988
        %v942 = vmul.f32 %v937, %v941
        %v943 = vadd.f32 1.0, %v942
        %v944 = vmul.f32 %v935, %v935
        %v945 = vmul.f32 %v944, -0.00019511016
        %v946 = vadd.f32 %v945, 0.008332121
        %v947 = vmul.f32 %v944, %v946
        %v948 = vadd.f32 %v947, -0.16666654
        %v949 = vmul.f32 %v944, %v948
        %v950 = vadd.f32 %v949, 1.0
        %v951 = vmul.f32 %v950, %v935
        %vm952 = vweird.f32 %v315
        %v953 = vadd.s32 %v936, 3
        %v954 = vand.u32 %v953, 3
        %vm955 = vcmp.lt.s32.totalorder %v954, 2
        %vm956 = vcmp.eq.s32.totalorder %v954, 0
        %v957 = vxor.u32 %v951, 2147483648
        %v958 = vsel %vm956, %v943, %v957
        %vm959 = vcmp.eq.s32.totalorder %v954, 2
        %v960 = vxor.u32 %v943, 2147483648
        %v961 = vsel %vm959, %v960, %v951
        %v962 = vsel %vm955, %v958, %v961
        %v963 = vsel %vm952, nan, %v962
        %v964 = vand.u32 2147483647, %v316
        %vm965 = vcmp.le.f32.partialorder %v964, 0.7853982
        %vm966 = vcmp.lt.s32.totalorder %v316, 0
        %v967 = vand.u32 %v316, 2139095040
        %v968 = vshrl.u32 %v967, 23
        %v969 = vsub.s32 %v968, 127
        %v970 = vand.u32 2147483647, %v316
        %v971 = vand.u32 %v970, 8388607
        %v972 = vor.u32 %v971, 8388608
        %v973 = vsub.s32 0, %v972
        %v974 = vadd.s32 %v969, 1
        %vm975 = vcmp.gt.s32.totalorder %v974, 0
        %v976 = vsel %vm975, %v974, 0
        %v977 = vshrl.u32 %v976, 5
        %v978 = vand.u32 %v976, 31
        %v979 = vsub.s32 32, %v978
        %v980 = vshrl.u32 683565275, %v979
        %v981 = vshll.u32 683565275, %v978
        %v982 = vshrl.u32 2475754826, %v979
        %v983 = vor.u32 %v981, %v982
        %v984 = vshll.u32 2475754826, %v978
        %v985 = vshrl.u32 2131351028, %v979
        %v986 = vor.u32 %v984, %v985
        %v987 = vshll.u32 2131351028, %v978
        %v988 = vshrl.u32 2102212464, %v979
        %v989 = vor.u32 %v987, %v988
        %v990 = vshll.u32 2102212464, %v978
        %v991 = vshrl.u32 920167782, %v979
        %v992 = vor.u32 %v990, %v991
        %v993 = vshll.u32 920167782, %v978
        %v994 = vshrl.u32 1326507024, %v979
        %v995 = vor.u32 %v993, %v994
        %vm996 = vcmp.lt.s32.totalorder %v977, 1
        %vm997 = vcmp.lt.s32.totalorder %v977, 2
        %vm998 = vcmp.lt.s32.totalorder %v977, 3
        %vm999 = vcmp.lt.s32.totalorder %v977, 4
        %v1000 = vsel %vm996, %v980, %v983
        %v1001 = vsel %vm999, %v989, 2102212464
        %v1002 = vsel %vm998, %v986, %v1001
        %v1003 = vsel %vm997, %v1000, %v1002
        %v1004 = vsel %vm996, %v983, %v986
        %v1005 = vsel %vm999, %v992, 920167782
        %v1006 = vsel %vm998, %v989, %v1005
        %v1007 = vsel %vm997, %v1004, %v1006
        %v1008 = vsel %vm996, %v986, %v989
        %v1009 = vsel %vm999, %v995, 1326507024
        %v1010 = vsel %vm998, %v992, %v1009
        %v1011 = vsel %vm997, %v1008, %v1010
        %v1012 = vshll.u32 %v972, 8
        %v1013 = vand.u32 %v1012, 65535
        %v1014 = vshrl.u32 %v1012, 16
        %v1015 = vand.u32 %v1011, 65535
        %v1016 = vshrl.u32 %v1011, 16
        %v1017 = vmul.u32 %v1013, %v1015
        %v1018 = vmul.u32 %v1013, %v1016
        %v1019 = vmul.u32 %v1014, %v1015
        %v1020 = vmul.u32 %v1014, %v1016
        %v1021 = vshll.u32 %v1018, 16
        %v1022 = vshrl.u32 %v1018, 16
        %v1023 = vshll.u32 %v1019, 16
        %v1024 = vshrl.u32 %v1019, 16
        %vm1025 = vc.u32 %v1017, %v1021
        %v1026 = vsel %vm1025, 1, 0
        %v1027 = vadd.s32 %v1017, %v1021
        %v1028 = vadd.s32 %v1020, %v1026
        %vm1029 = vc.u32 %v1027, %v1023
        %v1030 = vsel %vm1029, 1, 0
        %v1031 = vadd.s32 %v1027, %v1023
        %v1032 = vadd.s32 %v1028, %v1030
        %v1033 = vadd.s32 %v1032, %v1022
        %v1034 = vadd.s32 %v1033, %v1024
        %v1035 = vand.u32 %v1012, 65535
        %v1036 = vshrl.u32 %v1012, 16
        %v1037 = vand.u32 %v1007, 65535
        %v1038 = vshrl.u32 %v1007, 16
        %v1039 = vmul.u32 %v1035, %v1037
        %v1040 = vmul.u32 %v1035, %v1038
        %v1041 = vmul.u32 %v1036, %v1037
        %v1042 = vmul.u32 %v1036, %v1038
        %v1043 = vshll.u32 %v1040, 16
        %v1044 = vshrl.u32 %v1040, 16
        %v1045 = vshll.u32 %v1041, 16
        %v1046 = vshrl.u32 %v1041, 16
        %vm1047 = vc.u32 %v1039, %v1043
        %v1048 = vsel %vm1047, 1, 0
        %v1049 = vadd.s32 %v1039, %v1043
        %v1050 = vadd.s32 %v1042, %v1048
        %vm1051 = vc.u32 %v1049, %v1045
        %v1052 = vsel %vm1051, 1, 0
        %v1053 = vadd.s32 %v1049, %v1045
        %v1054 = vadd.s32 %v1050, %v1052
        %v1055 = vadd.s32 %v1054, %v1044
        %v1056 = vadd.s32 %v1055, %v1046
        %v1057 = vmul.u32 %v1012, %v1003
        %v1058 = vadd.s32 %v1034, %v1053
        %vm1059 = vc.u32 %v1034, %v1053
        %v1060 = vadd.s32 %v1056, 1
        %v1061 = vsel %vm1059, %v1060, %v1056
        %v1062 = vadd.s32 %v1057, %v1061
        %v1063 = vadd.s32 %v1062, 536870912
        %v1064 = vshrl.u32 %v1063, 30
        %v1065 = vshll.u32 %v1064, 30
        %v1066 = vsub.s32 %v1062, %v1065
        %vm1067 = vcmp.lt.s32.totalorder %v1066, 0
        %v1068 = vsub.s32 0, %v1066
        %v1069 = vsel %vm1067, %v1068, %v1066
        %v1070 = vclz %v1069
        %v1071 = vsub.s32 %v1070, 2
        %vm1072 = vcmp.gt.s32.totalorder 0, %v1071
        %v1073 = vsel %vm1072, 0, %v1071
        %v1074 = vsub.s32 32, %v1073
        %v1075 = vshll.u32 %v1066, %v1073
        %v1076 = vshrl.u32 %v1058, %v1074
        %v1077 = vor.u32 %v1075, %v1076
        %v1078 = vsub.s32 4294967266, %v1073
        %v1079 = vadd.s32 %v1078, 127
        %v1080 = vshll.u32 %v1079, 23
        %v1081 = vor.u32 4788187, %v1080
        %v1082 = vand.u32 2147483647, %v1081
        %v1084 = vcvt.s32.f32 %v1077
        %v1085 = vmul.f32 %v1084, %v1082
        %v1086 = vxor.u32 %v1085, 2147483648
        %v1087 = vsel %vm966, %v1086, %v1085
        %v1088 = vsub.s32 4, %v1064
        %v1089 = vsel %vm966, %v1088, %v1064
        %v1090 = vsel %vm965, %v316, %v1087
        %v1091 = vsel %vm965, 0, %v1089
        %v1092 = vmul.f32 %v1090, %v1090
        %v1093 = vmul.f32 %v1092, -0.001358992
        %v1094 = vadd.f32 %v1093, 0.041655596
        %v1095 = vmul.f32 %v1092, %v1094
        %v1096 = vadd.f32 %v1095, -0.4999988
        %v1097 = vmul.f32 %v1092, %v1096
        %v1098 = vadd.f32 1.0, %v1097
        %v1099 = vmul.f32 %v1090, %v1090
        %v1100 = vmul.f32 %v1099, -0.00019511016
        %v1101 = vadd.f32 %v1100, 0.008332121
        %v1102 = vmul.f32 %v1099, %v1101
        %v1103 = vadd.f32 %v1102, -0.16666654
        %v1104 = vmul.f32 %v1099, %v1103
        %v1105 = vadd.f32 %v1104, 1.0
        %v1106 = vmul.f32 %v1105, %v1090
        %vm1107 = vweird.f32 %v316
        %v1108 = vadd.s32 %v1091, 3
        %v1109 = vand.u32 %v1108, 3
        %vm1110 = vcmp.lt.s32.totalorder %v1109, 2
        %vm1111 = vcmp.eq.s32.totalorder %v1109, 0
        %v1112 = vxor.u32 %v1106, 2147483648
        %v1113 = vsel %vm1111, %v1098, %v1112
        %vm1114 = vcmp.eq.s32.totalorder %v1109, 2
        %v1115 = vxor.u32 %v1098, 2147483648
        %v1116 = vsel %vm1114, %v1115, %v1106
        %v1117 = vsel %vm1110, %v1113, %v1116
        %v1118 = vsel %vm1107, nan, %v1117
        %v1119 = vand.u32 2147483647, %v317
        %vm1120 = vcmp.le.f32.partialorder %v1119, 0.7853982
        %vm1121 = vcmp.lt.s32.totalorder %v317, 0
        %v1122 = vand.u32 %v317, 2139095040
        %v1123 = vshrl.u32 %v1122, 23
        %v1124 = vsub.s32 %v1123, 127
        %v1125 = vand.u32 2147483647, %v317
        %v1126 = vand.u32 %v1125, 8388607
        %v1127 = vor.u32 %v1126, 8388608
        %v1128 = vsub.s32 0, %v1127
        %v1129 = vadd.s32 %v1124, 1
        %vm1130 = vcmp.gt.s32.totalorder %v1129, 0
        %v1131 = vsel %vm1130, %v1129, 0
        %v1132 = vshrl.u32 %v1131, 5
        %v1133 = vand.u32 %v1131, 31
        %v1134 = vsub.s32 32, %v1133
        %v1135 = vshrl.u32 683565275, %v1134
        %v1136 = vshll.u32 683565275, %v1133
        %v1137 = vshrl.u32 2475754826, %v1134
        %v1138 = vor.u32 %v1136, %v1137
        %v1139 = vshll.u32 2475754826, %v1133
        %v1140 = vshrl.u32 2131351028, %v1134
        %v1141 = vor.u32 %v1139, %v1140
        %v1142 = vshll.u32 2131351028, %v1133
        %v1143 = vshrl.u32 2102212464, %v1134
        %v1144 = vor.u32 %v1142, %v1143
        %v1145 = vshll.u32 2102212464, %v1133
        %v1146 = vshrl.u32 920167782, %v1134
        %v1147 = vor.u32 %v1145, %v1146
        %v1148 = vshll.u32 920167782, %v1133
        %v1149 = vshrl.u32 1326507024, %v1134
        %v1150 = vor.u32 %v1148, %v1149
        %vm1151 = vcmp.lt.s32.totalorder %v1132, 1
        %vm1152 = vcmp.lt.s32.totalorder %v1132, 2
        %vm1153 = vcmp.lt.s32.totalorder %v1132, 3
        %vm1154 = vcmp.lt.s32.totalorder %v1132, 4
        %v1155 = vsel %vm1151, %v1135, %v1138
        %v1156 = vsel %vm1154, %v1144, 2102212464
        %v1157 = vsel %vm1153, %v1141, %v1156
        %v1158 = vsel %vm1152, %v1155, %v1157
        %v1159 = vsel %vm1151, %v1138, %v1141
        %v1160 = vsel %vm1154, %v1147, 920167782
        %v1161 = vsel %vm1153, %v1144, %v1160
        %v1162 = vsel %vm1152, %v1159, %v1161
        %v1163 = vsel %vm1151, %v1141, %v1144
        %v1164 = vsel %vm1154, %v1150, 1326507024
        %v1165 = vsel %vm1153, %v1147, %v1164
        %v1166 = vsel %vm1152, %v1163, %v1165
        %v1167 = vshll.u32 %v1127, 8
        %v1168 = vand.u32 %v1167, 65535
        %v1169 = vshrl.u32 %v1167, 16
        %v1170 = vand.u32 %v1166, 65535
        %v1171 = vshrl.u32 %v1166, 16
        %v1172 = vmul.u32 %v1168, %v1170
        %v1173 = vmul.u32 %v1168, %v1171
        %v1174 = vmul.u32 %v1169, %v1170
        %v1175 = vmul.u32 %v1169, %v1171
        %v1176 = vshll.u32 %v1173, 16
        %v1177 = vshrl.u32 %v1173, 16
        %v1178 = vshll.u32 %v1174, 16
        %v1179 = vshrl.u32 %v1174, 16
        %vm1180 = vc.u32 %v1172, %v1176
        %v1181 = vsel %vm1180, 1, 0
        %v1182 = vadd.s32 %v1172, %v1176
        %v1183 = vadd.s32 %v1175, %v1181
        %vm1184 = vc.u32 %v1182, %v1178
        %v1185 = vsel %vm1184, 1, 0
        %v1186 = vadd.s32 %v1182, %v1178
        %v1187 = vadd.s32 %v1183, %v1185
        %v1188 = vadd.s32 %v1187, %v1177
        %v1189 = vadd.s32 %v1188, %v1179
        %v1190 = vand.u32 %v1167, 65535
        %v1191 = vshrl.u32 %v1167, 16
        %v1192 = vand.u32 %v1162, 65535
        %v1193 = vshrl.u32 %v1162, 16
        %v1194 = vmul.u32 %v1190, %v1192
        %v1195 = vmul.u32 %v1190, %v1193
        %v1196 = vmul.u32 %v1191, %v1192
        %v1197 = vmul.u32 %v1191, %v1193
        %v1198 = vshll.u32 %v1195, 16
        %v1199 = vshrl.u32 %v1195, 16
        %v1200 = vshll.u32 %v1196, 16
        %v1201 = vshrl.u32 %v1196, 16
        %vm1202 = vc.u32 %v1194, %v1198
        %v1203 = vsel %vm1202, 1, 0
        %v1204 = vadd.s32 %v1194, %v1198
        %v1205 = vadd.s32 %v1197, %v1203
        %vm1206 = vc.u32 %v1204, %v1200
        %v1207 = vsel %vm1206, 1, 0
        %v1208 = vadd.s32 %v1204, %v1200
        %v1209 = vadd.s32 %v1205, %v1207
        %v1210 = vadd.s32 %v1209, %v1199
        %v1211 = vadd.s32 %v1210, %v1201
        %v1212 = vmul.u32 %v1167, %v1158
        %v1213 = vadd.s32 %v1189, %v1208
        %vm1214 = vc.u32 %v1189, %v1208
        %v1215 = vadd.s32 %v1211, 1
        %v1216 = vsel %vm1214, %v1215, %v1211
        %v1217 = vadd.s32 %v1212, %v1216
        %v1218 = vadd.s32 %v1217, 536870912
        %v1219 = vshrl.u32 %v1218, 30
        %v1220 = vshll.u32 %v1219, 30
        %v1221 = vsub.s32 %v1217, %v1220
        %vm1222 = vcmp.lt.s32.totalorder %v1221, 0
        %v1223 = vsub.s32 0, %v1221
        %v1224 = vsel %vm1222, %v1223, %v1221
        %v1225 = vclz %v1224
        %v1226 = vsub.s32 %v1225, 2
        %vm1227 = vcmp.gt.s32.totalorder 0, %v1226
        %v1228 = vsel %vm1227, 0, %v1226
        %v1229 = vsub.s32 32, %v1228
        %v1230 = vshll.u32 %v1221, %v1228
        %v1231 = vshrl.u32 %v1213, %v1229
        %v1232 = vor.u32 %v1230, %v1231
        %v1233 = vsub.s32 4294967266, %v1228
        %v1234 = vadd.s32 %v1233, 127
        %v1235 = vshll.u32 %v1234, 23
        %v1236 = vor.u32 4788187, %v1235
        %v1237 = vand.u32 2147483647, %v1236
        %v1239 = vcvt.s32.f32 %v1232
        %v1240 = vmul.f32 %v1239, %v1237
        %v1241 = vxor.u32 %v1240, 2147483648
        %v1242 = vsel %vm1121, %v1241, %v1240
        %v1243 = vsub.s32 4, %v1219
        %v1244 = vsel %vm1121, %v1243, %v1219
        %v1245 = vsel %vm1120, %v317, %v1242
        %v1246 = vsel %vm1120, 0, %v1244
        %v1247 = vmul.f32 %v1245, %v1245
        %v1248 = vmul.f32 %v1247, -0.001358992
        %v1249 = vadd.f32 %v1248, 0.041655596
        %v1250 = vmul.f32 %v1247, %v1249
        %v1251 = vadd.f32 %v1250, -0.4999988
        %v1252 = vmul.f32 %v1247, %v1251
        %v1253 = vadd.f32 1.0, %v1252
        %v1254 = vmul.f32 %v1245, %v1245
        %v1255 = vmul.f32 %v1254, -0.00019511016
        %v1256 = vadd.f32 %v1255, 0.008332121
        %v1257 = vmul.f32 %v1254, %v1256
        %v1258 = vadd.f32 %v1257, -0.16666654
        %v1259 = vmul.f32 %v1254, %v1258
        %v1260 = vadd.f32 %v1259, 1.0
        %v1261 = vmul.f32 %v1260, %v1245
        %vm1262 = vweird.f32 %v317
        %v1263 = vadd.s32 %v1246, 3
        %v1264 = vand.u32 %v1263, 3
        %vm1265 = vcmp.lt.s32.totalorder %v1264, 2
        %vm1266 = vcmp.eq.s32.totalorder %v1264, 0
        %v1267 = vxor.u32 %v1261, 2147483648
        %v1268 = vsel %vm1266, %v1253, %v1267
        %vm1269 = vcmp.eq.s32.totalorder %v1264, 2
        %v1270 = vxor.u32 %v1253, 2147483648
        %v1271 = vsel %vm1269, %v1270, %v1261
        %v1272 = vsel %vm1265, %v1268, %v1271
        %v1273 = vsel %vm1262, nan, %v1272
        %v1274 = vand.u32 2147483647, %v318
        %vm1275 = vcmp.le.f32.partialorder %v1274, 0.7853982
        %vm1276 = vcmp.lt.s32.totalorder %v318, 0
        %v1277 = vand.u32 %v318, 2139095040
        %v1278 = vshrl.u32 %v1277, 23
        %v1279 = vsub.s32 %v1278, 127
        %v1280 = vand.u32 2147483647, %v318
        %v1281 = vand.u32 %v1280, 8388607
        %v1282 = vor.u32 %v1281, 8388608
        %v1283 = vsub.s32 0, %v1282
        %v1284 = vadd.s32 %v1279, 1
        %vm1285 = vcmp.gt.s32.totalorder %v1284, 0
        %v1286 = vsel %vm1285, %v1284, 0
        %v1287 = vshrl.u32 %v1286, 5
        %v1288 = vand.u32 %v1286, 31
        %v1289 = vsub.s32 32, %v1288
        %v1290 = vshrl.u32 683565275, %v1289
        %v1291 = vshll.u32 683565275, %v1288
        %v1292 = vshrl.u32 2475754826, %v1289
        %v1293 = vor.u32 %v1291, %v1292
        %v1294 = vshll.u32 2475754826, %v1288
        %v1295 = vshrl.u32 2131351028, %v1289
        %v1296 = vor.u32 %v1294, %v1295
        %v1297 = vshll.u32 2131351028, %v1288
        %v1298 = vshrl.u32 2102212464, %v1289
        %v1299 = vor.u32 %v1297, %v1298
        %v1300 = vshll.u32 2102212464, %v1288
        %v1301 = vshrl.u32 920167782, %v1289
        %v1302 = vor.u32 %v1300, %v1301
        %v1303 = vshll.u32 920167782, %v1288
        %v1304 = vshrl.u32 1326507024, %v1289
        %v1305 = vor.u32 %v1303, %v1304
        %vm1306 = vcmp.lt.s32.totalorder %v1287, 1
        %vm1307 = vcmp.lt.s32.totalorder %v1287, 2
        %vm1308 = vcmp.lt.s32.totalorder %v1287, 3
        %vm1309 = vcmp.lt.s32.totalorder %v1287, 4
        %v1310 = vsel %vm1306, %v1290, %v1293
        %v1311 = vsel %vm1309, %v1299, 2102212464
        %v1312 = vsel %vm1308, %v1296, %v1311
        %v1313 = vsel %vm1307, %v1310, %v1312
        %v1314 = vsel %vm1306, %v1293, %v1296
        %v1315 = vsel %vm1309, %v1302, 920167782
        %v1316 = vsel %vm1308, %v1299, %v1315
        %v1317 = vsel %vm1307, %v1314, %v1316
        %v1318 = vsel %vm1306, %v1296, %v1299
        %v1319 = vsel %vm1309, %v1305, 1326507024
        %v1320 = vsel %vm1308, %v1302, %v1319
        %v1321 = vsel %vm1307, %v1318, %v1320
        %v1322 = vshll.u32 %v1282, 8
        %v1323 = vand.u32 %v1322, 65535
        %v1324 = vshrl.u32 %v1322, 16
        %v1325 = vand.u32 %v1321, 65535
        %v1326 = vshrl.u32 %v1321, 16
        %v1327 = vmul.u32 %v1323, %v1325
        %v1328 = vmul.u32 %v1323, %v1326
        %v1329 = vmul.u32 %v1324, %v1325
        %v1330 = vmul.u32 %v1324, %v1326
        %v1331 = vshll.u32 %v1328, 16
        %v1332 = vshrl.u32 %v1328, 16
        %v1333 = vshll.u32 %v1329, 16
        %v1334 = vshrl.u32 %v1329, 16
        %vm1335 = vc.u32 %v1327, %v1331
        %v1336 = vsel %vm1335, 1, 0
        %v1337 = vadd.s32 %v1327, %v1331
        %v1338 = vadd.s32 %v1330, %v1336
        %vm1339 = vc.u32 %v1337, %v1333
        %v1340 = vsel %vm1339, 1, 0
        %v1341 = vadd.s32 %v1337, %v1333
        %v1342 = vadd.s32 %v1338, %v1340
        %v1343 = vadd.s32 %v1342, %v1332
        %v1344 = vadd.s32 %v1343, %v1334
        %v1345 = vand.u32 %v1322, 65535
        %v1346 = vshrl.u32 %v1322, 16
        %v1347 = vand.u32 %v1317, 65535
        %v1348 = vshrl.u32 %v1317, 16
        %v1349 = vmul.u32 %v1345, %v1347
        %v1350 = vmul.u32 %v1345, %v1348
        %v1351 = vmul.u32 %v1346, %v1347
        %v1352 = vmul.u32 %v1346, %v1348
        %v1353 = vshll.u32 %v1350, 16
        %v1354 = vshrl.u32 %v1350, 16
        %v1355 = vshll.u32 %v1351, 16
        %v1356 = vshrl.u32 %v1351, 16
        %vm1357 = vc.u32 %v1349, %v1353
        %v1358 = vsel %vm1357, 1, 0
        %v1359 = vadd.s32 %v1349, %v1353
        %v1360 = vadd.s32 %v1352, %v1358
        %vm1361 = vc.u32 %v1359, %v1355
        %v1362 = vsel %vm1361, 1, 0
        %v1363 = vadd.s32 %v1359, %v1355
        %v1364 = vadd.s32 %v1360, %v1362
        %v1365 = vadd.s32 %v1364, %v1354
        %v1366 = vadd.s32 %v1365, %v1356
        %v1367 = vmul.u32 %v1322, %v1313
        %v1368 = vadd.s32 %v1344, %v1363
        %vm1369 = vc.u32 %v1344, %v1363
        %v1370 = vadd.s32 %v1366, 1
        %v1371 = vsel %vm1369, %v1370, %v1366
        %v1372 = vadd.s32 %v1367, %v1371
        %v1373 = vadd.s32 %v1372, 536870912
        %v1374 = vshrl.u32 %v1373, 30
        %v1375 = vshll.u32 %v1374, 30
        %v1376 = vsub.s32 %v1372, %v1375
        %vm1377 = vcmp.lt.s32.totalorder %v1376, 0
        %v1378 = vsub.s32 0, %v1376
        %v1379 = vsel %vm1377, %v1378, %v1376
        %v1380 = vclz %v1379
        %v1381 = vsub.s32 %v1380, 2
        %vm1382 = vcmp.gt.s32.totalorder 0, %v1381
        %v1383 = vsel %vm1382, 0, %v1381
        %v1384 = vsub.s32 32, %v1383
        %v1385 = vshll.u32 %v1376, %v1383
        %v1386 = vshrl.u32 %v1368, %v1384
        %v1387 = vor.u32 %v1385, %v1386
        %v1388 = vsub.s32 4294967266, %v1383
        %v1389 = vadd.s32 %v1388, 127
        %v1390 = vshll.u32 %v1389, 23
        %v1391 = vor.u32 4788187, %v1390
        %v1392 = vand.u32 2147483647, %v1391
        %v1394 = vcvt.s32.f32 %v1387
        %v1395 = vmul.f32 %v1394, %v1392
        %v1396 = vxor.u32 %v1395, 2147483648
        %v1397 = vsel %vm1276, %v1396, %v1395
        %v1398 = vsub.s32 4, %v1374
        %v1399 = vsel %vm1276, %v1398, %v1374
        %v1400 = vsel %vm1275, %v318, %v1397
        %v1401 = vsel %vm1275, 0, %v1399
        %v1402 = vmul.f32 %v1400, %v1400
        %v1403 = vmul.f32 %v1402, -0.001358992
        %v1404 = vadd.f32 %v1403, 0.041655596
        %v1405 = vmul.f32 %v1402, %v1404
        %v1406 = vadd.f32 %v1405, -0.4999988
        %v1407 = vmul.f32 %v1402, %v1406
        %v1408 = vadd.f32 1.0, %v1407
        %v1409 = vmul.f32 %v1400, %v1400
        %v1410 = vmul.f32 %v1409, -0.00019511016
        %v1411 = vadd.f32 %v1410, 0.008332121
        %v1412 = vmul.f32 %v1409, %v1411
        %v1413 = vadd.f32 %v1412, -0.16666654
        %v1414 = vmul.f32 %v1409, %v1413
        %v1415 = vadd.f32 %v1414, 1.0
        %v1416 = vmul.f32 %v1415, %v1400
        %vm1417 = vweird.f32 %v318
        %v1418 = vadd.s32 %v1401, 3
        %v1419 = vand.u32 %v1418, 3
        %vm1420 = vcmp.lt.s32.totalorder %v1419, 2
        %vm1421 = vcmp.eq.s32.totalorder %v1419, 0
        %v1422 = vxor.u32 %v1416, 2147483648
        %v1423 = vsel %vm1421, %v1408, %v1422
        %vm1424 = vcmp.eq.s32.totalorder %v1419, 2
        %v1425 = vxor.u32 %v1408, 2147483648
        %v1426 = vsel %vm1424, %v1425, %v1416
        %v1427 = vsel %vm1420, %v1423, %v1426
        %v1428 = vsel %vm1417, nan, %v1427
        %v1429 = vand.u32 2147483647, %v319
        %vm1430 = vcmp.le.f32.partialorder %v1429, 0.7853982
        %vm1431 = vcmp.lt.s32.totalorder %v319, 0
        %v1432 = vand.u32 %v319, 2139095040
        %v1433 = vshrl.u32 %v1432, 23
        %v1434 = vsub.s32 %v1433, 127
        %v1435 = vand.u32 2147483647, %v319
        %v1436 = vand.u32 %v1435, 8388607
        %v1437 = vor.u32 %v1436, 8388608
        %v1438 = vsub.s32 0, %v1437
        %v1439 = vadd.s32 %v1434, 1
        %vm1440 = vcmp.gt.s32.totalorder %v1439, 0
        %v1441 = vsel %vm1440, %v1439, 0
        %v1442 = vshrl.u32 %v1441, 5
        %v1443 = vand.u32 %v1441, 31
        %v1444 = vsub.s32 32, %v1443
        %v1445 = vshrl.u32 683565275, %v1444
        %v1446 = vshll.u32 683565275, %v1443
        %v1447 = vshrl.u32 2475754826, %v1444
        %v1448 = vor.u32 %v1446, %v1447
        %v1449 = vshll.u32 2475754826, %v1443
        %v1450 = vshrl.u32 2131351028, %v1444
        %v1451 = vor.u32 %v1449, %v1450
        %v1452 = vshll.u32 2131351028, %v1443
        %v1453 = vshrl.u32 2102212464, %v1444
        %v1454 = vor.u32 %v1452, %v1453
        %v1455 = vshll.u32 2102212464, %v1443
        %v1456 = vshrl.u32 920167782, %v1444
        %v1457 = vor.u32 %v1455, %v1456
        %v1458 = vshll.u32 920167782, %v1443
        %v1459 = vshrl.u32 1326507024, %v1444
        %v1460 = vor.u32 %v1458, %v1459
        %vm1461 = vcmp.lt.s32.totalorder %v1442, 1
        %vm1462 = vcmp.lt.s32.totalorder %v1442, 2
        %vm1463 = vcmp.lt.s32.totalorder %v1442, 3
        %vm1464 = vcmp.lt.s32.totalorder %v1442, 4
        %v1465 = vsel %vm1461, %v1445, %v1448
        %v1466 = vsel %vm1464, %v1454, 2102212464
        %v1467 = vsel %vm1463, %v1451, %v1466
        %v1468 = vsel %vm1462, %v1465, %v1467
        %v1469 = vsel %vm1461, %v1448, %v1451
        %v1470 = vsel %vm1464, %v1457, 920167782
        %v1471 = vsel %vm1463, %v1454, %v1470
        %v1472 = vsel %vm1462, %v1469, %v1471
        %v1473 = vsel %vm1461, %v1451, %v1454
        %v1474 = vsel %vm1464, %v1460, 1326507024
        %v1475 = vsel %vm1463, %v1457, %v1474
        %v1476 = vsel %vm1462, %v1473, %v1475
        %v1477 = vshll.u32 %v1437, 8
        %v1478 = vand.u32 %v1477, 65535
        %v1479 = vshrl.u32 %v1477, 16
        %v1480 = vand.u32 %v1476, 65535
        %v1481 = vshrl.u32 %v1476, 16
        %v1482 = vmul.u32 %v1478, %v1480
        %v1483 = vmul.u32 %v1478, %v1481
        %v1484 = vmul.u32 %v1479, %v1480
        %v1485 = vmul.u32 %v1479, %v1481
        %v1486 = vshll.u32 %v1483, 16
        %v1487 = vshrl.u32 %v1483, 16
        %v1488 = vshll.u32 %v1484, 16
        %v1489 = vshrl.u32 %v1484, 16
        %vm1490 = vc.u32 %v1482, %v1486
        %v1491 = vsel %vm1490, 1, 0
        %v1492 = vadd.s32 %v1482, %v1486
        %v1493 = vadd.s32 %v1485, %v1491
        %vm1494 = vc.u32 %v1492, %v1488
        %v1495 = vsel %vm1494, 1, 0
        %v1496 = vadd.s32 %v1492, %v1488
        %v1497 = vadd.s32 %v1493, %v1495
        %v1498 = vadd.s32 %v1497, %v1487
        %v1499 = vadd.s32 %v1498, %v1489
        %v1500 = vand.u32 %v1477, 65535
        %v1501 = vshrl.u32 %v1477, 16
        %v1502 = vand.u32 %v1472, 65535
        %v1503 = vshrl.u32 %v1472, 16
        %v1504 = vmul.u32 %v1500, %v1502
        %v1505 = vmul.u32 %v1500, %v1503
        %v1506 = vmul.u32 %v1501, %v1502
        %v1507 = vmul.u32 %v1501, %v1503
        %v1508 = vshll.u32 %v1505, 16
        %v1509 = vshrl.u32 %v1505, 16
        %v1510 = vshll.u32 %v1506, 16
        %v1511 = vshrl.u32 %v1506, 16
        %vm1512 = vc.u32 %v1504, %v1508
        %v1513 = vsel %vm1512, 1, 0
        %v1514 = vadd.s32 %v1504, %v1508
        %v1515 = vadd.s32 %v1507, %v1513
        %vm1516 = vc.u32 %v1514, %v1510
        %v1517 = vsel %vm1516, 1, 0
        %v1518 = vadd.s32 %v1514, %v1510
        %v1519 = vadd.s32 %v1515, %v1517
        %v1520 = vadd.s32 %v1519, %v1509
        %v1521 = vadd.s32 %v1520, %v1511
        %v1522 = vmul.u32 %v1477, %v1468
        %v1523 = vadd.s32 %v1499, %v1518
        %vm1524 = vc.u32 %v1499, %v1518
        %v1525 = vadd.s32 %v1521, 1
        %v1526 = vsel %vm1524, %v1525, %v1521
        %v1527 = vadd.s32 %v1522, %v1526
        %v1528 = vadd.s32 %v1527, 536870912
        %v1529 = vshrl.u32 %v1528, 30
        %v1530 = vshll.u32 %v1529, 30
        %v1531 = vsub.s32 %v1527, %v1530
        %vm1532 = vcmp.lt.s32.totalorder %v1531, 0
        %v1533 = vsub.s32 0, %v1531
        %v1534 = vsel %vm1532, %v1533, %v1531
        %v1535 = vclz %v1534
        %v1536 = vsub.s32 %v1535, 2
        %vm1537 = vcmp.gt.s32.totalorder 0, %v1536
        %v1538 = vsel %vm1537, 0, %v1536
        %v1539 = vsub.s32 32, %v1538
        %v1540 = vshll.u32 %v1531, %v1538
        %v1541 = vshrl.u32 %v1523, %v1539
        %v1542 = vor.u32 %v1540, %v1541
        %v1543 = vsub.s32 4294967266, %v1538
        %v1544 = vadd.s32 %v1543, 127
        %v1545 = vshll.u32 %v1544, 23
        %v1546 = vor.u32 4788187, %v1545
        %v1547 = vand.u32 2147483647, %v1546
        %v1549 = vcvt.s32.f32 %v1542
        %v1550 = vmul.f32 %v1549, %v1547
        %v1551 = vxor.u32 %v1550, 2147483648
        %v1552 = vsel %vm1431, %v1551, %v1550
        %v1553 = vsub.s32 4, %v1529
        %v1554 = vsel %vm1431, %v1553, %v1529
        %v1555 = vsel %vm1430, %v319, %v1552
        %v1556 = vsel %vm1430, 0, %v1554
        %v1557 = vmul.f32 %v1555, %v1555
        %v1558 = vmul.f32 %v1557, -0.001358992
        %v1559 = vadd.f32 %v1558, 0.041655596
        %v1560 = vmul.f32 %v1557, %v1559
        %v1561 = vadd.f32 %v1560, -0.4999988
        %v1562 = vmul.f32 %v1557, %v1561
        %v1563 = vadd.f32 1.0, %v1562
        %v1564 = vmul.f32 %v1555, %v1555
        %v1565 = vmul.f32 %v1564, -0.00019511016
        %v1566 = vadd.f32 %v1565, 0.008332121
        %v1567 = vmul.f32 %v1564, %v1566
        %v1568 = vadd.f32 %v1567, -0.16666654
        %v1569 = vmul.f32 %v1564, %v1568
        %v1570 = vadd.f32 %v1569, 1.0
        %v1571 = vmul.f32 %v1570, %v1555
        %vm1572 = vweird.f32 %v319
        %v1573 = vadd.s32 %v1556, 3
        %v1574 = vand.u32 %v1573, 3
        %vm1575 = vcmp.lt.s32.totalorder %v1574, 2
        %vm1576 = vcmp.eq.s32.totalorder %v1574, 0
        %v1577 = vxor.u32 %v1571, 2147483648
        %v1578 = vsel %vm1576, %v1563, %v1577
        %vm1579 = vcmp.eq.s32.totalorder %v1574, 2
        %v1580 = vxor.u32 %v1563, 2147483648
        %v1581 = vsel %vm1579, %v1580, %v1571
        %v1582 = vsel %vm1575, %v1578, %v1581
        %v1583 = vsel %vm1572, nan, %v1582
        %v1584 = vand.u32 2147483647, %v320
        %vm1585 = vcmp.le.f32.partialorder %v1584, 0.7853982
        %vm1586 = vcmp.lt.s32.totalorder %v320, 0
        %v1587 = vand.u32 %v320, 2139095040
        %v1588 = vshrl.u32 %v1587, 23
        %v1589 = vsub.s32 %v1588, 127
        %v1590 = vand.u32 2147483647, %v320
        %v1591 = vand.u32 %v1590, 8388607
        %v1592 = vor.u32 %v1591, 8388608
        %v1593 = vsub.s32 0, %v1592
        %v1594 = vadd.s32 %v1589, 1
        %vm1595 = vcmp.gt.s32.totalorder %v1594, 0
        %v1596 = vsel %vm1595, %v1594, 0
        %v1597 = vshrl.u32 %v1596, 5
        %v1598 = vand.u32 %v1596, 31
        %v1599 = vsub.s32 32, %v1598
        %v1600 = vshrl.u32 683565275, %v1599
        %v1601 = vshll.u32 683565275, %v1598
        %v1602 = vshrl.u32 2475754826, %v1599
        %v1603 = vor.u32 %v1601, %v1602
        %v1604 = vshll.u32 2475754826, %v1598
        %v1605 = vshrl.u32 2131351028, %v1599
        %v1606 = vor.u32 %v1604, %v1605
        %v1607 = vshll.u32 2131351028, %v1598
        %v1608 = vshrl.u32 2102212464, %v1599
        %v1609 = vor.u32 %v1607, %v1608
        %v1610 = vshll.u32 2102212464, %v1598
        %v1611 = vshrl.u32 920167782, %v1599
        %v1612 = vor.u32 %v1610, %v1611
        %v1613 = vshll.u32 920167782, %v1598
        %v1614 = vshrl.u32 1326507024, %v1599
        %v1615 = vor.u32 %v1613, %v1614
        %vm1616 = vcmp.lt.s32.totalorder %v1597, 1
        %vm1617 = vcmp.lt.s32.totalorder %v1597, 2
        %vm1618 = vcmp.lt.s32.totalorder %v1597, 3
        %vm1619 = vcmp.lt.s32.totalorder %v1597, 4
        %v1620 = vsel %vm1616, %v1600, %v1603
        %v1621 = vsel %vm1619, %v1609, 2102212464
        %v1622 = vsel %vm1618, %v1606, %v1621
        %v1623 = vsel %vm1617, %v1620, %v1622
        %v1624 = vsel %vm1616, %v1603, %v1606
        %v1625 = vsel %vm1619, %v1612, 920167782
        %v1626 = vsel %vm1618, %v1609, %v1625
        %v1627 = vsel %vm1617, %v1624, %v1626
        %v1628 = vsel %vm1616, %v1606, %v1609
        %v1629 = vsel %vm1619, %v1615, 1326507024
        %v1630 = vsel %vm1618, %v1612, %v1629
        %v1631 = vsel %vm1617, %v1628, %v1630
        %v1632 = vshll.u32 %v1592, 8
        %v1633 = vand.u32 %v1632, 65535
        %v1634 = vshrl.u32 %v1632, 16
        %v1635 = vand.u32 %v1631, 65535
        %v1636 = vshrl.u32 %v1631, 16
        %v1637 = vmul.u32 %v1633, %v1635
        %v1638 = vmul.u32 %v1633, %v1636
        %v1639 = vmul.u32 %v1634, %v1635
        %v1640 = vmul.u32 %v1634, %v1636
        %v1641 = vshll.u32 %v1638, 16
        %v1642 = vshrl.u32 %v1638, 16
        %v1643 = vshll.u32 %v1639, 16
        %v1644 = vshrl.u32 %v1639, 16
        %vm1645 = vc.u32 %v1637, %v1641
        %v1646 = vsel %vm1645, 1, 0
        %v1647 = vadd.s32 %v1637, %v1641
        %v1648 = vadd.s32 %v1640, %v1646
        %vm1649 = vc.u32 %v1647, %v1643
        %v1650 = vsel %vm1649, 1, 0
        %v1651 = vadd.s32 %v1647, %v1643
        %v1652 = vadd.s32 %v1648, %v1650
        %v1653 = vadd.s32 %v1652, %v1642
        %v1654 = vadd.s32 %v1653, %v1644
        %v1655 = vand.u32 %v1632, 65535
        %v1656 = vshrl.u32 %v1632, 16
        %v1657 = vand.u32 %v1627, 65535
        %v1658 = vshrl.u32 %v1627, 16
        %v1659 = vmul.u32 %v1655, %v1657
        %v1660 = vmul.u32 %v1655, %v1658
        %v1661 = vmul.u32 %v1656, %v1657
        %v1662 = vmul.u32 %v1656, %v1658
        %v1663 = vshll.u32 %v1660, 16
        %v1664 = vshrl.u32 %v1660, 16
        %v1665 = vshll.u32 %v1661, 16
        %v1666 = vshrl.u32 %v1661, 16
        %vm1667 = vc.u32 %v1659, %v1663
        %v1668 = vsel %vm1667, 1, 0
        %v1669 = vadd.s32 %v1659, %v1663
        %v1670 = vadd.s32 %v1662, %v1668
        %vm1671 = vc.u32 %v1669, %v1665
        %v1672 = vsel %vm1671, 1, 0
        %v1673 = vadd.s32 %v1669, %v1665
        %v1674 = vadd.s32 %v1670, %v1672
        %v1675 = vadd.s32 %v1674, %v1664
        %v1676 = vadd.s32 %v1675, %v1666
        %v1677 = vmul.u32 %v1632, %v1623
        %v1678 = vadd.s32 %v1654, %v1673
        %vm1679 = vc.u32 %v1654, %v1673
        %v1680 = vadd.s32 %v1676, 1
        %v1681 = vsel %vm1679, %v1680, %v1676
        %v1682 = vadd.s32 %v1677, %v1681
        %v1683 = vadd.s32 %v1682, 536870912
        %v1684 = vshrl.u32 %v1683, 30
        %v1685 = vshll.u32 %v1684, 30
        %v1686 = vsub.s32 %v1682, %v1685
        %vm1687 = vcmp.lt.s32.totalorder %v1686, 0
        %v1688 = vsub.s32 0, %v1686
        %v1689 = vsel %vm1687, %v1688, %v1686
        %v1690 = vclz %v1689
        %v1691 = vsub.s32 %v1690, 2
        %vm1692 = vcmp.gt.s32.totalorder 0, %v1691
        %v1693 = vsel %vm1692, 0, %v1691
        %v1694 = vsub.s32 32, %v1693
        %v1695 = vshll.u32 %v1686, %v1693
        %v1696 = vshrl.u32 %v1678, %v1694
        %v1697 = vor.u32 %v1695, %v1696
        %v1698 = vsub.s32 4294967266, %v1693
        %v1699 = vadd.s32 %v1698, 127
        %v1700 = vshll.u32 %v1699, 23
        %v1701 = vor.u32 4788187, %v1700
        %v1702 = vand.u32 2147483647, %v1701
        %v1704 = vcvt.s32.f32 %v1697
        %v1705 = vmul.f32 %v1704, %v1702
        %v1706 = vxor.u32 %v1705, 2147483648
        %v1707 = vsel %vm1586, %v1706, %v1705
        %v1708 = vsub.s32 4, %v1684
        %v1709 = vsel %vm1586, %v1708, %v1684
        %v1710 = vsel %vm1585, %v320, %v1707
        %v1711 = vsel %vm1585, 0, %v1709
        %v1712 = vmul.f32 %v1710, %v1710
        %v1713 = vmul.f32 %v1712, -0.001358992
        %v1714 = vadd.f32 %v1713, 0.041655596
        %v1715 = vmul.f32 %v1712, %v1714
        %v1716 = vadd.f32 %v1715, -0.4999988
        %v1717 = vmul.f32 %v1712, %v1716
        %v1718 = vadd.f32 1.0, %v1717
        %v1719 = vmul.f32 %v1710, %v1710
        %v1720 = vmul.f32 %v1719, -0.00019511016
        %v1721 = vadd.f32 %v1720, 0.008332121
        %v1722 = vmul.f32 %v1719, %v1721
        %v1723 = vadd.f32 %v1722, -0.16666654
        %v1724 = vmul.f32 %v1719, %v1723
        %v1725 = vadd.f32 %v1724, 1.0
        %v1726 = vmul.f32 %v1725, %v1710
        %vm1727 = vweird.f32 %v320
        %v1728 = vadd.s32 %v1711, 3
        %v1729 = vand.u32 %v1728, 3
        %vm1730 = vcmp.lt.s32.totalorder %v1729, 2
        %vm1731 = vcmp.eq.s32.totalorder %v1729, 0
        %v1732 = vxor.u32 %v1726, 2147483648
        %v1733 = vsel %vm1731, %v1718, %v1732
        %vm1734 = vcmp.eq.s32.totalorder %v1729, 2
        %v1735 = vxor.u32 %v1718, 2147483648
        %v1736 = vsel %vm1734, %v1735, %v1726
        %v1737 = vsel %vm1730, %v1733, %v1736
        %v1738 = vsel %vm1727, nan, %v1737
        %v1739 = vand.u32 2147483647, %v321
        %vm1740 = vcmp.le.f32.partialorder %v1739, 0.7853982
        %vm1741 = vcmp.lt.s32.totalorder %v321, 0
        %v1742 = vand.u32 %v321, 2139095040
        %v1743 = vshrl.u32 %v1742, 23
        %v1744 = vsub.s32 %v1743, 127
        %v1745 = vand.u32 2147483647, %v321
        %v1746 = vand.u32 %v1745, 8388607
        %v1747 = vor.u32 %v1746, 8388608
        %v1748 = vsub.s32 0, %v1747
        %v1749 = vadd.s32 %v1744, 1
        %vm1750 = vcmp.gt.s32.totalorder %v1749, 0
        %v1751 = vsel %vm1750, %v1749, 0
        %v1752 = vshrl.u32 %v1751, 5
        %v1753 = vand.u32 %v1751, 31
        %v1754 = vsub.s32 32, %v1753
        %v1755 = vshrl.u32 683565275, %v1754
        %v1756 = vshll.u32 683565275, %v1753
        %v1757 = vshrl.u32 2475754826, %v1754
        %v1758 = vor.u32 %v1756, %v1757
        %v1759 = vshll.u32 2475754826, %v1753
        %v1760 = vshrl.u32 2131351028, %v1754
        %v1761 = vor.u32 %v1759, %v1760
        %v1762 = vshll.u32 2131351028, %v1753
        %v1763 = vshrl.u32 2102212464, %v1754
        %v1764 = vor.u32 %v1762, %v1763
        %v1765 = vshll.u32 2102212464, %v1753
        %v1766 = vshrl.u32 920167782, %v1754
        %v1767 = vor.u32 %v1765, %v1766
        %v1768 = vshll.u32 920167782, %v1753
        %v1769 = vshrl.u32 1326507024, %v1754
        %v1770 = vor.u32 %v1768, %v1769
        %vm1771 = vcmp.lt.s32.totalorder %v1752, 1
        %vm1772 = vcmp.lt.s32.totalorder %v1752, 2
        %vm1773 = vcmp.lt.s32.totalorder %v1752, 3
        %vm1774 = vcmp.lt.s32.totalorder %v1752, 4
        %v1775 = vsel %vm1771, %v1755, %v1758
        %v1776 = vsel %vm1774, %v1764, 2102212464
        %v1777 = vsel %vm1773, %v1761, %v1776
        %v1778 = vsel %vm1772, %v1775, %v1777
        %v1779 = vsel %vm1771, %v1758, %v1761
        %v1780 = vsel %vm1774, %v1767, 920167782
        %v1781 = vsel %vm1773, %v1764, %v1780
        %v1782 = vsel %vm1772, %v1779, %v1781
        %v1783 = vsel %vm1771, %v1761, %v1764
        %v1784 = vsel %vm1774, %v1770, 1326507024
        %v1785 = vsel %vm1773, %v1767, %v1784
        %v1786 = vsel %vm1772, %v1783, %v1785
        %v1787 = vshll.u32 %v1747, 8
        %v1788 = vand.u32 %v1787, 65535
        %v1789 = vshrl.u32 %v1787, 16
        %v1790 = vand.u32 %v1786, 65535
        %v1791 = vshrl.u32 %v1786, 16
        %v1792 = vmul.u32 %v1788, %v1790
        %v1793 = vmul.u32 %v1788, %v1791
        %v1794 = vmul.u32 %v1789, %v1790
        %v1795 = vmul.u32 %v1789, %v1791
        %v1796 = vshll.u32 %v1793, 16
        %v1797 = vshrl.u32 %v1793, 16
        %v1798 = vshll.u32 %v1794, 16
        %v1799 = vshrl.u32 %v1794, 16
        %vm1800 = vc.u32 %v1792, %v1796
        %v1801 = vsel %vm1800, 1, 0
        %v1802 = vadd.s32 %v1792, %v1796
        %v1803 = vadd.s32 %v1795, %v1801
        %vm1804 = vc.u32 %v1802, %v1798
        %v1805 = vsel %vm1804, 1, 0
        %v1806 = vadd.s32 %v1802, %v1798
        %v1807 = vadd.s32 %v1803, %v1805
        %v1808 = vadd.s32 %v1807, %v1797
        %v1809 = vadd.s32 %v1808, %v1799
        %v1810 = vand.u32 %v1787, 65535
        %v1811 = vshrl.u32 %v1787, 16
        %v1812 = vand.u32 %v1782, 65535
        %v1813 = vshrl.u32 %v1782, 16
        %v1814 = vmul.u32 %v1810, %v1812
        %v1815 = vmul.u32 %v1810, %v1813
        %v1816 = vmul.u32 %v1811, %v1812
        %v1817 = vmul.u32 %v1811, %v1813
        %v1818 = vshll.u32 %v1815, 16
        %v1819 = vshrl.u32 %v1815, 16
        %v1820 = vshll.u32 %v1816, 16
        %v1821 = vshrl.u32 %v1816, 16
        %vm1822 = vc.u32 %v1814, %v1818
        %v1823 = vsel %vm1822, 1, 0
        %v1824 = vadd.s32 %v1814, %v1818
        %v1825 = vadd.s32 %v1817, %v1823
        %vm1826 = vc.u32 %v1824, %v1820
        %v1827 = vsel %vm1826, 1, 0
        %v1828 = vadd.s32 %v1824, %v1820
        %v1829 = vadd.s32 %v1825, %v1827
        %v1830 = vadd.s32 %v1829, %v1819
        %v1831 = vadd.s32 %v1830, %v1821
        %v1832 = vmul.u32 %v1787, %v1778
        %v1833 = vadd.s32 %v1809, %v1828
        %vm1834 = vc.u32 %v1809, %v1828
        %v1835 = vadd.s32 %v1831, 1
        %v1836 = vsel %vm1834, %v1835, %v1831
        %v1837 = vadd.s32 %v1832, %v1836
        %v1838 = vadd.s32 %v1837, 536870912
        %v1839 = vshrl.u32 %v1838, 30
        %v1840 = vshll.u32 %v1839, 30
        %v1841 = vsub.s32 %v1837, %v1840
        %vm1842 = vcmp.lt.s32.totalorder %v1841, 0
        %v1843 = vsub.s32 0, %v1841
        %v1844 = vsel %vm1842, %v1843, %v1841
        %v1845 = vclz %v1844
        %v1846 = vsub.s32 %v1845, 2
        %vm1847 = vcmp.gt.s32.totalorder 0, %v1846
        %v1848 = vsel %vm1847, 0, %v1846
        %v1849 = vsub.s32 32, %v1848
        %v1850 = vshll.u32 %v1841, %v1848
        %v1851 = vshrl.u32 %v1833, %v1849
        %v1852 = vor.u32 %v1850, %v1851
        %v1853 = vsub.s32 4294967266, %v1848
        %v1854 = vadd.s32 %v1853, 127
        %v1855 = vshll.u32 %v1854, 23
        %v1856 = vor.u32 4788187, %v1855
        %v1857 = vand.u32 2147483647, %v1856
        %v1859 = vcvt.s32.f32 %v1852
        %v1860 = vmul.f32 %v1859, %v1857
        %v1861 = vxor.u32 %v1860, 2147483648
        %v1862 = vsel %vm1741, %v1861, %v1860
        %v1863 = vsub.s32 4, %v1839
        %v1864 = vsel %vm1741, %v1863, %v1839
        %v1865 = vsel %vm1740, %v321, %v1862
        %v1866 = vsel %vm1740, 0, %v1864
        %v1867 = vmul.f32 %v1865, %v1865
        %v1868 = vmul.f32 %v1867, -0.001358992
        %v1869 = vadd.f32 %v1868, 0.041655596
        %v1870 = vmul.f32 %v1867, %v1869
        %v1871 = vadd.f32 %v1870, -0.4999988
        %v1872 = vmul.f32 %v1867, %v1871
        %v1873 = vadd.f32 1.0, %v1872
        %v1874 = vmul.f32 %v1865, %v1865
        %v1875 = vmul.f32 %v1874, -0.00019511016
        %v1876 = vadd.f32 %v1875, 0.008332121
        %v1877 = vmul.f32 %v1874, %v1876
        %v1878 = vadd.f32 %v1877, -0.16666654
        %v1879 = vmul.f32 %v1874, %v1878
        %v1880 = vadd.f32 %v1879, 1.0
        %v1881 = vmul.f32 %v1880, %v1865
        %vm1882 = vweird.f32 %v321
        %v1883 = vadd.s32 %v1866, 3
        %v1884 = vand.u32 %v1883, 3
        %vm1885 = vcmp.lt.s32.totalorder %v1884, 2
        %vm1886 = vcmp.eq.s32.totalorder %v1884, 0
        %v1887 = vxor.u32 %v1881, 2147483648
        %v1888 = vsel %vm1886, %v1873, %v1887
        %vm1889 = vcmp.eq.s32.totalorder %v1884, 2
        %v1890 = vxor.u32 %v1873, 2147483648
        %v1891 = vsel %vm1889, %v1890, %v1881
        %v1892 = vsel %vm1885, %v1888, %v1891
        %v1893 = vsel %vm1882, nan, %v1892
        %v1894 = vand.u32 2147483647, %v322
        %vm1895 = vcmp.le.f32.partialorder %v1894, 0.7853982
        %vm1896 = vcmp.lt.s32.totalorder %v322, 0
        %v1897 = vand.u32 %v322, 2139095040
        %v1898 = vshrl.u32 %v1897, 23
        %v1899 = vsub.s32 %v1898, 127
        %v1900 = vand.u32 2147483647, %v322
        %v1901 = vand.u32 %v1900, 8388607
        %v1902 = vor.u32 %v1901, 8388608
        %v1903 = vsub.s32 0, %v1902
        %v1904 = vadd.s32 %v1899, 1
        %vm1905 = vcmp.gt.s32.totalorder %v1904, 0
        %v1906 = vsel %vm1905, %v1904, 0
        %v1907 = vshrl.u32 %v1906, 5
        %v1908 = vand.u32 %v1906, 31
        %v1909 = vsub.s32 32, %v1908
        %v1910 = vshrl.u32 683565275, %v1909
        %v1911 = vshll.u32 683565275, %v1908
        %v1912 = vshrl.u32 2475754826, %v1909
        %v1913 = vor.u32 %v1911, %v1912
        %v1914 = vshll.u32 2475754826, %v1908
        %v1915 = vshrl.u32 2131351028, %v1909
        %v1916 = vor.u32 %v1914, %v1915
        %v1917 = vshll.u32 2131351028, %v1908
        %v1918 = vshrl.u32 2102212464, %v1909
        %v1919 = vor.u32 %v1917, %v1918
        %v1920 = vshll.u32 2102212464, %v1908
        %v1921 = vshrl.u32 920167782, %v1909
        %v1922 = vor.u32 %v1920, %v1921
        %v1923 = vshll.u32 920167782, %v1908
        %v1924 = vshrl.u32 1326507024, %v1909
        %v1925 = vor.u32 %v1923, %v1924
        %vm1926 = vcmp.lt.s32.totalorder %v1907, 1
        %vm1927 = vcmp.lt.s32.totalorder %v1907, 2
        %vm1928 = vcmp.lt.s32.totalorder %v1907, 3
        %vm1929 = vcmp.lt.s32.totalorder %v1907, 4
        %v1930 = vsel %vm1926, %v1910, %v1913
        %v1931 = vsel %vm1929, %v1919, 2102212464
        %v1932 = vsel %vm1928, %v1916, %v1931
        %v1933 = vsel %vm1927, %v1930, %v1932
        %v1934 = vsel %vm1926, %v1913, %v1916
        %v1935 = vsel %vm1929, %v1922, 920167782
        %v1936 = vsel %vm1928, %v1919, %v1935
        %v1937 = vsel %vm1927, %v1934, %v1936
        %v1938 = vsel %vm1926, %v1916, %v1919
        %v1939 = vsel %vm1929, %v1925, 1326507024
        %v1940 = vsel %vm1928, %v1922, %v1939
        %v1941 = vsel %vm1927, %v1938, %v1940
        %v1942 = vshll.u32 %v1902, 8
        %v1943 = vand.u32 %v1942, 65535
        %v1944 = vshrl.u32 %v1942, 16
        %v1945 = vand.u32 %v1941, 65535
        %v1946 = vshrl.u32 %v1941, 16
        %v1947 = vmul.u32 %v1943, %v1945
        %v1948 = vmul.u32 %v1943, %v1946
        %v1949 = vmul.u32 %v1944, %v1945
        %v1950 = vmul.u32 %v1944, %v1946
        %v1951 = vshll.u32 %v1948, 16
        %v1952 = vshrl.u32 %v1948, 16
        %v1953 = vshll.u32 %v1949, 16
        %v1954 = vshrl.u32 %v1949, 16
        %vm1955 = vc.u32 %v1947, %v1951
        %v1956 = vsel %vm1955, 1, 0
        %v1957 = vadd.s32 %v1947, %v1951
        %v1958 = vadd.s32 %v1950, %v1956
        %vm1959 = vc.u32 %v1957, %v1953
        %v1960 = vsel %vm1959, 1, 0
        %v1961 = vadd.s32 %v1957, %v1953
        %v1962 = vadd.s32 %v1958, %v1960
        %v1963 = vadd.s32 %v1962, %v1952
        %v1964 = vadd.s32 %v1963, %v1954
        %v1965 = vand.u32 %v1942, 65535
        %v1966 = vshrl.u32 %v1942, 16
        %v1967 = vand.u32 %v1937, 65535
        %v1968 = vshrl.u32 %v1937, 16
        %v1969 = vmul.u32 %v1965, %v1967
        %v1970 = vmul.u32 %v1965, %v1968
        %v1971 = vmul.u32 %v1966, %v1967
        %v1972 = vmul.u32 %v1966, %v1968
        %v1973 = vshll.u32 %v1970, 16
        %v1974 = vshrl.u32 %v1970, 16
        %v1975 = vshll.u32 %v1971, 16
        %v1976 = vshrl.u32 %v1971, 16
        %vm1977 = vc.u32 %v1969, %v1973
        %v1978 = vsel %vm1977, 1, 0
        %v1979 = vadd.s32 %v1969, %v1973
        %v1980 = vadd.s32 %v1972, %v1978
        %vm1981 = vc.u32 %v1979, %v1975
        %v1982 = vsel %vm1981, 1, 0
        %v1983 = vadd.s32 %v1979, %v1975
        %v1984 = vadd.s32 %v1980, %v1982
        %v1985 = vadd.s32 %v1984, %v1974
        %v1986 = vadd.s32 %v1985, %v1976
        %v1987 = vmul.u32 %v1942, %v1933
        %v1988 = vadd.s32 %v1964, %v1983
        %vm1989 = vc.u32 %v1964, %v1983
        %v1990 = vadd.s32 %v1986, 1
        %v1991 = vsel %vm1989, %v1990, %v1986
        %v1992 = vadd.s32 %v1987, %v1991
        %v1993 = vadd.s32 %v1992, 536870912
        %v1994 = vshrl.u32 %v1993, 30
        %v1995 = vshll.u32 %v1994, 30
        %v1996 = vsub.s32 %v1992, %v1995
        %vm1997 = vcmp.lt.s32.totalorder %v1996, 0
        %v1998 = vsub.s32 0, %v1996
        %v1999 = vsel %vm1997, %v1998, %v1996
        %v2000 = vclz %v1999
        %v2001 = vsub.s32 %v2000, 2
        %vm2002 = vcmp.gt.s32.totalorder 0, %v2001
        %v2003 = vsel %vm2002, 0, %v2001
        %v2004 = vsub.s32 32, %v2003
        %v2005 = vshll.u32 %v1996, %v2003
        %v2006 = vshrl.u32 %v1988, %v2004
        %v2007 = vor.u32 %v2005, %v2006
        %v2008 = vsub.s32 4294967266, %v2003
        %v2009 = vadd.s32 %v2008, 127
        %v2010 = vshll.u32 %v2009, 23
        %v2011 = vor.u32 4788187, %v2010
        %v2012 = vand.u32 2147483647, %v2011
        %v2014 = vcvt.s32.f32 %v2007
        %v2015 = vmul.f32 %v2014, %v2012
        %v2016 = vxor.u32 %v2015, 2147483648
        %v2017 = vsel %vm1896, %v2016, %v2015
        %v2018 = vsub.s32 4, %v1994
        %v2019 = vsel %vm1896, %v2018, %v1994
        %v2020 = vsel %vm1895, %v322, %v2017
        %v2021 = vsel %vm1895, 0, %v2019
        %v2022 = vmul.f32 %v2020, %v2020
        %v2023 = vmul.f32 %v2022, -0.001358992
        %v2024 = vadd.f32 %v2023, 0.041655596
        %v2025 = vmul.f32 %v2022, %v2024
        %v2026 = vadd.f32 %v2025, -0.4999988
        %v2027 = vmul.f32 %v2022, %v2026
        %v2028 = vadd.f32 1.0, %v2027
        %v2029 = vmul.f32 %v2020, %v2020
        %v2030 = vmul.f32 %v2029, -0.00019511016
        %v2031 = vadd.f32 %v2030, 0.008332121
        %v2032 = vmul.f32 %v2029, %v2031
        %v2033 = vadd.f32 %v2032, -0.16666654
        %v2034 = vmul.f32 %v2029, %v2033
        %v2035 = vadd.f32 %v2034, 1.0
        %v2036 = vmul.f32 %v2035, %v2020
        %vm2037 = vweird.f32 %v322
        %v2038 = vadd.s32 %v2021, 3
        %v2039 = vand.u32 %v2038, 3
        %vm2040 = vcmp.lt.s32.totalorder %v2039, 2
        %vm2041 = vcmp.eq.s32.totalorder %v2039, 0
        %v2042 = vxor.u32 %v2036, 2147483648
        %v2043 = vsel %vm2041, %v2028, %v2042
        %vm2044 = vcmp.eq.s32.totalorder %v2039, 2
        %v2045 = vxor.u32 %v2028, 2147483648
        %v2046 = vsel %vm2044, %v2045, %v2036
        %v2047 = vsel %vm2040, %v2043, %v2046
        %v2048 = vsel %vm2037, nan, %v2047
        %v2049 = vand.u32 2147483647, %v323
        %vm2050 = vcmp.le.f32.partialorder %v2049, 0.7853982
        %vm2051 = vcmp.lt.s32.totalorder %v323, 0
        %v2052 = vand.u32 %v323, 2139095040
        %v2053 = vshrl.u32 %v2052, 23
        %v2054 = vsub.s32 %v2053, 127
        %v2055 = vand.u32 2147483647, %v323
        %v2056 = vand.u32 %v2055, 8388607
        %v2057 = vor.u32 %v2056, 8388608
        %v2058 = vsub.s32 0, %v2057
        %v2059 = vadd.s32 %v2054, 1
        %vm2060 = vcmp.gt.s32.totalorder %v2059, 0
        %v2061 = vsel %vm2060, %v2059, 0
        %v2062 = vshrl.u32 %v2061, 5
        %v2063 = vand.u32 %v2061, 31
        %v2064 = vsub.s32 32, %v2063
        %v2065 = vshrl.u32 683565275, %v2064
        %v2066 = vshll.u32 683565275, %v2063
        %v2067 = vshrl.u32 2475754826, %v2064
        %v2068 = vor.u32 %v2066, %v2067
        %v2069 = vshll.u32 2475754826, %v2063
        %v2070 = vshrl.u32 2131351028, %v2064
        %v2071 = vor.u32 %v2069, %v2070
        %v2072 = vshll.u32 2131351028, %v2063
        %v2073 = vshrl.u32 2102212464, %v2064
        %v2074 = vor.u32 %v2072, %v2073
        %v2075 = vshll.u32 2102212464, %v2063
        %v2076 = vshrl.u32 920167782, %v2064
        %v2077 = vor.u32 %v2075, %v2076
        %v2078 = vshll.u32 920167782, %v2063
        %v2079 = vshrl.u32 1326507024, %v2064
        %v2080 = vor.u32 %v2078, %v2079
        %vm2081 = vcmp.lt.s32.totalorder %v2062, 1
        %vm2082 = vcmp.lt.s32.totalorder %v2062, 2
        %vm2083 = vcmp.lt.s32.totalorder %v2062, 3
        %vm2084 = vcmp.lt.s32.totalorder %v2062, 4
        %v2085 = vsel %vm2081, %v2065, %v2068
        %v2086 = vsel %vm2084, %v2074, 2102212464
        %v2087 = vsel %vm2083, %v2071, %v2086
        %v2088 = vsel %vm2082, %v2085, %v2087
        %v2089 = vsel %vm2081, %v2068, %v2071
        %v2090 = vsel %vm2084, %v2077, 920167782
        %v2091 = vsel %vm2083, %v2074, %v2090
        %v2092 = vsel %vm2082, %v2089, %v2091
        %v2093 = vsel %vm2081, %v2071, %v2074
        %v2094 = vsel %vm2084, %v2080, 1326507024
        %v2095 = vsel %vm2083, %v2077, %v2094
        %v2096 = vsel %vm2082, %v2093, %v2095
        %v2097 = vshll.u32 %v2057, 8
        %v2098 = vand.u32 %v2097, 65535
        %v2099 = vshrl.u32 %v2097, 16
        %v2100 = vand.u32 %v2096, 65535
        %v2101 = vshrl.u32 %v2096, 16
        %v2102 = vmul.u32 %v2098, %v2100
        %v2103 = vmul.u32 %v2098, %v2101
        %v2104 = vmul.u32 %v2099, %v2100
        %v2105 = vmul.u32 %v2099, %v2101
        %v2106 = vshll.u32 %v2103, 16
        %v2107 = vshrl.u32 %v2103, 16
        %v2108 = vshll.u32 %v2104, 16
        %v2109 = vshrl.u32 %v2104, 16
        %vm2110 = vc.u32 %v2102, %v2106
        %v2111 = vsel %vm2110, 1, 0
        %v2112 = vadd.s32 %v2102, %v2106
        %v2113 = vadd.s32 %v2105, %v2111
        %vm2114 = vc.u32 %v2112, %v2108
        %v2115 = vsel %vm2114, 1, 0
        %v2116 = vadd.s32 %v2112, %v2108
        %v2117 = vadd.s32 %v2113, %v2115
        %v2118 = vadd.s32 %v2117, %v2107
        %v2119 = vadd.s32 %v2118, %v2109
        %v2120 = vand.u32 %v2097, 65535
        %v2121 = vshrl.u32 %v2097, 16
        %v2122 = vand.u32 %v2092, 65535
        %v2123 = vshrl.u32 %v2092, 16
        %v2124 = vmul.u32 %v2120, %v2122
        %v2125 = vmul.u32 %v2120, %v2123
        %v2126 = vmul.u32 %v2121, %v2122
        %v2127 = vmul.u32 %v2121, %v2123
        %v2128 = vshll.u32 %v2125, 16
        %v2129 = vshrl.u32 %v2125, 16
        %v2130 = vshll.u32 %v2126, 16
        %v2131 = vshrl.u32 %v2126, 16
        %vm2132 = vc.u32 %v2124, %v2128
        %v2133 = vsel %vm2132, 1, 0
        %v2134 = vadd.s32 %v2124, %v2128
        %v2135 = vadd.s32 %v2127, %v2133
        %vm2136 = vc.u32 %v2134, %v2130
        %v2137 = vsel %vm2136, 1, 0
        %v2138 = vadd.s32 %v2134, %v2130
        %v2139 = vadd.s32 %v2135, %v2137
        %v2140 = vadd.s32 %v2139, %v2129
        %v2141 = vadd.s32 %v2140, %v2131
        %v2142 = vmul.u32 %v2097, %v2088
        %v2143 = vadd.s32 %v2119, %v2138
        %vm2144 = vc.u32 %v2119, %v2138
        %v2145 = vadd.s32 %v2141, 1
        %v2146 = vsel %vm2144, %v2145, %v2141
        %v2147 = vadd.s32 %v2142, %v2146
        %v2148 = vadd.s32 %v2147, 536870912
        %v2149 = vshrl.u32 %v2148, 30
        %v2150 = vshll.u32 %v2149, 30
        %v2151 = vsub.s32 %v2147, %v2150
        %vm2152 = vcmp.lt.s32.totalorder %v2151, 0
        %v2153 = vsub.s32 0, %v2151
        %v2154 = vsel %vm2152, %v2153, %v2151
        %v2155 = vclz %v2154
        %v2156 = vsub.s32 %v2155, 2
        %vm2157 = vcmp.gt.s32.totalorder 0, %v2156
        %v2158 = vsel %vm2157, 0, %v2156
        %v2159 = vsub.s32 32, %v2158
        %v2160 = vshll.u32 %v2151, %v2158
        %v2161 = vshrl.u32 %v2143, %v2159
        %v2162 = vor.u32 %v2160, %v2161
        %v2163 = vsub.s32 4294967266, %v2158
        %v2164 = vadd.s32 %v2163, 127
        %v2165 = vshll.u32 %v2164, 23
        %v2166 = vor.u32 4788187, %v2165
        %v2167 = vand.u32 2147483647, %v2166
        %v2169 = vcvt.s32.f32 %v2162
        %v2170 = vmul.f32 %v2169, %v2167
        %v2171 = vxor.u32 %v2170, 2147483648
        %v2172 = vsel %vm2051, %v2171, %v2170
        %v2173 = vsub.s32 4, %v2149
        %v2174 = vsel %vm2051, %v2173, %v2149
        %v2175 = vsel %vm2050, %v323, %v2172
        %v2176 = vsel %vm2050, 0, %v2174
        %v2177 = vmul.f32 %v2175, %v2175
        %v2178 = vmul.f32 %v2177, -0.001358992
        %v2179 = vadd.f32 %v2178, 0.041655596
        %v2180 = vmul.f32 %v2177, %v2179
        %v2181 = vadd.f32 %v2180, -0.4999988
        %v2182 = vmul.f32 %v2177, %v2181
        %v2183 = vadd.f32 1.0, %v2182
        %v2184 = vmul.f32 %v2175, %v2175
        %v2185 = vmul.f32 %v2184, -0.00019511016
        %v2186 = vadd.f32 %v2185, 0.008332121
        %v2187 = vmul.f32 %v2184, %v2186
        %v2188 = vadd.f32 %v2187, -0.16666654
        %v2189 = vmul.f32 %v2184, %v2188
        %v2190 = vadd.f32 %v2189, 1.0
        %v2191 = vmul.f32 %v2190, %v2175
        %vm2192 = vweird.f32 %v323
        %v2193 = vadd.s32 %v2176, 3
        %v2194 = vand.u32 %v2193, 3
        %vm2195 = vcmp.lt.s32.totalorder %v2194, 2
        %vm2196 = vcmp.eq.s32.totalorder %v2194, 0
        %v2197 = vxor.u32 %v2191, 2147483648
        %v2198 = vsel %vm2196, %v2183, %v2197
        %vm2199 = vcmp.eq.s32.totalorder %v2194, 2
        %v2200 = vxor.u32 %v2183, 2147483648
        %v2201 = vsel %vm2199, %v2200, %v2191
        %v2202 = vsel %vm2195, %v2198, %v2201
        %v2203 = vsel %vm2192, nan, %v2202
        %v2204 = vand.u32 2147483647, %v324
        %vm2205 = vcmp.le.f32.partialorder %v2204, 0.7853982
        %vm2206 = vcmp.lt.s32.totalorder %v324, 0
        %v2207 = vand.u32 %v324, 2139095040
        %v2208 = vshrl.u32 %v2207, 23
        %v2209 = vsub.s32 %v2208, 127
        %v2210 = vand.u32 2147483647, %v324
        %v2211 = vand.u32 %v2210, 8388607
        %v2212 = vor.u32 %v2211, 8388608
        %v2213 = vsub.s32 0, %v2212
        %v2214 = vadd.s32 %v2209, 1
        %vm2215 = vcmp.gt.s32.totalorder %v2214, 0
        %v2216 = vsel %vm2215, %v2214, 0
        %v2217 = vshrl.u32 %v2216, 5
        %v2218 = vand.u32 %v2216, 31
        %v2219 = vsub.s32 32, %v2218
        %v2220 = vshrl.u32 683565275, %v2219
        %v2221 = vshll.u32 683565275, %v2218
        %v2222 = vshrl.u32 2475754826, %v2219
        %v2223 = vor.u32 %v2221, %v2222
        %v2224 = vshll.u32 2475754826, %v2218
        %v2225 = vshrl.u32 2131351028, %v2219
        %v2226 = vor.u32 %v2224, %v2225
        %v2227 = vshll.u32 2131351028, %v2218
        %v2228 = vshrl.u32 2102212464, %v2219
        %v2229 = vor.u32 %v2227, %v2228
        %v2230 = vshll.u32 2102212464, %v2218
        %v2231 = vshrl.u32 920167782, %v2219
        %v2232 = vor.u32 %v2230, %v2231
        %v2233 = vshll.u32 920167782, %v2218
        %v2234 = vshrl.u32 1326507024, %v2219
        %v2235 = vor.u32 %v2233, %v2234
        %vm2236 = vcmp.lt.s32.totalorder %v2217, 1
        %vm2237 = vcmp.lt.s32.totalorder %v2217, 2
        %vm2238 = vcmp.lt.s32.totalorder %v2217, 3
        %vm2239 = vcmp.lt.s32.totalorder %v2217, 4
        %v2240 = vsel %vm2236, %v2220, %v2223
        %v2241 = vsel %vm2239, %v2229, 2102212464
        %v2242 = vsel %vm2238, %v2226, %v2241
        %v2243 = vsel %vm2237, %v2240, %v2242
        %v2244 = vsel %vm2236, %v2223, %v2226
        %v2245 = vsel %vm2239, %v2232, 920167782
        %v2246 = vsel %vm2238, %v2229, %v2245
        %v2247 = vsel %vm2237, %v2244, %v2246
        %v2248 = vsel %vm2236, %v2226, %v2229
        %v2249 = vsel %vm2239, %v2235, 1326507024
        %v2250 = vsel %vm2238, %v2232, %v2249
        %v2251 = vsel %vm2237, %v2248, %v2250
        %v2252 = vshll.u32 %v2212, 8
        %v2253 = vand.u32 %v2252, 65535
        %v2254 = vshrl.u32 %v2252, 16
        %v2255 = vand.u32 %v2251, 65535
        %v2256 = vshrl.u32 %v2251, 16
        %v2257 = vmul.u32 %v2253, %v2255
        %v2258 = vmul.u32 %v2253, %v2256
        %v2259 = vmul.u32 %v2254, %v2255
        %v2260 = vmul.u32 %v2254, %v2256
        %v2261 = vshll.u32 %v2258, 16
        %v2262 = vshrl.u32 %v2258, 16
        %v2263 = vshll.u32 %v2259, 16
        %v2264 = vshrl.u32 %v2259, 16
        %vm2265 = vc.u32 %v2257, %v2261
        %v2266 = vsel %vm2265, 1, 0
        %v2267 = vadd.s32 %v2257, %v2261
        %v2268 = vadd.s32 %v2260, %v2266
        %vm2269 = vc.u32 %v2267, %v2263
        %v2270 = vsel %vm2269, 1, 0
        %v2271 = vadd.s32 %v2267, %v2263
        %v2272 = vadd.s32 %v2268, %v2270
        %v2273 = vadd.s32 %v2272, %v2262
        %v2274 = vadd.s32 %v2273, %v2264
        %v2275 = vand.u32 %v2252, 65535
        %v2276 = vshrl.u32 %v2252, 16
        %v2277 = vand.u32 %v2247, 65535
        %v2278 = vshrl.u32 %v2247, 16
        %v2279 = vmul.u32 %v2275, %v2277
        %v2280 = vmul.u32 %v2275, %v2278
        %v2281 = vmul.u32 %v2276, %v2277
        %v2282 = vmul.u32 %v2276, %v2278
        %v2283 = vshll.u32 %v2280, 16
        %v2284 = vshrl.u32 %v2280, 16
        %v2285 = vshll.u32 %v2281, 16
        %v2286 = vshrl.u32 %v2281, 16
        %vm2287 = vc.u32 %v2279, %v2283
        %v2288 = vsel %vm2287, 1, 0
        %v2289 = vadd.s32 %v2279, %v2283
        %v2290 = vadd.s32 %v2282, %v2288
        %vm2291 = vc.u32 %v2289, %v2285
        %v2292 = vsel %vm2291, 1, 0
        %v2293 = vadd.s32 %v2289, %v2285
        %v2294 = vadd.s32 %v2290, %v2292
        %v2295 = vadd.s32 %v2294, %v2284
        %v2296 = vadd.s32 %v2295, %v2286
        %v2297 = vmul.u32 %v2252, %v2243
        %v2298 = vadd.s32 %v2274, %v2293
        %vm2299 = vc.u32 %v2274, %v2293
        %v2300 = vadd.s32 %v2296, 1
        %v2301 = vsel %vm2299, %v2300, %v2296
        %v2302 = vadd.s32 %v2297, %v2301
        %v2303 = vadd.s32 %v2302, 536870912
        %v2304 = vshrl.u32 %v2303, 30
        %v2305 = vshll.u32 %v2304, 30
        %v2306 = vsub.s32 %v2302, %v2305
        %vm2307 = vcmp.lt.s32.totalorder %v2306, 0
        %v2308 = vsub.s32 0, %v2306
        %v2309 = vsel %vm2307, %v2308, %v2306
        %v2310 = vclz %v2309
        %v2311 = vsub.s32 %v2310, 2
        %vm2312 = vcmp.gt.s32.totalorder 0, %v2311
        %v2313 = vsel %vm2312, 0, %v2311
        %v2314 = vsub.s32 32, %v2313
        %v2315 = vshll.u32 %v2306, %v2313
        %v2316 = vshrl.u32 %v2298, %v2314
        %v2317 = vor.u32 %v2315, %v2316
        %v2318 = vsub.s32 4294967266, %v2313
        %v2319 = vadd.s32 %v2318, 127
        %v2320 = vshll.u32 %v2319, 23
        %v2321 = vor.u32 4788187, %v2320
        %v2322 = vand.u32 2147483647, %v2321
        %v2324 = vcvt.s32.f32 %v2317
        %v2325 = vmul.f32 %v2324, %v2322
        %v2326 = vxor.u32 %v2325, 2147483648
        %v2327 = vsel %vm2206, %v2326, %v2325
        %v2328 = vsub.s32 4, %v2304
        %v2329 = vsel %vm2206, %v2328, %v2304
        %v2330 = vsel %vm2205, %v324, %v2327
        %v2331 = vsel %vm2205, 0, %v2329
        %v2332 = vmul.f32 %v2330, %v2330
        %v2333 = vmul.f32 %v2332, -0.001358992
        %v2334 = vadd.f32 %v2333, 0.041655596
        %v2335 = vmul.f32 %v2332, %v2334
        %v2336 = vadd.f32 %v2335, -0.4999988
        %v2337 = vmul.f32 %v2332, %v2336
        %v2338 = vadd.f32 1.0, %v2337
        %v2339 = vmul.f32 %v2330, %v2330
        %v2340 = vmul.f32 %v2339, -0.00019511016
        %v2341 = vadd.f32 %v2340, 0.008332121
        %v2342 = vmul.f32 %v2339, %v2341
        %v2343 = vadd.f32 %v2342, -0.16666654
        %v2344 = vmul.f32 %v2339, %v2343
        %v2345 = vadd.f32 %v2344, 1.0
        %v2346 = vmul.f32 %v2345, %v2330
        %vm2347 = vweird.f32 %v324
        %v2348 = vadd.s32 %v2331, 3
        %v2349 = vand.u32 %v2348, 3
        %vm2350 = vcmp.lt.s32.totalorder %v2349, 2
        %vm2351 = vcmp.eq.s32.totalorder %v2349, 0
        %v2352 = vxor.u32 %v2346, 2147483648
        %v2353 = vsel %vm2351, %v2338, %v2352
        %vm2354 = vcmp.eq.s32.totalorder %v2349, 2
        %v2355 = vxor.u32 %v2338, 2147483648
        %v2356 = vsel %vm2354, %v2355, %v2346
        %v2357 = vsel %vm2350, %v2353, %v2356
        %v2358 = vsel %vm2347, nan, %v2357
        %v2359 = vand.u32 2147483647, %v325
        %vm2360 = vcmp.le.f32.partialorder %v2359, 0.7853982
        %vm2361 = vcmp.lt.s32.totalorder %v325, 0
        %v2362 = vand.u32 %v325, 2139095040
        %v2363 = vshrl.u32 %v2362, 23
        %v2364 = vsub.s32 %v2363, 127
        %v2365 = vand.u32 2147483647, %v325
        %v2366 = vand.u32 %v2365, 8388607
        %v2367 = vor.u32 %v2366, 8388608
        %v2368 = vsub.s32 0, %v2367
        %v2369 = vadd.s32 %v2364, 1
        %vm2370 = vcmp.gt.s32.totalorder %v2369, 0
        %v2371 = vsel %vm2370, %v2369, 0
        %v2372 = vshrl.u32 %v2371, 5
        %v2373 = vand.u32 %v2371, 31
        %v2374 = vsub.s32 32, %v2373
        %v2375 = vshrl.u32 683565275, %v2374
        %v2376 = vshll.u32 683565275, %v2373
        %v2377 = vshrl.u32 2475754826, %v2374
        %v2378 = vor.u32 %v2376, %v2377
        %v2379 = vshll.u32 2475754826, %v2373
        %v2380 = vshrl.u32 2131351028, %v2374
        %v2381 = vor.u32 %v2379, %v2380
        %v2382 = vshll.u32 2131351028, %v2373
        %v2383 = vshrl.u32 2102212464, %v2374
        %v2384 = vor.u32 %v2382, %v2383
        %v2385 = vshll.u32 2102212464, %v2373
        %v2386 = vshrl.u32 920167782, %v2374
        %v2387 = vor.u32 %v2385, %v2386
        %v2388 = vshll.u32 920167782, %v2373
        %v2389 = vshrl.u32 1326507024, %v2374
        %v2390 = vor.u32 %v2388, %v2389
        %vm2391 = vcmp.lt.s32.totalorder %v2372, 1
        %vm2392 = vcmp.lt.s32.totalorder %v2372, 2
        %vm2393 = vcmp.lt.s32.totalorder %v2372, 3
        %vm2394 = vcmp.lt.s32.totalorder %v2372, 4
        %v2395 = vsel %vm2391, %v2375, %v2378
        %v2396 = vsel %vm2394, %v2384, 2102212464
        %v2397 = vsel %vm2393, %v2381, %v2396
        %v2398 = vsel %vm2392, %v2395, %v2397
        %v2399 = vsel %vm2391, %v2378, %v2381
        %v2400 = vsel %vm2394, %v2387, 920167782
        %v2401 = vsel %vm2393, %v2384, %v2400
        %v2402 = vsel %vm2392, %v2399, %v2401
        %v2403 = vsel %vm2391, %v2381, %v2384
        %v2404 = vsel %vm2394, %v2390, 1326507024
        %v2405 = vsel %vm2393, %v2387, %v2404
        %v2406 = vsel %vm2392, %v2403, %v2405
        %v2407 = vshll.u32 %v2367, 8
        %v2408 = vand.u32 %v2407, 65535
        %v2409 = vshrl.u32 %v2407, 16
        %v2410 = vand.u32 %v2406, 65535
        %v2411 = vshrl.u32 %v2406, 16
        %v2412 = vmul.u32 %v2408, %v2410
        %v2413 = vmul.u32 %v2408, %v2411
        %v2414 = vmul.u32 %v2409, %v2410
        %v2415 = vmul.u32 %v2409, %v2411
        %v2416 = vshll.u32 %v2413, 16
        %v2417 = vshrl.u32 %v2413, 16
        %v2418 = vshll.u32 %v2414, 16
        %v2419 = vshrl.u32 %v2414, 16
        %vm2420 = vc.u32 %v2412, %v2416
        %v2421 = vsel %vm2420, 1, 0
        %v2422 = vadd.s32 %v2412, %v2416
        %v2423 = vadd.s32 %v2415, %v2421
        %vm2424 = vc.u32 %v2422, %v2418
        %v2425 = vsel %vm2424, 1, 0
        %v2426 = vadd.s32 %v2422, %v2418
        %v2427 = vadd.s32 %v2423, %v2425
        %v2428 = vadd.s32 %v2427, %v2417
        %v2429 = vadd.s32 %v2428, %v2419
        %v2430 = vand.u32 %v2407, 65535
        %v2431 = vshrl.u32 %v2407, 16
        %v2432 = vand.u32 %v2402, 65535
        %v2433 = vshrl.u32 %v2402, 16
        %v2434 = vmul.u32 %v2430, %v2432
        %v2435 = vmul.u32 %v2430, %v2433
        %v2436 = vmul.u32 %v2431, %v2432
        %v2437 = vmul.u32 %v2431, %v2433
        %v2438 = vshll.u32 %v2435, 16
        %v2439 = vshrl.u32 %v2435, 16
        %v2440 = vshll.u32 %v2436, 16
        %v2441 = vshrl.u32 %v2436, 16
        %vm2442 = vc.u32 %v2434, %v2438
        %v2443 = vsel %vm2442, 1, 0
        %v2444 = vadd.s32 %v2434, %v2438
        %v2445 = vadd.s32 %v2437, %v2443
        %vm2446 = vc.u32 %v2444, %v2440
        %v2447 = vsel %vm2446, 1, 0
        %v2448 = vadd.s32 %v2444, %v2440
        %v2449 = vadd.s32 %v2445, %v2447
        %v2450 = vadd.s32 %v2449, %v2439
        %v2451 = vadd.s32 %v2450, %v2441
        %v2452 = vmul.u32 %v2407, %v2398
        %v2453 = vadd.s32 %v2429, %v2448
        %vm2454 = vc.u32 %v2429, %v2448
        %v2455 = vadd.s32 %v2451, 1
        %v2456 = vsel %vm2454, %v2455, %v2451
        %v2457 = vadd.s32 %v2452, %v2456
        %v2458 = vadd.s32 %v2457, 536870912
        %v2459 = vshrl.u32 %v2458, 30
        %v2460 = vshll.u32 %v2459, 30
        %v2461 = vsub.s32 %v2457, %v2460
        %vm2462 = vcmp.lt.s32.totalorder %v2461, 0
        %v2463 = vsub.s32 0, %v2461
        %v2464 = vsel %vm2462, %v2463, %v2461
        %v2465 = vclz %v2464
        %v2466 = vsub.s32 %v2465, 2
        %vm2467 = vcmp.gt.s32.totalorder 0, %v2466
        %v2468 = vsel %vm2467, 0, %v2466
        %v2469 = vsub.s32 32, %v2468
        %v2470 = vshll.u32 %v2461, %v2468
        %v2471 = vshrl.u32 %v2453, %v2469
        %v2472 = vor.u32 %v2470, %v2471
        %v2473 = vsub.s32 4294967266, %v2468
        %v2474 = vadd.s32 %v2473, 127
        %v2475 = vshll.u32 %v2474, 23
        %v2476 = vor.u32 4788187, %v2475
        %v2477 = vand.u32 2147483647, %v2476
        %v2479 = vcvt.s32.f32 %v2472
        %v2480 = vmul.f32 %v2479, %v2477
        %v2481 = vxor.u32 %v2480, 2147483648
        %v2482 = vsel %vm2361, %v2481, %v2480
        %v2483 = vsub.s32 4, %v2459
        %v2484 = vsel %vm2361, %v2483, %v2459
        %v2485 = vsel %vm2360, %v325, %v2482
        %v2486 = vsel %vm2360, 0, %v2484
        %v2487 = vmul.f32 %v2485, %v2485
        %v2488 = vmul.f32 %v2487, -0.001358992
        %v2489 = vadd.f32 %v2488, 0.041655596
        %v2490 = vmul.f32 %v2487, %v2489
        %v2491 = vadd.f32 %v2490, -0.4999988
        %v2492 = vmul.f32 %v2487, %v2491
        %v2493 = vadd.f32 1.0, %v2492
        %v2494 = vmul.f32 %v2485, %v2485
        %v2495 = vmul.f32 %v2494, -0.00019511016
        %v2496 = vadd.f32 %v2495, 0.008332121
        %v2497 = vmul.f32 %v2494, %v2496
        %v2498 = vadd.f32 %v2497, -0.16666654
        %v2499 = vmul.f32 %v2494, %v2498
        %v2500 = vadd.f32 %v2499, 1.0
        %v2501 = vmul.f32 %v2500, %v2485
        %vm2502 = vweird.f32 %v325
        %v2503 = vadd.s32 %v2486, 3
        %v2504 = vand.u32 %v2503, 3
        %vm2505 = vcmp.lt.s32.totalorder %v2504, 2
        %vm2506 = vcmp.eq.s32.totalorder %v2504, 0
        %v2507 = vxor.u32 %v2501, 2147483648
        %v2508 = vsel %vm2506, %v2493, %v2507
        %vm2509 = vcmp.eq.s32.totalorder %v2504, 2
        %v2510 = vxor.u32 %v2493, 2147483648
        %v2511 = vsel %vm2509, %v2510, %v2501
        %v2512 = vsel %vm2505, %v2508, %v2511
        %v2513 = vsel %vm2502, nan, %v2512
        %v2514 = vand.u32 2147483647, %v326
        %vm2515 = vcmp.le.f32.partialorder %v2514, 0.7853982
        %vm2516 = vcmp.lt.s32.totalorder %v326, 0
        %v2517 = vand.u32 %v326, 2139095040
        %v2518 = vshrl.u32 %v2517, 23
        %v2519 = vsub.s32 %v2518, 127
        %v2520 = vand.u32 2147483647, %v326
        %v2521 = vand.u32 %v2520, 8388607
        %v2522 = vor.u32 %v2521, 8388608
        %v2523 = vsub.s32 0, %v2522
        %v2524 = vadd.s32 %v2519, 1
        %vm2525 = vcmp.gt.s32.totalorder %v2524, 0
        %v2526 = vsel %vm2525, %v2524, 0
        %v2527 = vshrl.u32 %v2526, 5
        %v2528 = vand.u32 %v2526, 31
        %v2529 = vsub.s32 32, %v2528
        %v2530 = vshrl.u32 683565275, %v2529
        %v2531 = vshll.u32 683565275, %v2528
        %v2532 = vshrl.u32 2475754826, %v2529
        %v2533 = vor.u32 %v2531, %v2532
        %v2534 = vshll.u32 2475754826, %v2528
        %v2535 = vshrl.u32 2131351028, %v2529
        %v2536 = vor.u32 %v2534, %v2535
        %v2537 = vshll.u32 2131351028, %v2528
        %v2538 = vshrl.u32 2102212464, %v2529
        %v2539 = vor.u32 %v2537, %v2538
        %v2540 = vshll.u32 2102212464, %v2528
        %v2541 = vshrl.u32 920167782, %v2529
        %v2542 = vor.u32 %v2540, %v2541
        %v2543 = vshll.u32 920167782, %v2528
        %v2544 = vshrl.u32 1326507024, %v2529
        %v2545 = vor.u32 %v2543, %v2544
        %vm2546 = vcmp.lt.s32.totalorder %v2527, 1
        %vm2547 = vcmp.lt.s32.totalorder %v2527, 2
        %vm2548 = vcmp.lt.s32.totalorder %v2527, 3
        %vm2549 = vcmp.lt.s32.totalorder %v2527, 4
        %v2550 = vsel %vm2546, %v2530, %v2533
        %v2551 = vsel %vm2549, %v2539, 2102212464
        %v2552 = vsel %vm2548, %v2536, %v2551
        %v2553 = vsel %vm2547, %v2550, %v2552
        %v2554 = vsel %vm2546, %v2533, %v2536
        %v2555 = vsel %vm2549, %v2542, 920167782
        %v2556 = vsel %vm2548, %v2539, %v2555
        %v2557 = vsel %vm2547, %v2554, %v2556
        %v2558 = vsel %vm2546, %v2536, %v2539
        %v2559 = vsel %vm2549, %v2545, 1326507024
        %v2560 = vsel %vm2548, %v2542, %v2559
        %v2561 = vsel %vm2547, %v2558, %v2560
        %v2562 = vshll.u32 %v2522, 8
        %v2563 = vand.u32 %v2562, 65535
        %v2564 = vshrl.u32 %v2562, 16
        %v2565 = vand.u32 %v2561, 65535
        %v2566 = vshrl.u32 %v2561, 16
        %v2567 = vmul.u32 %v2563, %v2565
        %v2568 = vmul.u32 %v2563, %v2566
        %v2569 = vmul.u32 %v2564, %v2565
        %v2570 = vmul.u32 %v2564, %v2566
        %v2571 = vshll.u32 %v2568, 16
        %v2572 = vshrl.u32 %v2568, 16
        %v2573 = vshll.u32 %v2569, 16
        %v2574 = vshrl.u32 %v2569, 16
        %vm2575 = vc.u32 %v2567, %v2571
        %v2576 = vsel %vm2575, 1, 0
        %v2577 = vadd.s32 %v2567, %v2571
        %v2578 = vadd.s32 %v2570, %v2576
        %vm2579 = vc.u32 %v2577, %v2573
        %v2580 = vsel %vm2579, 1, 0
        %v2581 = vadd.s32 %v2577, %v2573
        %v2582 = vadd.s32 %v2578, %v2580
        %v2583 = vadd.s32 %v2582, %v2572
        %v2584 = vadd.s32 %v2583, %v2574
        %v2585 = vand.u32 %v2562, 65535
        %v2586 = vshrl.u32 %v2562, 16
        %v2587 = vand.u32 %v2557, 65535
        %v2588 = vshrl.u32 %v2557, 16
        %v2589 = vmul.u32 %v2585, %v2587
        %v2590 = vmul.u32 %v2585, %v2588
        %v2591 = vmul.u32 %v2586, %v2587
        %v2592 = vmul.u32 %v2586, %v2588
        %v2593 = vshll.u32 %v2590, 16
        %v2594 = vshrl.u32 %v2590, 16
        %v2595 = vshll.u32 %v2591, 16
        %v2596 = vshrl.u32 %v2591, 16
        %vm2597 = vc.u32 %v2589, %v2593
        %v2598 = vsel %vm2597, 1, 0
        %v2599 = vadd.s32 %v2589, %v2593
        %v2600 = vadd.s32 %v2592, %v2598
        %vm2601 = vc.u32 %v2599, %v2595
        %v2602 = vsel %vm2601, 1, 0
        %v2603 = vadd.s32 %v2599, %v2595
        %v2604 = vadd.s32 %v2600, %v2602
        %v2605 = vadd.s32 %v2604, %v2594
        %v2606 = vadd.s32 %v2605, %v2596
        %v2607 = vmul.u32 %v2562, %v2553
        %v2608 = vadd.s32 %v2584, %v2603
        %vm2609 = vc.u32 %v2584, %v2603
        %v2610 = vadd.s32 %v2606, 1
        %v2611 = vsel %vm2609, %v2610, %v2606
        %v2612 = vadd.s32 %v2607, %v2611
        %v2613 = vadd.s32 %v2612, 536870912
        %v2614 = vshrl.u32 %v2613, 30
        %v2615 = vshll.u32 %v2614, 30
        %v2616 = vsub.s32 %v2612, %v2615
        %vm2617 = vcmp.lt.s32.totalorder %v2616, 0
        %v2618 = vsub.s32 0, %v2616
        %v2619 = vsel %vm2617, %v2618, %v2616
        %v2620 = vclz %v2619
        %v2621 = vsub.s32 %v2620, 2
        %vm2622 = vcmp.gt.s32.totalorder 0, %v2621
        %v2623 = vsel %vm2622, 0, %v2621
        %v2624 = vsub.s32 32, %v2623
        %v2625 = vshll.u32 %v2616, %v2623
        %v2626 = vshrl.u32 %v2608, %v2624
        %v2627 = vor.u32 %v2625, %v2626
        %v2628 = vsub.s32 4294967266, %v2623
        %v2629 = vadd.s32 %v2628, 127
        %v2630 = vshll.u32 %v2629, 23
        %v2631 = vor.u32 4788187, %v2630
        %v2632 = vand.u32 2147483647, %v2631
        %v2634 = vcvt.s32.f32 %v2627
        %v2635 = vmul.f32 %v2634, %v2632
        %v2636 = vxor.u32 %v2635, 2147483648
        %v2637 = vsel %vm2516, %v2636, %v2635
        %v2638 = vsub.s32 4, %v2614
        %v2639 = vsel %vm2516, %v2638, %v2614
        %v2640 = vsel %vm2515, %v326, %v2637
        %v2641 = vsel %vm2515, 0, %v2639
        %v2642 = vmul.f32 %v2640, %v2640
        %v2643 = vmul.f32 %v2642, -0.001358992
        %v2644 = vadd.f32 %v2643, 0.041655596
        %v2645 = vmul.f32 %v2642, %v2644
        %v2646 = vadd.f32 %v2645, -0.4999988
        %v2647 = vmul.f32 %v2642, %v2646
        %v2648 = vadd.f32 1.0, %v2647
        %v2649 = vmul.f32 %v2640, %v2640
        %v2650 = vmul.f32 %v2649, -0.00019511016
        %v2651 = vadd.f32 %v2650, 0.008332121
        %v2652 = vmul.f32 %v2649, %v2651
        %v2653 = vadd.f32 %v2652, -0.16666654
        %v2654 = vmul.f32 %v2649, %v2653
        %v2655 = vadd.f32 %v2654, 1.0
        %v2656 = vmul.f32 %v2655, %v2640
        %vm2657 = vweird.f32 %v326
        %v2658 = vadd.s32 %v2641, 3
        %v2659 = vand.u32 %v2658, 3
        %vm2660 = vcmp.lt.s32.totalorder %v2659, 2
        %vm2661 = vcmp.eq.s32.totalorder %v2659, 0
        %v2662 = vxor.u32 %v2656, 2147483648
        %v2663 = vsel %vm2661, %v2648, %v2662
        %vm2664 = vcmp.eq.s32.totalorder %v2659, 2
        %v2665 = vxor.u32 %v2648, 2147483648
        %v2666 = vsel %vm2664, %v2665, %v2656
        %v2667 = vsel %vm2660, %v2663, %v2666
        %v2668 = vsel %vm2657, nan, %v2667
        %v2669 = vand.u32 2147483647, %v327
        %vm2670 = vcmp.le.f32.partialorder %v2669, 0.7853982
        %vm2671 = vcmp.lt.s32.totalorder %v327, 0
        %v2672 = vand.u32 %v327, 2139095040
        %v2673 = vshrl.u32 %v2672, 23
        %v2674 = vsub.s32 %v2673, 127
        %v2675 = vand.u32 2147483647, %v327
        %v2676 = vand.u32 %v2675, 8388607
        %v2677 = vor.u32 %v2676, 8388608
        %v2678 = vsub.s32 0, %v2677
        %v2679 = vadd.s32 %v2674, 1
        %vm2680 = vcmp.gt.s32.totalorder %v2679, 0
        %v2681 = vsel %vm2680, %v2679, 0
        %v2682 = vshrl.u32 %v2681, 5
        %v2683 = vand.u32 %v2681, 31
        %v2684 = vsub.s32 32, %v2683
        %v2685 = vshrl.u32 683565275, %v2684
        %v2686 = vshll.u32 683565275, %v2683
        %v2687 = vshrl.u32 2475754826, %v2684
        %v2688 = vor.u32 %v2686, %v2687
        %v2689 = vshll.u32 2475754826, %v2683
        %v2690 = vshrl.u32 2131351028, %v2684
        %v2691 = vor.u32 %v2689, %v2690
        %v2692 = vshll.u32 2131351028, %v2683
        %v2693 = vshrl.u32 2102212464, %v2684
        %v2694 = vor.u32 %v2692, %v2693
        %v2695 = vshll.u32 2102212464, %v2683
        %v2696 = vshrl.u32 920167782, %v2684
        %v2697 = vor.u32 %v2695, %v2696
        %v2698 = vshll.u32 920167782, %v2683
        %v2699 = vshrl.u32 1326507024, %v2684
        %v2700 = vor.u32 %v2698, %v2699
        %vm2701 = vcmp.lt.s32.totalorder %v2682, 1
        %vm2702 = vcmp.lt.s32.totalorder %v2682, 2
        %vm2703 = vcmp.lt.s32.totalorder %v2682, 3
        %vm2704 = vcmp.lt.s32.totalorder %v2682, 4
        %v2705 = vsel %vm2701, %v2685, %v2688
        %v2706 = vsel %vm2704, %v2694, 2102212464
        %v2707 = vsel %vm2703, %v2691, %v2706
        %v2708 = vsel %vm2702, %v2705, %v2707
        %v2709 = vsel %vm2701, %v2688, %v2691
        %v2710 = vsel %vm2704, %v2697, 920167782
        %v2711 = vsel %vm2703, %v2694, %v2710
        %v2712 = vsel %vm2702, %v2709, %v2711
        %v2713 = vsel %vm2701, %v2691, %v2694
        %v2714 = vsel %vm2704, %v2700, 1326507024
        %v2715 = vsel %vm2703, %v2697, %v2714
        %v2716 = vsel %vm2702, %v2713, %v2715
        %v2717 = vshll.u32 %v2677, 8
        %v2718 = vand.u32 %v2717, 65535
        %v2719 = vshrl.u32 %v2717, 16
        %v2720 = vand.u32 %v2716, 65535
        %v2721 = vshrl.u32 %v2716, 16
        %v2722 = vmul.u32 %v2718, %v2720
        %v2723 = vmul.u32 %v2718, %v2721
        %v2724 = vmul.u32 %v2719, %v2720
        %v2725 = vmul.u32 %v2719, %v2721
        %v2726 = vshll.u32 %v2723, 16
        %v2727 = vshrl.u32 %v2723, 16
        %v2728 = vshll.u32 %v2724, 16
        %v2729 = vshrl.u32 %v2724, 16
        %vm2730 = vc.u32 %v2722, %v2726
        %v2731 = vsel %vm2730, 1, 0
        %v2732 = vadd.s32 %v2722, %v2726
        %v2733 = vadd.s32 %v2725, %v2731
        %vm2734 = vc.u32 %v2732, %v2728
        %v2735 = vsel %vm2734, 1, 0
        %v2736 = vadd.s32 %v2732, %v2728
        %v2737 = vadd.s32 %v2733, %v2735
        %v2738 = vadd.s32 %v2737, %v2727
        %v2739 = vadd.s32 %v2738, %v2729
        %v2740 = vand.u32 %v2717, 65535
        %v2741 = vshrl.u32 %v2717, 16
        %v2742 = vand.u32 %v2712, 65535
        %v2743 = vshrl.u32 %v2712, 16
        %v2744 = vmul.u32 %v2740, %v2742
        %v2745 = vmul.u32 %v2740, %v2743
        %v2746 = vmul.u32 %v2741, %v2742
        %v2747 = vmul.u32 %v2741, %v2743
        %v2748 = vshll.u32 %v2745, 16
        %v2749 = vshrl.u32 %v2745, 16
        %v2750 = vshll.u32 %v2746, 16
        %v2751 = vshrl.u32 %v2746, 16
        %vm2752 = vc.u32 %v2744, %v2748
        %v2753 = vsel %vm2752, 1, 0
        %v2754 = vadd.s32 %v2744, %v2748
        %v2755 = vadd.s32 %v2747, %v2753
        %vm2756 = vc.u32 %v2754, %v2750
        %v2757 = vsel %vm2756, 1, 0
        %v2758 = vadd.s32 %v2754, %v2750
        %v2759 = vadd.s32 %v2755, %v2757
        %v2760 = vadd.s32 %v2759, %v2749
        %v2761 = vadd.s32 %v2760, %v2751
        %v2762 = vmul.u32 %v2717, %v2708
        %v2763 = vadd.s32 %v2739, %v2758
        %vm2764 = vc.u32 %v2739, %v2758
        %v2765 = vadd.s32 %v2761, 1
        %v2766 = vsel %vm2764, %v2765, %v2761
        %v2767 = vadd.s32 %v2762, %v2766
        %v2768 = vadd.s32 %v2767, 536870912
        %v2769 = vshrl.u32 %v2768, 30
        %v2770 = vshll.u32 %v2769, 30
        %v2771 = vsub.s32 %v2767, %v2770
        %vm2772 = vcmp.lt.s32.totalorder %v2771, 0
        %v2773 = vsub.s32 0, %v2771
        %v2774 = vsel %vm2772, %v2773, %v2771
        %v2775 = vclz %v2774
        %v2776 = vsub.s32 %v2775, 2
        %vm2777 = vcmp.gt.s32.totalorder 0, %v2776
        %v2778 = vsel %vm2777, 0, %v2776
        %v2779 = vsub.s32 32, %v2778
        %v2780 = vshll.u32 %v2771, %v2778
        %v2781 = vshrl.u32 %v2763, %v2779
        %v2782 = vor.u32 %v2780, %v2781
        %v2783 = vsub.s32 4294967266, %v2778
        %v2784 = vadd.s32 %v2783, 127
        %v2785 = vshll.u32 %v2784, 23
        %v2786 = vor.u32 4788187, %v2785
        %v2787 = vand.u32 2147483647, %v2786
        %v2789 = vcvt.s32.f32 %v2782
        %v2790 = vmul.f32 %v2789, %v2787
        %v2791 = vxor.u32 %v2790, 2147483648
        %v2792 = vsel %vm2671, %v2791, %v2790
        %v2793 = vsub.s32 4, %v2769
        %v2794 = vsel %vm2671, %v2793, %v2769
        %v2795 = vsel %vm2670, %v327, %v2792
        %v2796 = vsel %vm2670, 0, %v2794
        %v2797 = vmul.f32 %v2795, %v2795
        %v2798 = vmul.f32 %v2797, -0.001358992
        %v2799 = vadd.f32 %v2798, 0.041655596
        %v2800 = vmul.f32 %v2797, %v2799
        %v2801 = vadd.f32 %v2800, -0.4999988
        %v2802 = vmul.f32 %v2797, %v2801
        %v2803 = vadd.f32 1.0, %v2802
        %v2804 = vmul.f32 %v2795, %v2795
        %v2805 = vmul.f32 %v2804, -0.00019511016
        %v2806 = vadd.f32 %v2805, 0.008332121
        %v2807 = vmul.f32 %v2804, %v2806
        %v2808 = vadd.f32 %v2807, -0.16666654
        %v2809 = vmul.f32 %v2804, %v2808
        %v2810 = vadd.f32 %v2809, 1.0
        %v2811 = vmul.f32 %v2810, %v2795
        %vm2812 = vweird.f32 %v327
        %v2813 = vadd.s32 %v2796, 3
        %v2814 = vand.u32 %v2813, 3
        %vm2815 = vcmp.lt.s32.totalorder %v2814, 2
        %vm2816 = vcmp.eq.s32.totalorder %v2814, 0
        %v2817 = vxor.u32 %v2811, 2147483648
        %v2818 = vsel %vm2816, %v2803, %v2817
        %vm2819 = vcmp.eq.s32.totalorder %v2814, 2
        %v2820 = vxor.u32 %v2803, 2147483648
        %v2821 = vsel %vm2819, %v2820, %v2811
        %v2822 = vsel %vm2815, %v2818, %v2821
        %v2823 = vsel %vm2812, nan, %v2822
        %v2824 = vand.u32 2147483647, %v328
        %vm2825 = vcmp.le.f32.partialorder %v2824, 0.7853982
        %vm2826 = vcmp.lt.s32.totalorder %v328, 0
        %v2827 = vand.u32 %v328, 2139095040
        %v2828 = vshrl.u32 %v2827, 23
        %v2829 = vsub.s32 %v2828, 127
        %v2830 = vand.u32 2147483647, %v328
        %v2831 = vand.u32 %v2830, 8388607
        %v2832 = vor.u32 %v2831, 8388608
        %v2833 = vsub.s32 0, %v2832
        %v2834 = vadd.s32 %v2829, 1
        %vm2835 = vcmp.gt.s32.totalorder %v2834, 0
        %v2836 = vsel %vm2835, %v2834, 0
        %v2837 = vshrl.u32 %v2836, 5
        %v2838 = vand.u32 %v2836, 31
        %v2839 = vsub.s32 32, %v2838
        %v2840 = vshrl.u32 683565275, %v2839
        %v2841 = vshll.u32 683565275, %v2838
        %v2842 = vshrl.u32 2475754826, %v2839
        %v2843 = vor.u32 %v2841, %v2842
        %v2844 = vshll.u32 2475754826, %v2838
        %v2845 = vshrl.u32 2131351028, %v2839
        %v2846 = vor.u32 %v2844, %v2845
        %v2847 = vshll.u32 2131351028, %v2838
        %v2848 = vshrl.u32 2102212464, %v2839
        %v2849 = vor.u32 %v2847, %v2848
        %v2850 = vshll.u32 2102212464, %v2838
        %v2851 = vshrl.u32 920167782, %v2839
        %v2852 = vor.u32 %v2850, %v2851
        %v2853 = vshll.u32 920167782, %v2838
        %v2854 = vshrl.u32 1326507024, %v2839
        %v2855 = vor.u32 %v2853, %v2854
        %vm2856 = vcmp.lt.s32.totalorder %v2837, 1
        %vm2857 = vcmp.lt.s32.totalorder %v2837, 2
        %vm2858 = vcmp.lt.s32.totalorder %v2837, 3
        %vm2859 = vcmp.lt.s32.totalorder %v2837, 4
        %v2860 = vsel %vm2856, %v2840, %v2843
        %v2861 = vsel %vm2859, %v2849, 2102212464
        %v2862 = vsel %vm2858, %v2846, %v2861
        %v2863 = vsel %vm2857, %v2860, %v2862
        %v2864 = vsel %vm2856, %v2843, %v2846
        %v2865 = vsel %vm2859, %v2852, 920167782
        %v2866 = vsel %vm2858, %v2849, %v2865
        %v2867 = vsel %vm2857, %v2864, %v2866
        %v2868 = vsel %vm2856, %v2846, %v2849
        %v2869 = vsel %vm2859, %v2855, 1326507024
        %v2870 = vsel %vm2858, %v2852, %v2869
        %v2871 = vsel %vm2857, %v2868, %v2870
        %v2872 = vshll.u32 %v2832, 8
        %v2873 = vand.u32 %v2872, 65535
        %v2874 = vshrl.u32 %v2872, 16
        %v2875 = vand.u32 %v2871, 65535
        %v2876 = vshrl.u32 %v2871, 16
        %v2877 = vmul.u32 %v2873, %v2875
        %v2878 = vmul.u32 %v2873, %v2876
        %v2879 = vmul.u32 %v2874, %v2875
        %v2880 = vmul.u32 %v2874, %v2876
        %v2881 = vshll.u32 %v2878, 16
        %v2882 = vshrl.u32 %v2878, 16
        %v2883 = vshll.u32 %v2879, 16
        %v2884 = vshrl.u32 %v2879, 16
        %vm2885 = vc.u32 %v2877, %v2881
        %v2886 = vsel %vm2885, 1, 0
        %v2887 = vadd.s32 %v2877, %v2881
        %v2888 = vadd.s32 %v2880, %v2886
        %vm2889 = vc.u32 %v2887, %v2883
        %v2890 = vsel %vm2889, 1, 0
        %v2891 = vadd.s32 %v2887, %v2883
        %v2892 = vadd.s32 %v2888, %v2890
        %v2893 = vadd.s32 %v2892, %v2882
        %v2894 = vadd.s32 %v2893, %v2884
        %v2895 = vand.u32 %v2872, 65535
        %v2896 = vshrl.u32 %v2872, 16
        %v2897 = vand.u32 %v2867, 65535
        %v2898 = vshrl.u32 %v2867, 16
        %v2899 = vmul.u32 %v2895, %v2897
        %v2900 = vmul.u32 %v2895, %v2898
        %v2901 = vmul.u32 %v2896, %v2897
        %v2902 = vmul.u32 %v2896, %v2898
        %v2903 = vshll.u32 %v2900, 16
        %v2904 = vshrl.u32 %v2900, 16
        %v2905 = vshll.u32 %v2901, 16
        %v2906 = vshrl.u32 %v2901, 16
        %vm2907 = vc.u32 %v2899, %v2903
        %v2908 = vsel %vm2907, 1, 0
        %v2909 = vadd.s32 %v2899, %v2903
        %v2910 = vadd.s32 %v2902, %v2908
        %vm2911 = vc.u32 %v2909, %v2905
        %v2912 = vsel %vm2911, 1, 0
        %v2913 = vadd.s32 %v2909, %v2905
        %v2914 = vadd.s32 %v2910, %v2912
        %v2915 = vadd.s32 %v2914, %v2904
        %v2916 = vadd.s32 %v2915, %v2906
        %v2917 = vmul.u32 %v2872, %v2863
        %v2918 = vadd.s32 %v2894, %v2913
        %vm2919 = vc.u32 %v2894, %v2913
        %v2920 = vadd.s32 %v2916, 1
        %v2921 = vsel %vm2919, %v2920, %v2916
        %v2922 = vadd.s32 %v2917, %v2921
        %v2923 = vadd.s32 %v2922, 536870912
        %v2924 = vshrl.u32 %v2923, 30
        %v2925 = vshll.u32 %v2924, 30
        %v2926 = vsub.s32 %v2922, %v2925
        %vm2927 = vcmp.lt.s32.totalorder %v2926, 0
        %v2928 = vsub.s32 0, %v2926
        %v2929 = vsel %vm2927, %v2928, %v2926
        %v2930 = vclz %v2929
        %v2931 = vsub.s32 %v2930, 2
        %vm2932 = vcmp.gt.s32.totalorder 0, %v2931
        %v2933 = vsel %vm2932, 0, %v2931
        %v2934 = vsub.s32 32, %v2933
        %v2935 = vshll.u32 %v2926, %v2933
        %v2936 = vshrl.u32 %v2918, %v2934
        %v2937 = vor.u32 %v2935, %v2936
        %v2938 = vsub.s32 4294967266, %v2933
        %v2939 = vadd.s32 %v2938, 127
        %v2940 = vshll.u32 %v2939, 23
        %v2941 = vor.u32 4788187, %v2940
        %v2942 = vand.u32 2147483647, %v2941
        %v2944 = vcvt.s32.f32 %v2937
        %v2945 = vmul.f32 %v2944, %v2942
        %v2946 = vxor.u32 %v2945, 2147483648
        %v2947 = vsel %vm2826, %v2946, %v2945
        %v2948 = vsub.s32 4, %v2924
        %v2949 = vsel %vm2826, %v2948, %v2924
        %v2950 = vsel %vm2825, %v328, %v2947
        %v2951 = vsel %vm2825, 0, %v2949
        %v2952 = vmul.f32 %v2950, %v2950
        %v2953 = vmul.f32 %v2952, -0.001358992
        %v2954 = vadd.f32 %v2953, 0.041655596
        %v2955 = vmul.f32 %v2952, %v2954
        %v2956 = vadd.f32 %v2955, -0.4999988
        %v2957 = vmul.f32 %v2952, %v2956
        %v2958 = vadd.f32 1.0, %v2957
        %v2959 = vmul.f32 %v2950, %v2950
        %v2960 = vmul.f32 %v2959, -0.00019511016
        %v2961 = vadd.f32 %v2960, 0.008332121
        %v2962 = vmul.f32 %v2959, %v2961
        %v2963 = vadd.f32 %v2962, -0.16666654
        %v2964 = vmul.f32 %v2959, %v2963
        %v2965 = vadd.f32 %v2964, 1.0
        %v2966 = vmul.f32 %v2965, %v2950
        %vm2967 = vweird.f32 %v328
        %v2968 = vadd.s32 %v2951, 3
        %v2969 = vand.u32 %v2968, 3
        %vm2970 = vcmp.lt.s32.totalorder %v2969, 2
        %vm2971 = vcmp.eq.s32.totalorder %v2969, 0
        %v2972 = vxor.u32 %v2966, 2147483648
        %v2973 = vsel %vm2971, %v2958, %v2972
        %vm2974 = vcmp.eq.s32.totalorder %v2969, 2
        %v2975 = vxor.u32 %v2958, 2147483648
        %v2976 = vsel %vm2974, %v2975, %v2966
        %v2977 = vsel %vm2970, %v2973, %v2976
        %v2978 = vsel %vm2967, nan, %v2977
        %v2979 = vand.u32 2147483647, %v329
        %vm2980 = vcmp.le.f32.partialorder %v2979, 0.7853982
        %vm2981 = vcmp.lt.s32.totalorder %v329, 0
        %v2982 = vand.u32 %v329, 2139095040
        %v2983 = vshrl.u32 %v2982, 23
        %v2984 = vsub.s32 %v2983, 127
        %v2985 = vand.u32 2147483647, %v329
        %v2986 = vand.u32 %v2985, 8388607
        %v2987 = vor.u32 %v2986, 8388608
        %v2988 = vsub.s32 0, %v2987
        %v2989 = vadd.s32 %v2984, 1
        %vm2990 = vcmp.gt.s32.totalorder %v2989, 0
        %v2991 = vsel %vm2990, %v2989, 0
        %v2992 = vshrl.u32 %v2991, 5
        %v2993 = vand.u32 %v2991, 31
        %v2994 = vsub.s32 32, %v2993
        %v2995 = vshrl.u32 683565275, %v2994
        %v2996 = vshll.u32 683565275, %v2993
        %v2997 = vshrl.u32 2475754826, %v2994
        %v2998 = vor.u32 %v2996, %v2997
        %v2999 = vshll.u32 2475754826, %v2993
        %v3000 = vshrl.u32 2131351028, %v2994
        %v3001 = vor.u32 %v2999, %v3000
        %v3002 = vshll.u32 2131351028, %v2993
        %v3003 = vshrl.u32 2102212464, %v2994
        %v3004 = vor.u32 %v3002, %v3003
        %v3005 = vshll.u32 2102212464, %v2993
        %v3006 = vshrl.u32 920167782, %v2994
        %v3007 = vor.u32 %v3005, %v3006
        %v3008 = vshll.u32 920167782, %v2993
        %v3009 = vshrl.u32 1326507024, %v2994
        %v3010 = vor.u32 %v3008, %v3009
        %vm3011 = vcmp.lt.s32.totalorder %v2992, 1
        %vm3012 = vcmp.lt.s32.totalorder %v2992, 2
        %vm3013 = vcmp.lt.s32.totalorder %v2992, 3
        %vm3014 = vcmp.lt.s32.totalorder %v2992, 4
        %v3015 = vsel %vm3011, %v2995, %v2998
        %v3016 = vsel %vm3014, %v3004, 2102212464
        %v3017 = vsel %vm3013, %v3001, %v3016
        %v3018 = vsel %vm3012, %v3015, %v3017
        %v3019 = vsel %vm3011, %v2998, %v3001
        %v3020 = vsel %vm3014, %v3007, 920167782
        %v3021 = vsel %vm3013, %v3004, %v3020
        %v3022 = vsel %vm3012, %v3019, %v3021
        %v3023 = vsel %vm3011, %v3001, %v3004
        %v3024 = vsel %vm3014, %v3010, 1326507024
        %v3025 = vsel %vm3013, %v3007, %v3024
        %v3026 = vsel %vm3012, %v3023, %v3025
        %v3027 = vshll.u32 %v2987, 8
        %v3028 = vand.u32 %v3027, 65535
        %v3029 = vshrl.u32 %v3027, 16
        %v3030 = vand.u32 %v3026, 65535
        %v3031 = vshrl.u32 %v3026, 16
        %v3032 = vmul.u32 %v3028, %v3030
        %v3033 = vmul.u32 %v3028, %v3031
        %v3034 = vmul.u32 %v3029, %v3030
        %v3035 = vmul.u32 %v3029, %v3031
        %v3036 = vshll.u32 %v3033, 16
        %v3037 = vshrl.u32 %v3033, 16
        %v3038 = vshll.u32 %v3034, 16
        %v3039 = vshrl.u32 %v3034, 16
        %vm3040 = vc.u32 %v3032, %v3036
        %v3041 = vsel %vm3040, 1, 0
        %v3042 = vadd.s32 %v3032, %v3036
        %v3043 = vadd.s32 %v3035, %v3041
        %vm3044 = vc.u32 %v3042, %v3038
        %v3045 = vsel %vm3044, 1, 0
        %v3046 = vadd.s32 %v3042, %v3038
        %v3047 = vadd.s32 %v3043, %v3045
        %v3048 = vadd.s32 %v3047, %v3037
        %v3049 = vadd.s32 %v3048, %v3039
        %v3050 = vand.u32 %v3027, 65535
        %v3051 = vshrl.u32 %v3027, 16
        %v3052 = vand.u32 %v3022, 65535
        %v3053 = vshrl.u32 %v3022, 16
        %v3054 = vmul.u32 %v3050, %v3052
        %v3055 = vmul.u32 %v3050, %v3053
        %v3056 = vmul.u32 %v3051, %v3052
        %v3057 = vmul.u32 %v3051, %v3053
        %v3058 = vshll.u32 %v3055, 16
        %v3059 = vshrl.u32 %v3055, 16
        %v3060 = vshll.u32 %v3056, 16
        %v3061 = vshrl.u32 %v3056, 16
        %vm3062 = vc.u32 %v3054, %v3058
        %v3063 = vsel %vm3062, 1, 0
        %v3064 = vadd.s32 %v3054, %v3058
        %v3065 = vadd.s32 %v3057, %v3063
        %vm3066 = vc.u32 %v3064, %v3060
        %v3067 = vsel %vm3066, 1, 0
        %v3068 = vadd.s32 %v3064, %v3060
        %v3069 = vadd.s32 %v3065, %v3067
        %v3070 = vadd.s32 %v3069, %v3059
        %v3071 = vadd.s32 %v3070, %v3061
        %v3072 = vmul.u32 %v3027, %v3018
        %v3073 = vadd.s32 %v3049, %v3068
        %vm3074 = vc.u32 %v3049, %v3068
        %v3075 = vadd.s32 %v3071, 1
        %v3076 = vsel %vm3074, %v3075, %v3071
        %v3077 = vadd.s32 %v3072, %v3076
        %v3078 = vadd.s32 %v3077, 536870912
        %v3079 = vshrl.u32 %v3078, 30
        %v3080 = vshll.u32 %v3079, 30
        %v3081 = vsub.s32 %v3077, %v3080
        %vm3082 = vcmp.lt.s32.totalorder %v3081, 0
        %v3083 = vsub.s32 0, %v3081
        %v3084 = vsel %vm3082, %v3083, %v3081
        %v3085 = vclz %v3084
        %v3086 = vsub.s32 %v3085, 2
        %vm3087 = vcmp.gt.s32.totalorder 0, %v3086
        %v3088 = vsel %vm3087, 0, %v3086
        %v3089 = vsub.s32 32, %v3088
        %v3090 = vshll.u32 %v3081, %v3088
        %v3091 = vshrl.u32 %v3073, %v3089
        %v3092 = vor.u32 %v3090, %v3091
        %v3093 = vsub.s32 4294967266, %v3088
        %v3094 = vadd.s32 %v3093, 127
        %v3095 = vshll.u32 %v3094, 23
        %v3096 = vor.u32 4788187, %v3095
        %v3097 = vand.u32 2147483647, %v3096
        %v3099 = vcvt.s32.f32 %v3092
        %v3100 = vmul.f32 %v3099, %v3097
        %v3101 = vxor.u32 %v3100, 2147483648
        %v3102 = vsel %vm2981, %v3101, %v3100
        %v3103 = vsub.s32 4, %v3079
        %v3104 = vsel %vm2981, %v3103, %v3079
        %v3105 = vsel %vm2980, %v329, %v3102
        %v3106 = vsel %vm2980, 0, %v3104
        %v3107 = vmul.f32 %v3105, %v3105
        %v3108 = vmul.f32 %v3107, -0.001358992
        %v3109 = vadd.f32 %v3108, 0.041655596
        %v3110 = vmul.f32 %v3107, %v3109
        %v3111 = vadd.f32 %v3110, -0.4999988
        %v3112 = vmul.f32 %v3107, %v3111
        %v3113 = vadd.f32 1.0, %v3112
        %v3114 = vmul.f32 %v3105, %v3105
        %v3115 = vmul.f32 %v3114, -0.00019511016
        %v3116 = vadd.f32 %v3115, 0.008332121
        %v3117 = vmul.f32 %v3114, %v3116
        %v3118 = vadd.f32 %v3117, -0.16666654
        %v3119 = vmul.f32 %v3114, %v3118
        %v3120 = vadd.f32 %v3119, 1.0
        %v3121 = vmul.f32 %v3120, %v3105
        %vm3122 = vweird.f32 %v329
        %v3123 = vadd.s32 %v3106, 3
        %v3124 = vand.u32 %v3123, 3
        %vm3125 = vcmp.lt.s32.totalorder %v3124, 2
        %vm3126 = vcmp.eq.s32.totalorder %v3124, 0
        %v3127 = vxor.u32 %v3121, 2147483648
        %v3128 = vsel %vm3126, %v3113, %v3127
        %vm3129 = vcmp.eq.s32.totalorder %v3124, 2
        %v3130 = vxor.u32 %v3113, 2147483648
        %v3131 = vsel %vm3129, %v3130, %v3121
        %v3132 = vsel %vm3125, %v3128, %v3131
        %v3133 = vsel %vm3122, nan, %v3132
        %v3134 = vand.u32 2147483647, %v330
        %vm3135 = vcmp.le.f32.partialorder %v3134, 0.7853982
        %vm3136 = vcmp.lt.s32.totalorder %v330, 0
        %v3137 = vand.u32 %v330, 2139095040
        %v3138 = vshrl.u32 %v3137, 23
        %v3139 = vsub.s32 %v3138, 127
        %v3140 = vand.u32 2147483647, %v330
        %v3141 = vand.u32 %v3140, 8388607
        %v3142 = vor.u32 %v3141, 8388608
        %v3143 = vsub.s32 0, %v3142
        %v3144 = vadd.s32 %v3139, 1
        %vm3145 = vcmp.gt.s32.totalorder %v3144, 0
        %v3146 = vsel %vm3145, %v3144, 0
        %v3147 = vshrl.u32 %v3146, 5
        %v3148 = vand.u32 %v3146, 31
        %v3149 = vsub.s32 32, %v3148
        %v3150 = vshrl.u32 683565275, %v3149
        %v3151 = vshll.u32 683565275, %v3148
        %v3152 = vshrl.u32 2475754826, %v3149
        %v3153 = vor.u32 %v3151, %v3152
        %v3154 = vshll.u32 2475754826, %v3148
        %v3155 = vshrl.u32 2131351028, %v3149
        %v3156 = vor.u32 %v3154, %v3155
        %v3157 = vshll.u32 2131351028, %v3148
        %v3158 = vshrl.u32 2102212464, %v3149
        %v3159 = vor.u32 %v3157, %v3158
        %v3160 = vshll.u32 2102212464, %v3148
        %v3161 = vshrl.u32 920167782, %v3149
        %v3162 = vor.u32 %v3160, %v3161
        %v3163 = vshll.u32 920167782, %v3148
        %v3164 = vshrl.u32 1326507024, %v3149
        %v3165 = vor.u32 %v3163, %v3164
        %vm3166 = vcmp.lt.s32.totalorder %v3147, 1
        %vm3167 = vcmp.lt.s32.totalorder %v3147, 2
        %vm3168 = vcmp.lt.s32.totalorder %v3147, 3
        %vm3169 = vcmp.lt.s32.totalorder %v3147, 4
        %v3170 = vsel %vm3166, %v3150, %v3153
        %v3171 = vsel %vm3169, %v3159, 2102212464
        %v3172 = vsel %vm3168, %v3156, %v3171
        %v3173 = vsel %vm3167, %v3170, %v3172
        %v3174 = vsel %vm3166, %v3153, %v3156
        %v3175 = vsel %vm3169, %v3162, 920167782
        %v3176 = vsel %vm3168, %v3159, %v3175
        %v3177 = vsel %vm3167, %v3174, %v3176
        %v3178 = vsel %vm3166, %v3156, %v3159
        %v3179 = vsel %vm3169, %v3165, 1326507024
        %v3180 = vsel %vm3168, %v3162, %v3179
        %v3181 = vsel %vm3167, %v3178, %v3180
        %v3182 = vshll.u32 %v3142, 8
        %v3183 = vand.u32 %v3182, 65535
        %v3184 = vshrl.u32 %v3182, 16
        %v3185 = vand.u32 %v3181, 65535
        %v3186 = vshrl.u32 %v3181, 16
        %v3187 = vmul.u32 %v3183, %v3185
        %v3188 = vmul.u32 %v3183, %v3186
        %v3189 = vmul.u32 %v3184, %v3185
        %v3190 = vmul.u32 %v3184, %v3186
        %v3191 = vshll.u32 %v3188, 16
        %v3192 = vshrl.u32 %v3188, 16
        %v3193 = vshll.u32 %v3189, 16
        %v3194 = vshrl.u32 %v3189, 16
        %vm3195 = vc.u32 %v3187, %v3191
        %v3196 = vsel %vm3195, 1, 0
        %v3197 = vadd.s32 %v3187, %v3191
        %v3198 = vadd.s32 %v3190, %v3196
        %vm3199 = vc.u32 %v3197, %v3193
        %v3200 = vsel %vm3199, 1, 0
        %v3201 = vadd.s32 %v3197, %v3193
        %v3202 = vadd.s32 %v3198, %v3200
        %v3203 = vadd.s32 %v3202, %v3192
        %v3204 = vadd.s32 %v3203, %v3194
        %v3205 = vand.u32 %v3182, 65535
        %v3206 = vshrl.u32 %v3182, 16
        %v3207 = vand.u32 %v3177, 65535
        %v3208 = vshrl.u32 %v3177, 16
        %v3209 = vmul.u32 %v3205, %v3207
        %v3210 = vmul.u32 %v3205, %v3208
        %v3211 = vmul.u32 %v3206, %v3207
        %v3212 = vmul.u32 %v3206, %v3208
        %v3213 = vshll.u32 %v3210, 16
        %v3214 = vshrl.u32 %v3210, 16
        %v3215 = vshll.u32 %v3211, 16
        %v3216 = vshrl.u32 %v3211, 16
        %vm3217 = vc.u32 %v3209, %v3213
        %v3218 = vsel %vm3217, 1, 0
        %v3219 = vadd.s32 %v3209, %v3213
        %v3220 = vadd.s32 %v3212, %v3218
        %vm3221 = vc.u32 %v3219, %v3215
        %v3222 = vsel %vm3221, 1, 0
        %v3223 = vadd.s32 %v3219, %v3215
        %v3224 = vadd.s32 %v3220, %v3222
        %v3225 = vadd.s32 %v3224, %v3214
        %v3226 = vadd.s32 %v3225, %v3216
        %v3227 = vmul.u32 %v3182, %v3173
        %v3228 = vadd.s32 %v3204, %v3223
        %vm3229 = vc.u32 %v3204, %v3223
        %v3230 = vadd.s32 %v3226, 1
        %v3231 = vsel %vm3229, %v3230, %v3226
        %v3232 = vadd.s32 %v3227, %v3231
        %v3233 = vadd.s32 %v3232, 536870912
        %v3234 = vshrl.u32 %v3233, 30
        %v3235 = vshll.u32 %v3234, 30
        %v3236 = vsub.s32 %v3232, %v3235
        %vm3237 = vcmp.lt.s32.totalorder %v3236, 0
        %v3238 = vsub.s32 0, %v3236
        %v3239 = vsel %vm3237, %v3238, %v3236
        %v3240 = vclz %v3239
        %v3241 = vsub.s32 %v3240, 2
        %vm3242 = vcmp.gt.s32.totalorder 0, %v3241
        %v3243 = vsel %vm3242, 0, %v3241
        %v3244 = vsub.s32 32, %v3243
        %v3245 = vshll.u32 %v3236, %v3243
        %v3246 = vshrl.u32 %v3228, %v3244
        %v3247 = vor.u32 %v3245, %v3246
        %v3248 = vsub.s32 4294967266, %v3243
        %v3249 = vadd.s32 %v3248, 127
        %v3250 = vshll.u32 %v3249, 23
        %v3251 = vor.u32 4788187, %v3250
        %v3252 = vand.u32 2147483647, %v3251
        %v3254 = vcvt.s32.f32 %v3247
        %v3255 = vmul.f32 %v3254, %v3252
        %v3256 = vxor.u32 %v3255, 2147483648
        %v3257 = vsel %vm3136, %v3256, %v3255
        %v3258 = vsub.s32 4, %v3234
        %v3259 = vsel %vm3136, %v3258, %v3234
        %v3260 = vsel %vm3135, %v330, %v3257
        %v3261 = vsel %vm3135, 0, %v3259
        %v3262 = vmul.f32 %v3260, %v3260
        %v3263 = vmul.f32 %v3262, -0.001358992
        %v3264 = vadd.f32 %v3263, 0.041655596
        %v3265 = vmul.f32 %v3262, %v3264
        %v3266 = vadd.f32 %v3265, -0.4999988
        %v3267 = vmul.f32 %v3262, %v3266
        %v3268 = vadd.f32 1.0, %v3267
        %v3269 = vmul.f32 %v3260, %v3260
        %v3270 = vmul.f32 %v3269, -0.00019511016
        %v3271 = vadd.f32 %v3270, 0.008332121
        %v3272 = vmul.f32 %v3269, %v3271
        %v3273 = vadd.f32 %v3272, -0.16666654
        %v3274 = vmul.f32 %v3269, %v3273
        %v3275 = vadd.f32 %v3274, 1.0
        %v3276 = vmul.f32 %v3275, %v3260
        %vm3277 = vweird.f32 %v330
        %v3278 = vadd.s32 %v3261, 3
        %v3279 = vand.u32 %v3278, 3
        %vm3280 = vcmp.lt.s32.totalorder %v3279, 2
        %vm3281 = vcmp.eq.s32.totalorder %v3279, 0
        %v3282 = vxor.u32 %v3276, 2147483648
        %v3283 = vsel %vm3281, %v3268, %v3282
        %vm3284 = vcmp.eq.s32.totalorder %v3279, 2
        %v3285 = vxor.u32 %v3268, 2147483648
        %v3286 = vsel %vm3284, %v3285, %v3276
        %v3287 = vsel %vm3280, %v3283, %v3286
        %v3288 = vsel %vm3277, nan, %v3287
        %v3289 = vand.u32 2147483647, %v331
        %vm3290 = vcmp.le.f32.partialorder %v3289, 0.7853982
        %vm3291 = vcmp.lt.s32.totalorder %v331, 0
        %v3292 = vand.u32 %v331, 2139095040
        %v3293 = vshrl.u32 %v3292, 23
        %v3294 = vsub.s32 %v3293, 127
        %v3295 = vand.u32 2147483647, %v331
        %v3296 = vand.u32 %v3295, 8388607
        %v3297 = vor.u32 %v3296, 8388608
        %v3298 = vsub.s32 0, %v3297
        %v3299 = vadd.s32 %v3294, 1
        %vm3300 = vcmp.gt.s32.totalorder %v3299, 0
        %v3301 = vsel %vm3300, %v3299, 0
        %v3302 = vshrl.u32 %v3301, 5
        %v3303 = vand.u32 %v3301, 31
        %v3304 = vsub.s32 32, %v3303
        %v3305 = vshrl.u32 683565275, %v3304
        %v3306 = vshll.u32 683565275, %v3303
        %v3307 = vshrl.u32 2475754826, %v3304
        %v3308 = vor.u32 %v3306, %v3307
        %v3309 = vshll.u32 2475754826, %v3303
        %v3310 = vshrl.u32 2131351028, %v3304
        %v3311 = vor.u32 %v3309, %v3310
        %v3312 = vshll.u32 2131351028, %v3303
        %v3313 = vshrl.u32 2102212464, %v3304
        %v3314 = vor.u32 %v3312, %v3313
        %v3315 = vshll.u32 2102212464, %v3303
        %v3316 = vshrl.u32 920167782, %v3304
        %v3317 = vor.u32 %v3315, %v3316
        %v3318 = vshll.u32 920167782, %v3303
        %v3319 = vshrl.u32 1326507024, %v3304
        %v3320 = vor.u32 %v3318, %v3319
        %vm3321 = vcmp.lt.s32.totalorder %v3302, 1
        %vm3322 = vcmp.lt.s32.totalorder %v3302, 2
        %vm3323 = vcmp.lt.s32.totalorder %v3302, 3
        %vm3324 = vcmp.lt.s32.totalorder %v3302, 4
        %v3325 = vsel %vm3321, %v3305, %v3308
        %v3326 = vsel %vm3324, %v3314, 2102212464
        %v3327 = vsel %vm3323, %v3311, %v3326
        %v3328 = vsel %vm3322, %v3325, %v3327
        %v3329 = vsel %vm3321, %v3308, %v3311
        %v3330 = vsel %vm3324, %v3317, 920167782
        %v3331 = vsel %vm3323, %v3314, %v3330
        %v3332 = vsel %vm3322, %v3329, %v3331
        %v3333 = vsel %vm3321, %v3311, %v3314
        %v3334 = vsel %vm3324, %v3320, 1326507024
        %v3335 = vsel %vm3323, %v3317, %v3334
        %v3336 = vsel %vm3322, %v3333, %v3335
        %v3337 = vshll.u32 %v3297, 8
        %v3338 = vand.u32 %v3337, 65535
        %v3339 = vshrl.u32 %v3337, 16
        %v3340 = vand.u32 %v3336, 65535
        %v3341 = vshrl.u32 %v3336, 16
        %v3342 = vmul.u32 %v3338, %v3340
        %v3343 = vmul.u32 %v3338, %v3341
        %v3344 = vmul.u32 %v3339, %v3340
        %v3345 = vmul.u32 %v3339, %v3341
        %v3346 = vshll.u32 %v3343, 16
        %v3347 = vshrl.u32 %v3343, 16
        %v3348 = vshll.u32 %v3344, 16
        %v3349 = vshrl.u32 %v3344, 16
        %vm3350 = vc.u32 %v3342, %v3346
        %v3351 = vsel %vm3350, 1, 0
        %v3352 = vadd.s32 %v3342, %v3346
        %v3353 = vadd.s32 %v3345, %v3351
        %vm3354 = vc.u32 %v3352, %v3348
        %v3355 = vsel %vm3354, 1, 0
        %v3356 = vadd.s32 %v3352, %v3348
        %v3357 = vadd.s32 %v3353, %v3355
        %v3358 = vadd.s32 %v3357, %v3347
        %v3359 = vadd.s32 %v3358, %v3349
        %v3360 = vand.u32 %v3337, 65535
        %v3361 = vshrl.u32 %v3337, 16
        %v3362 = vand.u32 %v3332, 65535
        %v3363 = vshrl.u32 %v3332, 16
        %v3364 = vmul.u32 %v3360, %v3362
        %v3365 = vmul.u32 %v3360, %v3363
        %v3366 = vmul.u32 %v3361, %v3362
        %v3367 = vmul.u32 %v3361, %v3363
        %v3368 = vshll.u32 %v3365, 16
        %v3369 = vshrl.u32 %v3365, 16
        %v3370 = vshll.u32 %v3366, 16
        %v3371 = vshrl.u32 %v3366, 16
        %vm3372 = vc.u32 %v3364, %v3368
        %v3373 = vsel %vm3372, 1, 0
        %v3374 = vadd.s32 %v3364, %v3368
        %v3375 = vadd.s32 %v3367, %v3373
        %vm3376 = vc.u32 %v3374, %v3370
        %v3377 = vsel %vm3376, 1, 0
        %v3378 = vadd.s32 %v3374, %v3370
        %v3379 = vadd.s32 %v3375, %v3377
        %v3380 = vadd.s32 %v3379, %v3369
        %v3381 = vadd.s32 %v3380, %v3371
        %v3382 = vmul.u32 %v3337, %v3328
        %v3383 = vadd.s32 %v3359, %v3378
        %vm3384 = vc.u32 %v3359, %v3378
        %v3385 = vadd.s32 %v3381, 1
        %v3386 = vsel %vm3384, %v3385, %v3381
        %v3387 = vadd.s32 %v3382, %v3386
        %v3388 = vadd.s32 %v3387, 536870912
        %v3389 = vshrl.u32 %v3388, 30
        %v3390 = vshll.u32 %v3389, 30
        %v3391 = vsub.s32 %v3387, %v3390
        %vm3392 = vcmp.lt.s32.totalorder %v3391, 0
        %v3393 = vsub.s32 0, %v3391
        %v3394 = vsel %vm3392, %v3393, %v3391
        %v3395 = vclz %v3394
        %v3396 = vsub.s32 %v3395, 2
        %vm3397 = vcmp.gt.s32.totalorder 0, %v3396
        %v3398 = vsel %vm3397, 0, %v3396
        %v3399 = vsub.s32 32, %v3398
        %v3400 = vshll.u32 %v3391, %v3398
        %v3401 = vshrl.u32 %v3383, %v3399
        %v3402 = vor.u32 %v3400, %v3401
        %v3403 = vsub.s32 4294967266, %v3398
        %v3404 = vadd.s32 %v3403, 127
        %v3405 = vshll.u32 %v3404, 23
        %v3406 = vor.u32 4788187, %v3405
        %v3407 = vand.u32 2147483647, %v3406
        %v3409 = vcvt.s32.f32 %v3402
        %v3410 = vmul.f32 %v3409, %v3407
        %v3411 = vxor.u32 %v3410, 2147483648
        %v3412 = vsel %vm3291, %v3411, %v3410
        %v3413 = vsub.s32 4, %v3389
        %v3414 = vsel %vm3291, %v3413, %v3389
        %v3415 = vsel %vm3290, %v331, %v3412
        %v3416 = vsel %vm3290, 0, %v3414
        %v3417 = vmul.f32 %v3415, %v3415
        %v3418 = vmul.f32 %v3417, -0.001358992
        %v3419 = vadd.f32 %v3418, 0.041655596
        %v3420 = vmul.f32 %v3417, %v3419
        %v3421 = vadd.f32 %v3420, -0.4999988
        %v3422 = vmul.f32 %v3417, %v3421
        %v3423 = vadd.f32 1.0, %v3422
        %v3424 = vmul.f32 %v3415, %v3415
        %v3425 = vmul.f32 %v3424, -0.00019511016
        %v3426 = vadd.f32 %v3425, 0.008332121
        %v3427 = vmul.f32 %v3424, %v3426
        %v3428 = vadd.f32 %v3427, -0.16666654
        %v3429 = vmul.f32 %v3424, %v3428
        %v3430 = vadd.f32 %v3429, 1.0
        %v3431 = vmul.f32 %v3430, %v3415
        %vm3432 = vweird.f32 %v331
        %v3433 = vadd.s32 %v3416, 3
        %v3434 = vand.u32 %v3433, 3
        %vm3435 = vcmp.lt.s32.totalorder %v3434, 2
        %vm3436 = vcmp.eq.s32.totalorder %v3434, 0
        %v3437 = vxor.u32 %v3431, 2147483648
        %v3438 = vsel %vm3436, %v3423, %v3437
        %vm3439 = vcmp.eq.s32.totalorder %v3434, 2
        %v3440 = vxor.u32 %v3423, 2147483648
        %v3441 = vsel %vm3439, %v3440, %v3431
        %v3442 = vsel %vm3435, %v3438, %v3441
        %v3443 = vsel %vm3432, nan, %v3442
        %v3444 = vand.u32 2147483647, %v332
        %vm3445 = vcmp.le.f32.partialorder %v3444, 0.7853982
        %vm3446 = vcmp.lt.s32.totalorder %v332, 0
        %v3447 = vand.u32 %v332, 2139095040
        %v3448 = vshrl.u32 %v3447, 23
        %v3449 = vsub.s32 %v3448, 127
        %v3450 = vand.u32 2147483647, %v332
        %v3451 = vand.u32 %v3450, 8388607
        %v3452 = vor.u32 %v3451, 8388608
        %v3453 = vsub.s32 0, %v3452
        %v3454 = vadd.s32 %v3449, 1
        %vm3455 = vcmp.gt.s32.totalorder %v3454, 0
        %v3456 = vsel %vm3455, %v3454, 0
        %v3457 = vshrl.u32 %v3456, 5
        %v3458 = vand.u32 %v3456, 31
        %v3459 = vsub.s32 32, %v3458
        %v3460 = vshrl.u32 683565275, %v3459
        %v3461 = vshll.u32 683565275, %v3458
        %v3462 = vshrl.u32 2475754826, %v3459
        %v3463 = vor.u32 %v3461, %v3462
        %v3464 = vshll.u32 2475754826, %v3458
        %v3465 = vshrl.u32 2131351028, %v3459
        %v3466 = vor.u32 %v3464, %v3465
        %v3467 = vshll.u32 2131351028, %v3458
        %v3468 = vshrl.u32 2102212464, %v3459
        %v3469 = vor.u32 %v3467, %v3468
        %v3470 = vshll.u32 2102212464, %v3458
        %v3471 = vshrl.u32 920167782, %v3459
        %v3472 = vor.u32 %v3470, %v3471
        %v3473 = vshll.u32 920167782, %v3458
        %v3474 = vshrl.u32 1326507024, %v3459
        %v3475 = vor.u32 %v3473, %v3474
        %vm3476 = vcmp.lt.s32.totalorder %v3457, 1
        %vm3477 = vcmp.lt.s32.totalorder %v3457, 2
        %vm3478 = vcmp.lt.s32.totalorder %v3457, 3
        %vm3479 = vcmp.lt.s32.totalorder %v3457, 4
        %v3480 = vsel %vm3476, %v3460, %v3463
        %v3481 = vsel %vm3479, %v3469, 2102212464
        %v3482 = vsel %vm3478, %v3466, %v3481
        %v3483 = vsel %vm3477, %v3480, %v3482
        %v3484 = vsel %vm3476, %v3463, %v3466
        %v3485 = vsel %vm3479, %v3472, 920167782
        %v3486 = vsel %vm3478, %v3469, %v3485
        %v3487 = vsel %vm3477, %v3484, %v3486
        %v3488 = vsel %vm3476, %v3466, %v3469
        %v3489 = vsel %vm3479, %v3475, 1326507024
        %v3490 = vsel %vm3478, %v3472, %v3489
        %v3491 = vsel %vm3477, %v3488, %v3490
        %v3492 = vshll.u32 %v3452, 8
        %v3493 = vand.u32 %v3492, 65535
        %v3494 = vshrl.u32 %v3492, 16
        %v3495 = vand.u32 %v3491, 65535
        %v3496 = vshrl.u32 %v3491, 16
        %v3497 = vmul.u32 %v3493, %v3495
        %v3498 = vmul.u32 %v3493, %v3496
        %v3499 = vmul.u32 %v3494, %v3495
        %v3500 = vmul.u32 %v3494, %v3496
        %v3501 = vshll.u32 %v3498, 16
        %v3502 = vshrl.u32 %v3498, 16
        %v3503 = vshll.u32 %v3499, 16
        %v3504 = vshrl.u32 %v3499, 16
        %vm3505 = vc.u32 %v3497, %v3501
        %v3506 = vsel %vm3505, 1, 0
        %v3507 = vadd.s32 %v3497, %v3501
        %v3508 = vadd.s32 %v3500, %v3506
        %vm3509 = vc.u32 %v3507, %v3503
        %v3510 = vsel %vm3509, 1, 0
        %v3511 = vadd.s32 %v3507, %v3503
        %v3512 = vadd.s32 %v3508, %v3510
        %v3513 = vadd.s32 %v3512, %v3502
        %v3514 = vadd.s32 %v3513, %v3504
        %v3515 = vand.u32 %v3492, 65535
        %v3516 = vshrl.u32 %v3492, 16
        %v3517 = vand.u32 %v3487, 65535
        %v3518 = vshrl.u32 %v3487, 16
        %v3519 = vmul.u32 %v3515, %v3517
        %v3520 = vmul.u32 %v3515, %v3518
        %v3521 = vmul.u32 %v3516, %v3517
        %v3522 = vmul.u32 %v3516, %v3518
        %v3523 = vshll.u32 %v3520, 16
        %v3524 = vshrl.u32 %v3520, 16
        %v3525 = vshll.u32 %v3521, 16
        %v3526 = vshrl.u32 %v3521, 16
        %vm3527 = vc.u32 %v3519, %v3523
        %v3528 = vsel %vm3527, 1, 0
        %v3529 = vadd.s32 %v3519, %v3523
        %v3530 = vadd.s32 %v3522, %v3528
        %vm3531 = vc.u32 %v3529, %v3525
        %v3532 = vsel %vm3531, 1, 0
        %v3533 = vadd.s32 %v3529, %v3525
        %v3534 = vadd.s32 %v3530, %v3532
        %v3535 = vadd.s32 %v3534, %v3524
        %v3536 = vadd.s32 %v3535, %v3526
        %v3537 = vmul.u32 %v3492, %v3483
        %v3538 = vadd.s32 %v3514, %v3533
        %vm3539 = vc.u32 %v3514, %v3533
        %v3540 = vadd.s32 %v3536, 1
        %v3541 = vsel %vm3539, %v3540, %v3536
        %v3542 = vadd.s32 %v3537, %v3541
        %v3543 = vadd.s32 %v3542, 536870912
        %v3544 = vshrl.u32 %v3543, 30
        %v3545 = vshll.u32 %v3544, 30
        %v3546 = vsub.s32 %v3542, %v3545
        %vm3547 = vcmp.lt.s32.totalorder %v3546, 0
        %v3548 = vsub.s32 0, %v3546
        %v3549 = vsel %vm3547, %v3548, %v3546
        %v3550 = vclz %v3549
        %v3551 = vsub.s32 %v3550, 2
        %vm3552 = vcmp.gt.s32.totalorder 0, %v3551
        %v3553 = vsel %vm3552, 0, %v3551
        %v3554 = vsub.s32 32, %v3553
        %v3555 = vshll.u32 %v3546, %v3553
        %v3556 = vshrl.u32 %v3538, %v3554
        %v3557 = vor.u32 %v3555, %v3556
        %v3558 = vsub.s32 4294967266, %v3553
        %v3559 = vadd.s32 %v3558, 127
        %v3560 = vshll.u32 %v3559, 23
        %v3561 = vor.u32 4788187, %v3560
        %v3562 = vand.u32 2147483647, %v3561
        %v3564 = vcvt.s32.f32 %v3557
        %v3565 = vmul.f32 %v3564, %v3562
        %v3566 = vxor.u32 %v3565, 2147483648
        %v3567 = vsel %vm3446, %v3566, %v3565
        %v3568 = vsub.s32 4, %v3544
        %v3569 = vsel %vm3446, %v3568, %v3544
        %v3570 = vsel %vm3445, %v332, %v3567
        %v3571 = vsel %vm3445, 0, %v3569
        %v3572 = vmul.f32 %v3570, %v3570
        %v3573 = vmul.f32 %v3572, -0.001358992
        %v3574 = vadd.f32 %v3573, 0.041655596
        %v3575 = vmul.f32 %v3572, %v3574
        %v3576 = vadd.f32 %v3575, -0.4999988
        %v3577 = vmul.f32 %v3572, %v3576
        %v3578 = vadd.f32 1.0, %v3577
        %v3579 = vmul.f32 %v3570, %v3570
        %v3580 = vmul.f32 %v3579, -0.00019511016
        %v3581 = vadd.f32 %v3580, 0.008332121
        %v3582 = vmul.f32 %v3579, %v3581
        %v3583 = vadd.f32 %v3582, -0.16666654
        %v3584 = vmul.f32 %v3579, %v3583
        %v3585 = vadd.f32 %v3584, 1.0
        %v3586 = vmul.f32 %v3585, %v3570
        %vm3587 = vweird.f32 %v332
        %v3588 = vadd.s32 %v3571, 3
        %v3589 = vand.u32 %v3588, 3
        %vm3590 = vcmp.lt.s32.totalorder %v3589, 2
        %vm3591 = vcmp.eq.s32.totalorder %v3589, 0
        %v3592 = vxor.u32 %v3586, 2147483648
        %v3593 = vsel %vm3591, %v3578, %v3592
        %vm3594 = vcmp.eq.s32.totalorder %v3589, 2
        %v3595 = vxor.u32 %v3578, 2147483648
        %v3596 = vsel %vm3594, %v3595, %v3586
        %v3597 = vsel %vm3590, %v3593, %v3596
        %v3598 = vsel %vm3587, nan, %v3597
        %v3599 = vand.u32 2147483647, %v333
        %vm3600 = vcmp.le.f32.partialorder %v3599, 0.7853982
        %vm3601 = vcmp.lt.s32.totalorder %v333, 0
        %v3602 = vand.u32 %v333, 2139095040
        %v3603 = vshrl.u32 %v3602, 23
        %v3604 = vsub.s32 %v3603, 127
        %v3605 = vand.u32 2147483647, %v333
        %v3606 = vand.u32 %v3605, 8388607
        %v3607 = vor.u32 %v3606, 8388608
        %v3608 = vsub.s32 0, %v3607
        %v3609 = vadd.s32 %v3604, 1
        %vm3610 = vcmp.gt.s32.totalorder %v3609, 0
        %v3611 = vsel %vm3610, %v3609, 0
        %v3612 = vshrl.u32 %v3611, 5
        %v3613 = vand.u32 %v3611, 31
        %v3614 = vsub.s32 32, %v3613
        %v3615 = vshrl.u32 683565275, %v3614
        %v3616 = vshll.u32 683565275, %v3613
        %v3617 = vshrl.u32 2475754826, %v3614
        %v3618 = vor.u32 %v3616, %v3617
        %v3619 = vshll.u32 2475754826, %v3613
        %v3620 = vshrl.u32 2131351028, %v3614
        %v3621 = vor.u32 %v3619, %v3620
        %v3622 = vshll.u32 2131351028, %v3613
        %v3623 = vshrl.u32 2102212464, %v3614
        %v3624 = vor.u32 %v3622, %v3623
        %v3625 = vshll.u32 2102212464, %v3613
        %v3626 = vshrl.u32 920167782, %v3614
        %v3627 = vor.u32 %v3625, %v3626
        %v3628 = vshll.u32 920167782, %v3613
        %v3629 = vshrl.u32 1326507024, %v3614
        %v3630 = vor.u32 %v3628, %v3629
        %vm3631 = vcmp.lt.s32.totalorder %v3612, 1
        %vm3632 = vcmp.lt.s32.totalorder %v3612, 2
        %vm3633 = vcmp.lt.s32.totalorder %v3612, 3
        %vm3634 = vcmp.lt.s32.totalorder %v3612, 4
        %v3635 = vsel %vm3631, %v3615, %v3618
        %v3636 = vsel %vm3634, %v3624, 2102212464
        %v3637 = vsel %vm3633, %v3621, %v3636
        %v3638 = vsel %vm3632, %v3635, %v3637
        %v3639 = vsel %vm3631, %v3618, %v3621
        %v3640 = vsel %vm3634, %v3627, 920167782
        %v3641 = vsel %vm3633, %v3624, %v3640
        %v3642 = vsel %vm3632, %v3639, %v3641
        %v3643 = vsel %vm3631, %v3621, %v3624
        %v3644 = vsel %vm3634, %v3630, 1326507024
        %v3645 = vsel %vm3633, %v3627, %v3644
        %v3646 = vsel %vm3632, %v3643, %v3645
        %v3647 = vshll.u32 %v3607, 8
        %v3648 = vand.u32 %v3647, 65535
        %v3649 = vshrl.u32 %v3647, 16
        %v3650 = vand.u32 %v3646, 65535
        %v3651 = vshrl.u32 %v3646, 16
        %v3652 = vmul.u32 %v3648, %v3650
        %v3653 = vmul.u32 %v3648, %v3651
        %v3654 = vmul.u32 %v3649, %v3650
        %v3655 = vmul.u32 %v3649, %v3651
        %v3656 = vshll.u32 %v3653, 16
        %v3657 = vshrl.u32 %v3653, 16
        %v3658 = vshll.u32 %v3654, 16
        %v3659 = vshrl.u32 %v3654, 16
        %vm3660 = vc.u32 %v3652, %v3656
        %v3661 = vsel %vm3660, 1, 0
        %v3662 = vadd.s32 %v3652, %v3656
        %v3663 = vadd.s32 %v3655, %v3661
        %vm3664 = vc.u32 %v3662, %v3658
        %v3665 = vsel %vm3664, 1, 0
        %v3666 = vadd.s32 %v3662, %v3658
        %v3667 = vadd.s32 %v3663, %v3665
        %v3668 = vadd.s32 %v3667, %v3657
        %v3669 = vadd.s32 %v3668, %v3659
        %v3670 = vand.u32 %v3647, 65535
        %v3671 = vshrl.u32 %v3647, 16
        %v3672 = vand.u32 %v3642, 65535
        %v3673 = vshrl.u32 %v3642, 16
        %v3674 = vmul.u32 %v3670, %v3672
        %v3675 = vmul.u32 %v3670, %v3673
        %v3676 = vmul.u32 %v3671, %v3672
        %v3677 = vmul.u32 %v3671, %v3673
        %v3678 = vshll.u32 %v3675, 16
        %v3679 = vshrl.u32 %v3675, 16
        %v3680 = vshll.u32 %v3676, 16
        %v3681 = vshrl.u32 %v3676, 16
        %vm3682 = vc.u32 %v3674, %v3678
        %v3683 = vsel %vm3682, 1, 0
        %v3684 = vadd.s32 %v3674, %v3678
        %v3685 = vadd.s32 %v3677, %v3683
        %vm3686 = vc.u32 %v3684, %v3680
        %v3687 = vsel %vm3686, 1, 0
        %v3688 = vadd.s32 %v3684, %v3680
        %v3689 = vadd.s32 %v3685, %v3687
        %v3690 = vadd.s32 %v3689, %v3679
        %v3691 = vadd.s32 %v3690, %v3681
        %v3692 = vmul.u32 %v3647, %v3638
        %v3693 = vadd.s32 %v3669, %v3688
        %vm3694 = vc.u32 %v3669, %v3688
        %v3695 = vadd.s32 %v3691, 1
        %v3696 = vsel %vm3694, %v3695, %v3691
        %v3697 = vadd.s32 %v3692, %v3696
        %v3698 = vadd.s32 %v3697, 536870912
        %v3699 = vshrl.u32 %v3698, 30
        %v3700 = vshll.u32 %v3699, 30
        %v3701 = vsub.s32 %v3697, %v3700
        %vm3702 = vcmp.lt.s32.totalorder %v3701, 0
        %v3703 = vsub.s32 0, %v3701
        %v3704 = vsel %vm3702, %v3703, %v3701
        %v3705 = vclz %v3704
        %v3706 = vsub.s32 %v3705, 2
        %vm3707 = vcmp.gt.s32.totalorder 0, %v3706
        %v3708 = vsel %vm3707, 0, %v3706
        %v3709 = vsub.s32 32, %v3708
        %v3710 = vshll.u32 %v3701, %v3708
        %v3711 = vshrl.u32 %v3693, %v3709
        %v3712 = vor.u32 %v3710, %v3711
        %v3713 = vsub.s32 4294967266, %v3708
        %v3714 = vadd.s32 %v3713, 127
        %v3715 = vshll.u32 %v3714, 23
        %v3716 = vor.u32 4788187, %v3715
        %v3717 = vand.u32 2147483647, %v3716
        %v3719 = vcvt.s32.f32 %v3712
        %v3720 = vmul.f32 %v3719, %v3717
        %v3721 = vxor.u32 %v3720, 2147483648
        %v3722 = vsel %vm3601, %v3721, %v3720
        %v3723 = vsub.s32 4, %v3699
        %v3724 = vsel %vm3601, %v3723, %v3699
        %v3725 = vsel %vm3600, %v333, %v3722
        %v3726 = vsel %vm3600, 0, %v3724
        %v3727 = vmul.f32 %v3725, %v3725
        %v3728 = vmul.f32 %v3727, -0.001358992
        %v3729 = vadd.f32 %v3728, 0.041655596
        %v3730 = vmul.f32 %v3727, %v3729
        %v3731 = vadd.f32 %v3730, -0.4999988
        %v3732 = vmul.f32 %v3727, %v3731
        %v3733 = vadd.f32 1.0, %v3732
        %v3734 = vmul.f32 %v3725, %v3725
        %v3735 = vmul.f32 %v3734, -0.00019511016
        %v3736 = vadd.f32 %v3735, 0.008332121
        %v3737 = vmul.f32 %v3734, %v3736
        %v3738 = vadd.f32 %v3737, -0.16666654
        %v3739 = vmul.f32 %v3734, %v3738
        %v3740 = vadd.f32 %v3739, 1.0
        %v3741 = vmul.f32 %v3740, %v3725
        %vm3742 = vweird.f32 %v333
        %v3743 = vadd.s32 %v3726, 3
        %v3744 = vand.u32 %v3743, 3
        %vm3745 = vcmp.lt.s32.totalorder %v3744, 2
        %vm3746 = vcmp.eq.s32.totalorder %v3744, 0
        %v3747 = vxor.u32 %v3741, 2147483648
        %v3748 = vsel %vm3746, %v3733, %v3747
        %vm3749 = vcmp.eq.s32.totalorder %v3744, 2
        %v3750 = vxor.u32 %v3733, 2147483648
        %v3751 = vsel %vm3749, %v3750, %v3741
        %v3752 = vsel %vm3745, %v3748, %v3751
        %v3753 = vsel %vm3742, nan, %v3752
        %v3754 = vand.u32 2147483647, %v334
        %vm3755 = vcmp.le.f32.partialorder %v3754, 0.7853982
        %vm3756 = vcmp.lt.s32.totalorder %v334, 0
        %v3757 = vand.u32 %v334, 2139095040
        %v3758 = vshrl.u32 %v3757, 23
        %v3759 = vsub.s32 %v3758, 127
        %v3760 = vand.u32 2147483647, %v334
        %v3761 = vand.u32 %v3760, 8388607
        %v3762 = vor.u32 %v3761, 8388608
        %v3763 = vsub.s32 0, %v3762
        %v3764 = vadd.s32 %v3759, 1
        %vm3765 = vcmp.gt.s32.totalorder %v3764, 0
        %v3766 = vsel %vm3765, %v3764, 0
        %v3767 = vshrl.u32 %v3766, 5
        %v3768 = vand.u32 %v3766, 31
        %v3769 = vsub.s32 32, %v3768
        %v3770 = vshrl.u32 683565275, %v3769
        %v3771 = vshll.u32 683565275, %v3768
        %v3772 = vshrl.u32 2475754826, %v3769
        %v3773 = vor.u32 %v3771, %v3772
        %v3774 = vshll.u32 2475754826, %v3768
        %v3775 = vshrl.u32 2131351028, %v3769
        %v3776 = vor.u32 %v3774, %v3775
        %v3777 = vshll.u32 2131351028, %v3768
        %v3778 = vshrl.u32 2102212464, %v3769
        %v3779 = vor.u32 %v3777, %v3778
        %v3780 = vshll.u32 2102212464, %v3768
        %v3781 = vshrl.u32 920167782, %v3769
        %v3782 = vor.u32 %v3780, %v3781
        %v3783 = vshll.u32 920167782, %v3768
        %v3784 = vshrl.u32 1326507024, %v3769
        %v3785 = vor.u32 %v3783, %v3784
        %vm3786 = vcmp.lt.s32.totalorder %v3767, 1
        %vm3787 = vcmp.lt.s32.totalorder %v3767, 2
        %vm3788 = vcmp.lt.s32.totalorder %v3767, 3
        %vm3789 = vcmp.lt.s32.totalorder %v3767, 4
        %v3790 = vsel %vm3786, %v3770, %v3773
        %v3791 = vsel %vm3789, %v3779, 2102212464
        %v3792 = vsel %vm3788, %v3776, %v3791
        %v3793 = vsel %vm3787, %v3790, %v3792
        %v3794 = vsel %vm3786, %v3773, %v3776
        %v3795 = vsel %vm3789, %v3782, 920167782
        %v3796 = vsel %vm3788, %v3779, %v3795
        %v3797 = vsel %vm3787, %v3794, %v3796
        %v3798 = vsel %vm3786, %v3776, %v3779
        %v3799 = vsel %vm3789, %v3785, 1326507024
        %v3800 = vsel %vm3788, %v3782, %v3799
        %v3801 = vsel %vm3787, %v3798, %v3800
        %v3802 = vshll.u32 %v3762, 8
        %v3803 = vand.u32 %v3802, 65535
        %v3804 = vshrl.u32 %v3802, 16
        %v3805 = vand.u32 %v3801, 65535
        %v3806 = vshrl.u32 %v3801, 16
        %v3807 = vmul.u32 %v3803, %v3805
        %v3808 = vmul.u32 %v3803, %v3806
        %v3809 = vmul.u32 %v3804, %v3805
        %v3810 = vmul.u32 %v3804, %v3806
        %v3811 = vshll.u32 %v3808, 16
        %v3812 = vshrl.u32 %v3808, 16
        %v3813 = vshll.u32 %v3809, 16
        %v3814 = vshrl.u32 %v3809, 16
        %vm3815 = vc.u32 %v3807, %v3811
        %v3816 = vsel %vm3815, 1, 0
        %v3817 = vadd.s32 %v3807, %v3811
        %v3818 = vadd.s32 %v3810, %v3816
        %vm3819 = vc.u32 %v3817, %v3813
        %v3820 = vsel %vm3819, 1, 0
        %v3821 = vadd.s32 %v3817, %v3813
        %v3822 = vadd.s32 %v3818, %v3820
        %v3823 = vadd.s32 %v3822, %v3812
        %v3824 = vadd.s32 %v3823, %v3814
        %v3825 = vand.u32 %v3802, 65535
        %v3826 = vshrl.u32 %v3802, 16
        %v3827 = vand.u32 %v3797, 65535
        %v3828 = vshrl.u32 %v3797, 16
        %v3829 = vmul.u32 %v3825, %v3827
        %v3830 = vmul.u32 %v3825, %v3828
        %v3831 = vmul.u32 %v3826, %v3827
        %v3832 = vmul.u32 %v3826, %v3828
        %v3833 = vshll.u32 %v3830, 16
        %v3834 = vshrl.u32 %v3830, 16
        %v3835 = vshll.u32 %v3831, 16
        %v3836 = vshrl.u32 %v3831, 16
        %vm3837 = vc.u32 %v3829, %v3833
        %v3838 = vsel %vm3837, 1, 0
        %v3839 = vadd.s32 %v3829, %v3833
        %v3840 = vadd.s32 %v3832, %v3838
        %vm3841 = vc.u32 %v3839, %v3835
        %v3842 = vsel %vm3841, 1, 0
        %v3843 = vadd.s32 %v3839, %v3835
        %v3844 = vadd.s32 %v3840, %v3842
        %v3845 = vadd.s32 %v3844, %v3834
        %v3846 = vadd.s32 %v3845, %v3836
        %v3847 = vmul.u32 %v3802, %v3793
        %v3848 = vadd.s32 %v3824, %v3843
        %vm3849 = vc.u32 %v3824, %v3843
        %v3850 = vadd.s32 %v3846, 1
        %v3851 = vsel %vm3849, %v3850, %v3846
        %v3852 = vadd.s32 %v3847, %v3851
        %v3853 = vadd.s32 %v3852, 536870912
        %v3854 = vshrl.u32 %v3853, 30
        %v3855 = vshll.u32 %v3854, 30
        %v3856 = vsub.s32 %v3852, %v3855
        %vm3857 = vcmp.lt.s32.totalorder %v3856, 0
        %v3858 = vsub.s32 0, %v3856
        %v3859 = vsel %vm3857, %v3858, %v3856
        %v3860 = vclz %v3859
        %v3861 = vsub.s32 %v3860, 2
        %vm3862 = vcmp.gt.s32.totalorder 0, %v3861
        %v3863 = vsel %vm3862, 0, %v3861
        %v3864 = vsub.s32 32, %v3863
        %v3865 = vshll.u32 %v3856, %v3863
        %v3866 = vshrl.u32 %v3848, %v3864
        %v3867 = vor.u32 %v3865, %v3866
        %v3868 = vsub.s32 4294967266, %v3863
        %v3869 = vadd.s32 %v3868, 127
        %v3870 = vshll.u32 %v3869, 23
        %v3871 = vor.u32 4788187, %v3870
        %v3872 = vand.u32 2147483647, %v3871
        %v3874 = vcvt.s32.f32 %v3867
        %v3875 = vmul.f32 %v3874, %v3872
        %v3876 = vxor.u32 %v3875, 2147483648
        %v3877 = vsel %vm3756, %v3876, %v3875
        %v3878 = vsub.s32 4, %v3854
        %v3879 = vsel %vm3756, %v3878, %v3854
        %v3880 = vsel %vm3755, %v334, %v3877
        %v3881 = vsel %vm3755, 0, %v3879
        %v3882 = vmul.f32 %v3880, %v3880
        %v3883 = vmul.f32 %v3882, -0.001358992
        %v3884 = vadd.f32 %v3883, 0.041655596
        %v3885 = vmul.f32 %v3882, %v3884
        %v3886 = vadd.f32 %v3885, -0.4999988
        %v3887 = vmul.f32 %v3882, %v3886
        %v3888 = vadd.f32 1.0, %v3887
        %v3889 = vmul.f32 %v3880, %v3880
        %v3890 = vmul.f32 %v3889, -0.00019511016
        %v3891 = vadd.f32 %v3890, 0.008332121
        %v3892 = vmul.f32 %v3889, %v3891
        %v3893 = vadd.f32 %v3892, -0.16666654
        %v3894 = vmul.f32 %v3889, %v3893
        %v3895 = vadd.f32 %v3894, 1.0
        %v3896 = vmul.f32 %v3895, %v3880
        %vm3897 = vweird.f32 %v334
        %v3898 = vadd.s32 %v3881, 3
        %v3899 = vand.u32 %v3898, 3
        %vm3900 = vcmp.lt.s32.totalorder %v3899, 2
        %vm3901 = vcmp.eq.s32.totalorder %v3899, 0
        %v3902 = vxor.u32 %v3896, 2147483648
        %v3903 = vsel %vm3901, %v3888, %v3902
        %vm3904 = vcmp.eq.s32.totalorder %v3899, 2
        %v3905 = vxor.u32 %v3888, 2147483648
        %v3906 = vsel %vm3904, %v3905, %v3896
        %v3907 = vsel %vm3900, %v3903, %v3906
        %v3908 = vsel %vm3897, nan, %v3907
        %v3909 = vand.u32 2147483647, %v335
        %vm3910 = vcmp.le.f32.partialorder %v3909, 0.7853982
        %vm3911 = vcmp.lt.s32.totalorder %v335, 0
        %v3912 = vand.u32 %v335, 2139095040
        %v3913 = vshrl.u32 %v3912, 23
        %v3914 = vsub.s32 %v3913, 127
        %v3915 = vand.u32 2147483647, %v335
        %v3916 = vand.u32 %v3915, 8388607
        %v3917 = vor.u32 %v3916, 8388608
        %v3918 = vsub.s32 0, %v3917
        %v3919 = vadd.s32 %v3914, 1
        %vm3920 = vcmp.gt.s32.totalorder %v3919, 0
        %v3921 = vsel %vm3920, %v3919, 0
        %v3922 = vshrl.u32 %v3921, 5
        %v3923 = vand.u32 %v3921, 31
        %v3924 = vsub.s32 32, %v3923
        %v3925 = vshrl.u32 683565275, %v3924
        %v3926 = vshll.u32 683565275, %v3923
        %v3927 = vshrl.u32 2475754826, %v3924
        %v3928 = vor.u32 %v3926, %v3927
        %v3929 = vshll.u32 2475754826, %v3923
        %v3930 = vshrl.u32 2131351028, %v3924
        %v3931 = vor.u32 %v3929, %v3930
        %v3932 = vshll.u32 2131351028, %v3923
        %v3933 = vshrl.u32 2102212464, %v3924
        %v3934 = vor.u32 %v3932, %v3933
        %v3935 = vshll.u32 2102212464, %v3923
        %v3936 = vshrl.u32 920167782, %v3924
        %v3937 = vor.u32 %v3935, %v3936
        %v3938 = vshll.u32 920167782, %v3923
        %v3939 = vshrl.u32 1326507024, %v3924
        %v3940 = vor.u32 %v3938, %v3939
        %vm3941 = vcmp.lt.s32.totalorder %v3922, 1
        %vm3942 = vcmp.lt.s32.totalorder %v3922, 2
        %vm3943 = vcmp.lt.s32.totalorder %v3922, 3
        %vm3944 = vcmp.lt.s32.totalorder %v3922, 4
        %v3945 = vsel %vm3941, %v3925, %v3928
        %v3946 = vsel %vm3944, %v3934, 2102212464
        %v3947 = vsel %vm3943, %v3931, %v3946
        %v3948 = vsel %vm3942, %v3945, %v3947
        %v3949 = vsel %vm3941, %v3928, %v3931
        %v3950 = vsel %vm3944, %v3937, 920167782
        %v3951 = vsel %vm3943, %v3934, %v3950
        %v3952 = vsel %vm3942, %v3949, %v3951
        %v3953 = vsel %vm3941, %v3931, %v3934
        %v3954 = vsel %vm3944, %v3940, 1326507024
        %v3955 = vsel %vm3943, %v3937, %v3954
        %v3956 = vsel %vm3942, %v3953, %v3955
        %v3957 = vshll.u32 %v3917, 8
        %v3958 = vand.u32 %v3957, 65535
        %v3959 = vshrl.u32 %v3957, 16
        %v3960 = vand.u32 %v3956, 65535
        %v3961 = vshrl.u32 %v3956, 16
        %v3962 = vmul.u32 %v3958, %v3960
        %v3963 = vmul.u32 %v3958, %v3961
        %v3964 = vmul.u32 %v3959, %v3960
        %v3965 = vmul.u32 %v3959, %v3961
        %v3966 = vshll.u32 %v3963, 16
        %v3967 = vshrl.u32 %v3963, 16
        %v3968 = vshll.u32 %v3964, 16
        %v3969 = vshrl.u32 %v3964, 16
        %vm3970 = vc.u32 %v3962, %v3966
        %v3971 = vsel %vm3970, 1, 0
        %v3972 = vadd.s32 %v3962, %v3966
        %v3973 = vadd.s32 %v3965, %v3971
        %vm3974 = vc.u32 %v3972, %v3968
        %v3975 = vsel %vm3974, 1, 0
        %v3976 = vadd.s32 %v3972, %v3968
        %v3977 = vadd.s32 %v3973, %v3975
        %v3978 = vadd.s32 %v3977, %v3967
        %v3979 = vadd.s32 %v3978, %v3969
        %v3980 = vand.u32 %v3957, 65535
        %v3981 = vshrl.u32 %v3957, 16
        %v3982 = vand.u32 %v3952, 65535
        %v3983 = vshrl.u32 %v3952, 16
        %v3984 = vmul.u32 %v3980, %v3982
        %v3985 = vmul.u32 %v3980, %v3983
        %v3986 = vmul.u32 %v3981, %v3982
        %v3987 = vmul.u32 %v3981, %v3983
        %v3988 = vshll.u32 %v3985, 16
        %v3989 = vshrl.u32 %v3985, 16
        %v3990 = vshll.u32 %v3986, 16
        %v3991 = vshrl.u32 %v3986, 16
        %vm3992 = vc.u32 %v3984, %v3988
        %v3993 = vsel %vm3992, 1, 0
        %v3994 = vadd.s32 %v3984, %v3988
        %v3995 = vadd.s32 %v3987, %v3993
        %vm3996 = vc.u32 %v3994, %v3990
        %v3997 = vsel %vm3996, 1, 0
        %v3998 = vadd.s32 %v3994, %v3990
        %v3999 = vadd.s32 %v3995, %v3997
        %v4000 = vadd.s32 %v3999, %v3989
        %v4001 = vadd.s32 %v4000, %v3991
        %v4002 = vmul.u32 %v3957, %v3948
        %v4003 = vadd.s32 %v3979, %v3998
        %vm4004 = vc.u32 %v3979, %v3998
        %v4005 = vadd.s32 %v4001, 1
        %v4006 = vsel %vm4004, %v4005, %v4001
        %v4007 = vadd.s32 %v4002, %v4006
        %v4008 = vadd.s32 %v4007, 536870912
        %v4009 = vshrl.u32 %v4008, 30
        %v4010 = vshll.u32 %v4009, 30
        %v4011 = vsub.s32 %v4007, %v4010
        %vm4012 = vcmp.lt.s32.totalorder %v4011, 0
        %v4013 = vsub.s32 0, %v4011
        %v4014 = vsel %vm4012, %v4013, %v4011
        %v4015 = vclz %v4014
        %v4016 = vsub.s32 %v4015, 2
        %vm4017 = vcmp.gt.s32.totalorder 0, %v4016
        %v4018 = vsel %vm4017, 0, %v4016
        %v4019 = vsub.s32 32, %v4018
        %v4020 = vshll.u32 %v4011, %v4018
        %v4021 = vshrl.u32 %v4003, %v4019
        %v4022 = vor.u32 %v4020, %v4021
        %v4023 = vsub.s32 4294967266, %v4018
        %v4024 = vadd.s32 %v4023, 127
        %v4025 = vshll.u32 %v4024, 23
        %v4026 = vor.u32 4788187, %v4025
        %v4027 = vand.u32 2147483647, %v4026
        %v4029 = vcvt.s32.f32 %v4022
        %v4030 = vmul.f32 %v4029, %v4027
        %v4031 = vxor.u32 %v4030, 2147483648
        %v4032 = vsel %vm3911, %v4031, %v4030
        %v4033 = vsub.s32 4, %v4009
        %v4034 = vsel %vm3911, %v4033, %v4009
        %v4035 = vsel %vm3910, %v335, %v4032
        %v4036 = vsel %vm3910, 0, %v4034
        %v4037 = vmul.f32 %v4035, %v4035
        %v4038 = vmul.f32 %v4037, -0.001358992
        %v4039 = vadd.f32 %v4038, 0.041655596
        %v4040 = vmul.f32 %v4037, %v4039
        %v4041 = vadd.f32 %v4040, -0.4999988
        %v4042 = vmul.f32 %v4037, %v4041
        %v4043 = vadd.f32 1.0, %v4042
        %v4044 = vmul.f32 %v4035, %v4035
        %v4045 = vmul.f32 %v4044, -0.00019511016
        %v4046 = vadd.f32 %v4045, 0.008332121
        %v4047 = vmul.f32 %v4044, %v4046
        %v4048 = vadd.f32 %v4047, -0.16666654
        %v4049 = vmul.f32 %v4044, %v4048
        %v4050 = vadd.f32 %v4049, 1.0
        %v4051 = vmul.f32 %v4050, %v4035
        %vm4052 = vweird.f32 %v335
        %v4053 = vadd.s32 %v4036, 3
        %v4054 = vand.u32 %v4053, 3
        %vm4055 = vcmp.lt.s32.totalorder %v4054, 2
        %vm4056 = vcmp.eq.s32.totalorder %v4054, 0
        %v4057 = vxor.u32 %v4051, 2147483648
        %v4058 = vsel %vm4056, %v4043, %v4057
        %vm4059 = vcmp.eq.s32.totalorder %v4054, 2
        %v4060 = vxor.u32 %v4043, 2147483648
        %v4061 = vsel %vm4059, %v4060, %v4051
        %v4062 = vsel %vm4055, %v4058, %v4061
        %v4063 = vsel %vm4052, nan, %v4062
        %v4064 = vand.u32 2147483647, %v336
        %vm4065 = vcmp.le.f32.partialorder %v4064, 0.7853982
        %vm4066 = vcmp.lt.s32.totalorder %v336, 0
        %v4067 = vand.u32 %v336, 2139095040
        %v4068 = vshrl.u32 %v4067, 23
        %v4069 = vsub.s32 %v4068, 127
        %v4070 = vand.u32 2147483647, %v336
        %v4071 = vand.u32 %v4070, 8388607
        %v4072 = vor.u32 %v4071, 8388608
        %v4073 = vsub.s32 0, %v4072
        %v4074 = vadd.s32 %v4069, 1
        %vm4075 = vcmp.gt.s32.totalorder %v4074, 0
        %v4076 = vsel %vm4075, %v4074, 0
        %v4077 = vshrl.u32 %v4076, 5
        %v4078 = vand.u32 %v4076, 31
        %v4079 = vsub.s32 32, %v4078
        %v4080 = vshrl.u32 683565275, %v4079
        %v4081 = vshll.u32 683565275, %v4078
        %v4082 = vshrl.u32 2475754826, %v4079
        %v4083 = vor.u32 %v4081, %v4082
        %v4084 = vshll.u32 2475754826, %v4078
        %v4085 = vshrl.u32 2131351028, %v4079
        %v4086 = vor.u32 %v4084, %v4085
        %v4087 = vshll.u32 2131351028, %v4078
        %v4088 = vshrl.u32 2102212464, %v4079
        %v4089 = vor.u32 %v4087, %v4088
        %v4090 = vshll.u32 2102212464, %v4078
        %v4091 = vshrl.u32 920167782, %v4079
        %v4092 = vor.u32 %v4090, %v4091
        %v4093 = vshll.u32 920167782, %v4078
        %v4094 = vshrl.u32 1326507024, %v4079
        %v4095 = vor.u32 %v4093, %v4094
        %vm4096 = vcmp.lt.s32.totalorder %v4077, 1
        %vm4097 = vcmp.lt.s32.totalorder %v4077, 2
        %vm4098 = vcmp.lt.s32.totalorder %v4077, 3
        %vm4099 = vcmp.lt.s32.totalorder %v4077, 4
        %v4100 = vsel %vm4096, %v4080, %v4083
        %v4101 = vsel %vm4099, %v4089, 2102212464
        %v4102 = vsel %vm4098, %v4086, %v4101
        %v4103 = vsel %vm4097, %v4100, %v4102
        %v4104 = vsel %vm4096, %v4083, %v4086
        %v4105 = vsel %vm4099, %v4092, 920167782
        %v4106 = vsel %vm4098, %v4089, %v4105
        %v4107 = vsel %vm4097, %v4104, %v4106
        %v4108 = vsel %vm4096, %v4086, %v4089
        %v4109 = vsel %vm4099, %v4095, 1326507024
        %v4110 = vsel %vm4098, %v4092, %v4109
        %v4111 = vsel %vm4097, %v4108, %v4110
        %v4112 = vshll.u32 %v4072, 8
        %v4113 = vand.u32 %v4112, 65535
        %v4114 = vshrl.u32 %v4112, 16
        %v4115 = vand.u32 %v4111, 65535
        %v4116 = vshrl.u32 %v4111, 16
        %v4117 = vmul.u32 %v4113, %v4115
        %v4118 = vmul.u32 %v4113, %v4116
        %v4119 = vmul.u32 %v4114, %v4115
        %v4120 = vmul.u32 %v4114, %v4116
        %v4121 = vshll.u32 %v4118, 16
        %v4122 = vshrl.u32 %v4118, 16
        %v4123 = vshll.u32 %v4119, 16
        %v4124 = vshrl.u32 %v4119, 16
        %vm4125 = vc.u32 %v4117, %v4121
        %v4126 = vsel %vm4125, 1, 0
        %v4127 = vadd.s32 %v4117, %v4121
        %v4128 = vadd.s32 %v4120, %v4126
        %vm4129 = vc.u32 %v4127, %v4123
        %v4130 = vsel %vm4129, 1, 0
        %v4131 = vadd.s32 %v4127, %v4123
        %v4132 = vadd.s32 %v4128, %v4130
        %v4133 = vadd.s32 %v4132, %v4122
        %v4134 = vadd.s32 %v4133, %v4124
        %v4135 = vand.u32 %v4112, 65535
        %v4136 = vshrl.u32 %v4112, 16
        %v4137 = vand.u32 %v4107, 65535
        %v4138 = vshrl.u32 %v4107, 16
        %v4139 = vmul.u32 %v4135, %v4137
        %v4140 = vmul.u32 %v4135, %v4138
        %v4141 = vmul.u32 %v4136, %v4137
        %v4142 = vmul.u32 %v4136, %v4138
        %v4143 = vshll.u32 %v4140, 16
        %v4144 = vshrl.u32 %v4140, 16
        %v4145 = vshll.u32 %v4141, 16
        %v4146 = vshrl.u32 %v4141, 16
        %vm4147 = vc.u32 %v4139, %v4143
        %v4148 = vsel %vm4147, 1, 0
        %v4149 = vadd.s32 %v4139, %v4143
        %v4150 = vadd.s32 %v4142, %v4148
        %vm4151 = vc.u32 %v4149, %v4145
        %v4152 = vsel %vm4151, 1, 0
        %v4153 = vadd.s32 %v4149, %v4145
        %v4154 = vadd.s32 %v4150, %v4152
        %v4155 = vadd.s32 %v4154, %v4144
        %v4156 = vadd.s32 %v4155, %v4146
        %v4157 = vmul.u32 %v4112, %v4103
        %v4158 = vadd.s32 %v4134, %v4153
        %vm4159 = vc.u32 %v4134, %v4153
        %v4160 = vadd.s32 %v4156, 1
        %v4161 = vsel %vm4159, %v4160, %v4156
        %v4162 = vadd.s32 %v4157, %v4161
        %v4163 = vadd.s32 %v4162, 536870912
        %v4164 = vshrl.u32 %v4163, 30
        %v4165 = vshll.u32 %v4164, 30
        %v4166 = vsub.s32 %v4162, %v4165
        %vm4167 = vcmp.lt.s32.totalorder %v4166, 0
        %v4168 = vsub.s32 0, %v4166
        %v4169 = vsel %vm4167, %v4168, %v4166
        %v4170 = vclz %v4169
        %v4171 = vsub.s32 %v4170, 2
        %vm4172 = vcmp.gt.s32.totalorder 0, %v4171
        %v4173 = vsel %vm4172, 0, %v4171
        %v4174 = vsub.s32 32, %v4173
        %v4175 = vshll.u32 %v4166, %v4173
        %v4176 = vshrl.u32 %v4158, %v4174
        %v4177 = vor.u32 %v4175, %v4176
        %v4178 = vsub.s32 4294967266, %v4173
        %v4179 = vadd.s32 %v4178, 127
        %v4180 = vshll.u32 %v4179, 23
        %v4181 = vor.u32 4788187, %v4180
        %v4182 = vand.u32 2147483647, %v4181
        %v4184 = vcvt.s32.f32 %v4177
        %v4185 = vmul.f32 %v4184, %v4182
        %v4186 = vxor.u32 %v4185, 2147483648
        %v4187 = vsel %vm4066, %v4186, %v4185
        %v4188 = vsub.s32 4, %v4164
        %v4189 = vsel %vm4066, %v4188, %v4164
        %v4190 = vsel %vm4065, %v336, %v4187
        %v4191 = vsel %vm4065, 0, %v4189
        %v4192 = vmul.f32 %v4190, %v4190
        %v4193 = vmul.f32 %v4192, -0.001358992
        %v4194 = vadd.f32 %v4193, 0.041655596
        %v4195 = vmul.f32 %v4192, %v4194
        %v4196 = vadd.f32 %v4195, -0.4999988
        %v4197 = vmul.f32 %v4192, %v4196
        %v4198 = vadd.f32 1.0, %v4197
        %v4199 = vmul.f32 %v4190, %v4190
        %v4200 = vmul.f32 %v4199, -0.00019511016
        %v4201 = vadd.f32 %v4200, 0.008332121
        %v4202 = vmul.f32 %v4199, %v4201
        %v4203 = vadd.f32 %v4202, -0.16666654
        %v4204 = vmul.f32 %v4199, %v4203
        %v4205 = vadd.f32 %v4204, 1.0
        %v4206 = vmul.f32 %v4205, %v4190
        %vm4207 = vweird.f32 %v336
        %v4208 = vadd.s32 %v4191, 3
        %v4209 = vand.u32 %v4208, 3
        %vm4210 = vcmp.lt.s32.totalorder %v4209, 2
        %vm4211 = vcmp.eq.s32.totalorder %v4209, 0
        %v4212 = vxor.u32 %v4206, 2147483648
        %v4213 = vsel %vm4211, %v4198, %v4212
        %vm4214 = vcmp.eq.s32.totalorder %v4209, 2
        %v4215 = vxor.u32 %v4198, 2147483648
        %v4216 = vsel %vm4214, %v4215, %v4206
        %v4217 = vsel %vm4210, %v4213, %v4216
        %v4218 = vsel %vm4207, nan, %v4217
        %v4219 = vand.u32 2147483647, %v337
        %vm4220 = vcmp.le.f32.partialorder %v4219, 0.7853982
        %vm4221 = vcmp.lt.s32.totalorder %v337, 0
        %v4222 = vand.u32 %v337, 2139095040
        %v4223 = vshrl.u32 %v4222, 23
        %v4224 = vsub.s32 %v4223, 127
        %v4225 = vand.u32 2147483647, %v337
        %v4226 = vand.u32 %v4225, 8388607
        %v4227 = vor.u32 %v4226, 8388608
        %v4228 = vsub.s32 0, %v4227
        %v4229 = vadd.s32 %v4224, 1
        %vm4230 = vcmp.gt.s32.totalorder %v4229, 0
        %v4231 = vsel %vm4230, %v4229, 0
        %v4232 = vshrl.u32 %v4231, 5
        %v4233 = vand.u32 %v4231, 31
        %v4234 = vsub.s32 32, %v4233
        %v4235 = vshrl.u32 683565275, %v4234
        %v4236 = vshll.u32 683565275, %v4233
        %v4237 = vshrl.u32 2475754826, %v4234
        %v4238 = vor.u32 %v4236, %v4237
        %v4239 = vshll.u32 2475754826, %v4233
        %v4240 = vshrl.u32 2131351028, %v4234
        %v4241 = vor.u32 %v4239, %v4240
        %v4242 = vshll.u32 2131351028, %v4233
        %v4243 = vshrl.u32 2102212464, %v4234
        %v4244 = vor.u32 %v4242, %v4243
        %v4245 = vshll.u32 2102212464, %v4233
        %v4246 = vshrl.u32 920167782, %v4234
        %v4247 = vor.u32 %v4245, %v4246
        %v4248 = vshll.u32 920167782, %v4233
        %v4249 = vshrl.u32 1326507024, %v4234
        %v4250 = vor.u32 %v4248, %v4249
        %vm4251 = vcmp.lt.s32.totalorder %v4232, 1
        %vm4252 = vcmp.lt.s32.totalorder %v4232, 2
        %vm4253 = vcmp.lt.s32.totalorder %v4232, 3
        %vm4254 = vcmp.lt.s32.totalorder %v4232, 4
        %v4255 = vsel %vm4251, %v4235, %v4238
        %v4256 = vsel %vm4254, %v4244, 2102212464
        %v4257 = vsel %vm4253, %v4241, %v4256
        %v4258 = vsel %vm4252, %v4255, %v4257
        %v4259 = vsel %vm4251, %v4238, %v4241
        %v4260 = vsel %vm4254, %v4247, 920167782
        %v4261 = vsel %vm4253, %v4244, %v4260
        %v4262 = vsel %vm4252, %v4259, %v4261
        %v4263 = vsel %vm4251, %v4241, %v4244
        %v4264 = vsel %vm4254, %v4250, 1326507024
        %v4265 = vsel %vm4253, %v4247, %v4264
        %v4266 = vsel %vm4252, %v4263, %v4265
        %v4267 = vshll.u32 %v4227, 8
        %v4268 = vand.u32 %v4267, 65535
        %v4269 = vshrl.u32 %v4267, 16
        %v4270 = vand.u32 %v4266, 65535
        %v4271 = vshrl.u32 %v4266, 16
        %v4272 = vmul.u32 %v4268, %v4270
        %v4273 = vmul.u32 %v4268, %v4271
        %v4274 = vmul.u32 %v4269, %v4270
        %v4275 = vmul.u32 %v4269, %v4271
        %v4276 = vshll.u32 %v4273, 16
        %v4277 = vshrl.u32 %v4273, 16
        %v4278 = vshll.u32 %v4274, 16
        %v4279 = vshrl.u32 %v4274, 16
        %vm4280 = vc.u32 %v4272, %v4276
        %v4281 = vsel %vm4280, 1, 0
        %v4282 = vadd.s32 %v4272, %v4276
        %v4283 = vadd.s32 %v4275, %v4281
        %vm4284 = vc.u32 %v4282, %v4278
        %v4285 = vsel %vm4284, 1, 0
        %v4286 = vadd.s32 %v4282, %v4278
        %v4287 = vadd.s32 %v4283, %v4285
        %v4288 = vadd.s32 %v4287, %v4277
        %v4289 = vadd.s32 %v4288, %v4279
        %v4290 = vand.u32 %v4267, 65535
        %v4291 = vshrl.u32 %v4267, 16
        %v4292 = vand.u32 %v4262, 65535
        %v4293 = vshrl.u32 %v4262, 16
        %v4294 = vmul.u32 %v4290, %v4292
        %v4295 = vmul.u32 %v4290, %v4293
        %v4296 = vmul.u32 %v4291, %v4292
        %v4297 = vmul.u32 %v4291, %v4293
        %v4298 = vshll.u32 %v4295, 16
        %v4299 = vshrl.u32 %v4295, 16
        %v4300 = vshll.u32 %v4296, 16
        %v4301 = vshrl.u32 %v4296, 16
        %vm4302 = vc.u32 %v4294, %v4298
        %v4303 = vsel %vm4302, 1, 0
        %v4304 = vadd.s32 %v4294, %v4298
        %v4305 = vadd.s32 %v4297, %v4303
        %vm4306 = vc.u32 %v4304, %v4300
        %v4307 = vsel %vm4306, 1, 0
        %v4308 = vadd.s32 %v4304, %v4300
        %v4309 = vadd.s32 %v4305, %v4307
        %v4310 = vadd.s32 %v4309, %v4299
        %v4311 = vadd.s32 %v4310, %v4301
        %v4312 = vmul.u32 %v4267, %v4258
        %v4313 = vadd.s32 %v4289, %v4308
        %vm4314 = vc.u32 %v4289, %v4308
        %v4315 = vadd.s32 %v4311, 1
        %v4316 = vsel %vm4314, %v4315, %v4311
        %v4317 = vadd.s32 %v4312, %v4316
        %v4318 = vadd.s32 %v4317, 536870912
        %v4319 = vshrl.u32 %v4318, 30
        %v4320 = vshll.u32 %v4319, 30
        %v4321 = vsub.s32 %v4317, %v4320
        %vm4322 = vcmp.lt.s32.totalorder %v4321, 0
        %v4323 = vsub.s32 0, %v4321
        %v4324 = vsel %vm4322, %v4323, %v4321
        %v4325 = vclz %v4324
        %v4326 = vsub.s32 %v4325, 2
        %vm4327 = vcmp.gt.s32.totalorder 0, %v4326
        %v4328 = vsel %vm4327, 0, %v4326
        %v4329 = vsub.s32 32, %v4328
        %v4330 = vshll.u32 %v4321, %v4328
        %v4331 = vshrl.u32 %v4313, %v4329
        %v4332 = vor.u32 %v4330, %v4331
        %v4333 = vsub.s32 4294967266, %v4328
        %v4334 = vadd.s32 %v4333, 127
        %v4335 = vshll.u32 %v4334, 23
        %v4336 = vor.u32 4788187, %v4335
        %v4337 = vand.u32 2147483647, %v4336
        %v4339 = vcvt.s32.f32 %v4332
        %v4340 = vmul.f32 %v4339, %v4337
        %v4341 = vxor.u32 %v4340, 2147483648
        %v4342 = vsel %vm4221, %v4341, %v4340
        %v4343 = vsub.s32 4, %v4319
        %v4344 = vsel %vm4221, %v4343, %v4319
        %v4345 = vsel %vm4220, %v337, %v4342
        %v4346 = vsel %vm4220, 0, %v4344
        %v4347 = vmul.f32 %v4345, %v4345
        %v4348 = vmul.f32 %v4347, -0.001358992
        %v4349 = vadd.f32 %v4348, 0.041655596
        %v4350 = vmul.f32 %v4347, %v4349
        %v4351 = vadd.f32 %v4350, -0.4999988
        %v4352 = vmul.f32 %v4347, %v4351
        %v4353 = vadd.f32 1.0, %v4352
        %v4354 = vmul.f32 %v4345, %v4345
        %v4355 = vmul.f32 %v4354, -0.00019511016
        %v4356 = vadd.f32 %v4355, 0.008332121
        %v4357 = vmul.f32 %v4354, %v4356
        %v4358 = vadd.f32 %v4357, -0.16666654
        %v4359 = vmul.f32 %v4354, %v4358
        %v4360 = vadd.f32 %v4359, 1.0
        %v4361 = vmul.f32 %v4360, %v4345
        %vm4362 = vweird.f32 %v337
        %v4363 = vadd.s32 %v4346, 3
        %v4364 = vand.u32 %v4363, 3
        %vm4365 = vcmp.lt.s32.totalorder %v4364, 2
        %vm4366 = vcmp.eq.s32.totalorder %v4364, 0
        %v4367 = vxor.u32 %v4361, 2147483648
        %v4368 = vsel %vm4366, %v4353, %v4367
        %vm4369 = vcmp.eq.s32.totalorder %v4364, 2
        %v4370 = vxor.u32 %v4353, 2147483648
        %v4371 = vsel %vm4369, %v4370, %v4361
        %v4372 = vsel %vm4365, %v4368, %v4371
        %v4373 = vsel %vm4362, nan, %v4372
        %v4374 = vand.u32 2147483647, %v338
        %vm4375 = vcmp.le.f32.partialorder %v4374, 0.7853982
        %vm4376 = vcmp.lt.s32.totalorder %v338, 0
        %v4377 = vand.u32 %v338, 2139095040
        %v4378 = vshrl.u32 %v4377, 23
        %v4379 = vsub.s32 %v4378, 127
        %v4380 = vand.u32 2147483647, %v338
        %v4381 = vand.u32 %v4380, 8388607
        %v4382 = vor.u32 %v4381, 8388608
        %v4383 = vsub.s32 0, %v4382
        %v4384 = vadd.s32 %v4379, 1
        %vm4385 = vcmp.gt.s32.totalorder %v4384, 0
        %v4386 = vsel %vm4385, %v4384, 0
        %v4387 = vshrl.u32 %v4386, 5
        %v4388 = vand.u32 %v4386, 31
        %v4389 = vsub.s32 32, %v4388
        %v4390 = vshrl.u32 683565275, %v4389
        %v4391 = vshll.u32 683565275, %v4388
        %v4392 = vshrl.u32 2475754826, %v4389
        %v4393 = vor.u32 %v4391, %v4392
        %v4394 = vshll.u32 2475754826, %v4388
        %v4395 = vshrl.u32 2131351028, %v4389
        %v4396 = vor.u32 %v4394, %v4395
        %v4397 = vshll.u32 2131351028, %v4388
        %v4398 = vshrl.u32 2102212464, %v4389
        %v4399 = vor.u32 %v4397, %v4398
        %v4400 = vshll.u32 2102212464, %v4388
        %v4401 = vshrl.u32 920167782, %v4389
        %v4402 = vor.u32 %v4400, %v4401
        %v4403 = vshll.u32 920167782, %v4388
        %v4404 = vshrl.u32 1326507024, %v4389
        %v4405 = vor.u32 %v4403, %v4404
        %vm4406 = vcmp.lt.s32.totalorder %v4387, 1
        %vm4407 = vcmp.lt.s32.totalorder %v4387, 2
        %vm4408 = vcmp.lt.s32.totalorder %v4387, 3
        %vm4409 = vcmp.lt.s32.totalorder %v4387, 4
        %v4410 = vsel %vm4406, %v4390, %v4393
        %v4411 = vsel %vm4409, %v4399, 2102212464
        %v4412 = vsel %vm4408, %v4396, %v4411
        %v4413 = vsel %vm4407, %v4410, %v4412
        %v4414 = vsel %vm4406, %v4393, %v4396
        %v4415 = vsel %vm4409, %v4402, 920167782
        %v4416 = vsel %vm4408, %v4399, %v4415
        %v4417 = vsel %vm4407, %v4414, %v4416
        %v4418 = vsel %vm4406, %v4396, %v4399
        %v4419 = vsel %vm4409, %v4405, 1326507024
        %v4420 = vsel %vm4408, %v4402, %v4419
        %v4421 = vsel %vm4407, %v4418, %v4420
        %v4422 = vshll.u32 %v4382, 8
        %v4423 = vand.u32 %v4422, 65535
        %v4424 = vshrl.u32 %v4422, 16
        %v4425 = vand.u32 %v4421, 65535
        %v4426 = vshrl.u32 %v4421, 16
        %v4427 = vmul.u32 %v4423, %v4425
        %v4428 = vmul.u32 %v4423, %v4426
        %v4429 = vmul.u32 %v4424, %v4425
        %v4430 = vmul.u32 %v4424, %v4426
        %v4431 = vshll.u32 %v4428, 16
        %v4432 = vshrl.u32 %v4428, 16
        %v4433 = vshll.u32 %v4429, 16
        %v4434 = vshrl.u32 %v4429, 16
        %vm4435 = vc.u32 %v4427, %v4431
        %v4436 = vsel %vm4435, 1, 0
        %v4437 = vadd.s32 %v4427, %v4431
        %v4438 = vadd.s32 %v4430, %v4436
        %vm4439 = vc.u32 %v4437, %v4433
        %v4440 = vsel %vm4439, 1, 0
        %v4441 = vadd.s32 %v4437, %v4433
        %v4442 = vadd.s32 %v4438, %v4440
        %v4443 = vadd.s32 %v4442, %v4432
        %v4444 = vadd.s32 %v4443, %v4434
        %v4445 = vand.u32 %v4422, 65535
        %v4446 = vshrl.u32 %v4422, 16
        %v4447 = vand.u32 %v4417, 65535
        %v4448 = vshrl.u32 %v4417, 16
        %v4449 = vmul.u32 %v4445, %v4447
        %v4450 = vmul.u32 %v4445, %v4448
        %v4451 = vmul.u32 %v4446, %v4447
        %v4452 = vmul.u32 %v4446, %v4448
        %v4453 = vshll.u32 %v4450, 16
        %v4454 = vshrl.u32 %v4450, 16
        %v4455 = vshll.u32 %v4451, 16
        %v4456 = vshrl.u32 %v4451, 16
        %vm4457 = vc.u32 %v4449, %v4453
        %v4458 = vsel %vm4457, 1, 0
        %v4459 = vadd.s32 %v4449, %v4453
        %v4460 = vadd.s32 %v4452, %v4458
        %vm4461 = vc.u32 %v4459, %v4455
        %v4462 = vsel %vm4461, 1, 0
        %v4463 = vadd.s32 %v4459, %v4455
        %v4464 = vadd.s32 %v4460, %v4462
        %v4465 = vadd.s32 %v4464, %v4454
        %v4466 = vadd.s32 %v4465, %v4456
        %v4467 = vmul.u32 %v4422, %v4413
        %v4468 = vadd.s32 %v4444, %v4463
        %vm4469 = vc.u32 %v4444, %v4463
        %v4470 = vadd.s32 %v4466, 1
        %v4471 = vsel %vm4469, %v4470, %v4466
        %v4472 = vadd.s32 %v4467, %v4471
        %v4473 = vadd.s32 %v4472, 536870912
        %v4474 = vshrl.u32 %v4473, 30
        %v4475 = vshll.u32 %v4474, 30
        %v4476 = vsub.s32 %v4472, %v4475
        %vm4477 = vcmp.lt.s32.totalorder %v4476, 0
        %v4478 = vsub.s32 0, %v4476
        %v4479 = vsel %vm4477, %v4478, %v4476
        %v4480 = vclz %v4479
        %v4481 = vsub.s32 %v4480, 2
        %vm4482 = vcmp.gt.s32.totalorder 0, %v4481
        %v4483 = vsel %vm4482, 0, %v4481
        %v4484 = vsub.s32 32, %v4483
        %v4485 = vshll.u32 %v4476, %v4483
        %v4486 = vshrl.u32 %v4468, %v4484
        %v4487 = vor.u32 %v4485, %v4486
        %v4488 = vsub.s32 4294967266, %v4483
        %v4489 = vadd.s32 %v4488, 127
        %v4490 = vshll.u32 %v4489, 23
        %v4491 = vor.u32 4788187, %v4490
        %v4492 = vand.u32 2147483647, %v4491
        %v4494 = vcvt.s32.f32 %v4487
        %v4495 = vmul.f32 %v4494, %v4492
        %v4496 = vxor.u32 %v4495, 2147483648
        %v4497 = vsel %vm4376, %v4496, %v4495
        %v4498 = vsub.s32 4, %v4474
        %v4499 = vsel %vm4376, %v4498, %v4474
        %v4500 = vsel %vm4375, %v338, %v4497
        %v4501 = vsel %vm4375, 0, %v4499
        %v4502 = vmul.f32 %v4500, %v4500
        %v4503 = vmul.f32 %v4502, -0.001358992
        %v4504 = vadd.f32 %v4503, 0.041655596
        %v4505 = vmul.f32 %v4502, %v4504
        %v4506 = vadd.f32 %v4505, -0.4999988
        %v4507 = vmul.f32 %v4502, %v4506
        %v4508 = vadd.f32 1.0, %v4507
        %v4509 = vmul.f32 %v4500, %v4500
        %v4510 = vmul.f32 %v4509, -0.00019511016
        %v4511 = vadd.f32 %v4510, 0.008332121
        %v4512 = vmul.f32 %v4509, %v4511
        %v4513 = vadd.f32 %v4512, -0.16666654
        %v4514 = vmul.f32 %v4509, %v4513
        %v4515 = vadd.f32 %v4514, 1.0
        %v4516 = vmul.f32 %v4515, %v4500
        %vm4517 = vweird.f32 %v338
        %v4518 = vadd.s32 %v4501, 3
        %v4519 = vand.u32 %v4518, 3
        %vm4520 = vcmp.lt.s32.totalorder %v4519, 2
        %vm4521 = vcmp.eq.s32.totalorder %v4519, 0
        %v4522 = vxor.u32 %v4516, 2147483648
        %v4523 = vsel %vm4521, %v4508, %v4522
        %vm4524 = vcmp.eq.s32.totalorder %v4519, 2
        %v4525 = vxor.u32 %v4508, 2147483648
        %v4526 = vsel %vm4524, %v4525, %v4516
        %v4527 = vsel %vm4520, %v4523, %v4526
        %v4528 = vsel %vm4517, nan, %v4527
        %v4529 = vand.u32 2147483647, %v339
        %vm4530 = vcmp.le.f32.partialorder %v4529, 0.7853982
        %vm4531 = vcmp.lt.s32.totalorder %v339, 0
        %v4532 = vand.u32 %v339, 2139095040
        %v4533 = vshrl.u32 %v4532, 23
        %v4534 = vsub.s32 %v4533, 127
        %v4535 = vand.u32 2147483647, %v339
        %v4536 = vand.u32 %v4535, 8388607
        %v4537 = vor.u32 %v4536, 8388608
        %v4538 = vsub.s32 0, %v4537
        %v4539 = vadd.s32 %v4534, 1
        %vm4540 = vcmp.gt.s32.totalorder %v4539, 0
        %v4541 = vsel %vm4540, %v4539, 0
        %v4542 = vshrl.u32 %v4541, 5
        %v4543 = vand.u32 %v4541, 31
        %v4544 = vsub.s32 32, %v4543
        %v4545 = vshrl.u32 683565275, %v4544
        %v4546 = vshll.u32 683565275, %v4543
        %v4547 = vshrl.u32 2475754826, %v4544
        %v4548 = vor.u32 %v4546, %v4547
        %v4549 = vshll.u32 2475754826, %v4543
        %v4550 = vshrl.u32 2131351028, %v4544
        %v4551 = vor.u32 %v4549, %v4550
        %v4552 = vshll.u32 2131351028, %v4543
        %v4553 = vshrl.u32 2102212464, %v4544
        %v4554 = vor.u32 %v4552, %v4553
        %v4555 = vshll.u32 2102212464, %v4543
        %v4556 = vshrl.u32 920167782, %v4544
        %v4557 = vor.u32 %v4555, %v4556
        %v4558 = vshll.u32 920167782, %v4543
        %v4559 = vshrl.u32 1326507024, %v4544
        %v4560 = vor.u32 %v4558, %v4559
        %vm4561 = vcmp.lt.s32.totalorder %v4542, 1
        %vm4562 = vcmp.lt.s32.totalorder %v4542, 2
        %vm4563 = vcmp.lt.s32.totalorder %v4542, 3
        %vm4564 = vcmp.lt.s32.totalorder %v4542, 4
        %v4565 = vsel %vm4561, %v4545, %v4548
        %v4566 = vsel %vm4564, %v4554, 2102212464
        %v4567 = vsel %vm4563, %v4551, %v4566
        %v4568 = vsel %vm4562, %v4565, %v4567
        %v4569 = vsel %vm4561, %v4548, %v4551
        %v4570 = vsel %vm4564, %v4557, 920167782
        %v4571 = vsel %vm4563, %v4554, %v4570
        %v4572 = vsel %vm4562, %v4569, %v4571
        %v4573 = vsel %vm4561, %v4551, %v4554
        %v4574 = vsel %vm4564, %v4560, 1326507024
        %v4575 = vsel %vm4563, %v4557, %v4574
        %v4576 = vsel %vm4562, %v4573, %v4575
        %v4577 = vshll.u32 %v4537, 8
        %v4578 = vand.u32 %v4577, 65535
        %v4579 = vshrl.u32 %v4577, 16
        %v4580 = vand.u32 %v4576, 65535
        %v4581 = vshrl.u32 %v4576, 16
        %v4582 = vmul.u32 %v4578, %v4580
        %v4583 = vmul.u32 %v4578, %v4581
        %v4584 = vmul.u32 %v4579, %v4580
        %v4585 = vmul.u32 %v4579, %v4581
        %v4586 = vshll.u32 %v4583, 16
        %v4587 = vshrl.u32 %v4583, 16
        %v4588 = vshll.u32 %v4584, 16
        %v4589 = vshrl.u32 %v4584, 16
        %vm4590 = vc.u32 %v4582, %v4586
        %v4591 = vsel %vm4590, 1, 0
        %v4592 = vadd.s32 %v4582, %v4586
        %v4593 = vadd.s32 %v4585, %v4591
        %vm4594 = vc.u32 %v4592, %v4588
        %v4595 = vsel %vm4594, 1, 0
        %v4596 = vadd.s32 %v4592, %v4588
        %v4597 = vadd.s32 %v4593, %v4595
        %v4598 = vadd.s32 %v4597, %v4587
        %v4599 = vadd.s32 %v4598, %v4589
        %v4600 = vand.u32 %v4577, 65535
        %v4601 = vshrl.u32 %v4577, 16
        %v4602 = vand.u32 %v4572, 65535
        %v4603 = vshrl.u32 %v4572, 16
        %v4604 = vmul.u32 %v4600, %v4602
        %v4605 = vmul.u32 %v4600, %v4603
        %v4606 = vmul.u32 %v4601, %v4602
        %v4607 = vmul.u32 %v4601, %v4603
        %v4608 = vshll.u32 %v4605, 16
        %v4609 = vshrl.u32 %v4605, 16
        %v4610 = vshll.u32 %v4606, 16
        %v4611 = vshrl.u32 %v4606, 16
        %vm4612 = vc.u32 %v4604, %v4608
        %v4613 = vsel %vm4612, 1, 0
        %v4614 = vadd.s32 %v4604, %v4608
        %v4615 = vadd.s32 %v4607, %v4613
        %vm4616 = vc.u32 %v4614, %v4610
        %v4617 = vsel %vm4616, 1, 0
        %v4618 = vadd.s32 %v4614, %v4610
        %v4619 = vadd.s32 %v4615, %v4617
        %v4620 = vadd.s32 %v4619, %v4609
        %v4621 = vadd.s32 %v4620, %v4611
        %v4622 = vmul.u32 %v4577, %v4568
        %v4623 = vadd.s32 %v4599, %v4618
        %vm4624 = vc.u32 %v4599, %v4618
        %v4625 = vadd.s32 %v4621, 1
        %v4626 = vsel %vm4624, %v4625, %v4621
        %v4627 = vadd.s32 %v4622, %v4626
        %v4628 = vadd.s32 %v4627, 536870912
        %v4629 = vshrl.u32 %v4628, 30
        %v4630 = vshll.u32 %v4629, 30
        %v4631 = vsub.s32 %v4627, %v4630
        %vm4632 = vcmp.lt.s32.totalorder %v4631, 0
        %v4633 = vsub.s32 0, %v4631
        %v4634 = vsel %vm4632, %v4633, %v4631
        %v4635 = vclz %v4634
        %v4636 = vsub.s32 %v4635, 2
        %vm4637 = vcmp.gt.s32.totalorder 0, %v4636
        %v4638 = vsel %vm4637, 0, %v4636
        %v4639 = vsub.s32 32, %v4638
        %v4640 = vshll.u32 %v4631, %v4638
        %v4641 = vshrl.u32 %v4623, %v4639
        %v4642 = vor.u32 %v4640, %v4641
        %v4643 = vsub.s32 4294967266, %v4638
        %v4644 = vadd.s32 %v4643, 127
        %v4645 = vshll.u32 %v4644, 23
        %v4646 = vor.u32 4788187, %v4645
        %v4647 = vand.u32 2147483647, %v4646
        %v4649 = vcvt.s32.f32 %v4642
        %v4650 = vmul.f32 %v4649, %v4647
        %v4651 = vxor.u32 %v4650, 2147483648
        %v4652 = vsel %vm4531, %v4651, %v4650
        %v4653 = vsub.s32 4, %v4629
        %v4654 = vsel %vm4531, %v4653, %v4629
        %v4655 = vsel %vm4530, %v339, %v4652
        %v4656 = vsel %vm4530, 0, %v4654
        %v4657 = vmul.f32 %v4655, %v4655
        %v4658 = vmul.f32 %v4657, -0.001358992
        %v4659 = vadd.f32 %v4658, 0.041655596
        %v4660 = vmul.f32 %v4657, %v4659
        %v4661 = vadd.f32 %v4660, -0.4999988
        %v4662 = vmul.f32 %v4657, %v4661
        %v4663 = vadd.f32 1.0, %v4662
        %v4664 = vmul.f32 %v4655, %v4655
        %v4665 = vmul.f32 %v4664, -0.00019511016
        %v4666 = vadd.f32 %v4665, 0.008332121
        %v4667 = vmul.f32 %v4664, %v4666
        %v4668 = vadd.f32 %v4667, -0.16666654
        %v4669 = vmul.f32 %v4664, %v4668
        %v4670 = vadd.f32 %v4669, 1.0
        %v4671 = vmul.f32 %v4670, %v4655
        %vm4672 = vweird.f32 %v339
        %v4673 = vadd.s32 %v4656, 3
        %v4674 = vand.u32 %v4673, 3
        %vm4675 = vcmp.lt.s32.totalorder %v4674, 2
        %vm4676 = vcmp.eq.s32.totalorder %v4674, 0
        %v4677 = vxor.u32 %v4671, 2147483648
        %v4678 = vsel %vm4676, %v4663, %v4677
        %vm4679 = vcmp.eq.s32.totalorder %v4674, 2
        %v4680 = vxor.u32 %v4663, 2147483648
        %v4681 = vsel %vm4679, %v4680, %v4671
        %v4682 = vsel %vm4675, %v4678, %v4681
        %v4683 = vsel %vm4672, nan, %v4682
        %v4684 = vand.u32 2147483647, %v340
        %vm4685 = vcmp.le.f32.partialorder %v4684, 0.7853982
        %vm4686 = vcmp.lt.s32.totalorder %v340, 0
        %v4687 = vand.u32 %v340, 2139095040
        %v4688 = vshrl.u32 %v4687, 23
        %v4689 = vsub.s32 %v4688, 127
        %v4690 = vand.u32 2147483647, %v340
        %v4691 = vand.u32 %v4690, 8388607
        %v4692 = vor.u32 %v4691, 8388608
        %v4693 = vsub.s32 0, %v4692
        %v4694 = vadd.s32 %v4689, 1
        %vm4695 = vcmp.gt.s32.totalorder %v4694, 0
        %v4696 = vsel %vm4695, %v4694, 0
        %v4697 = vshrl.u32 %v4696, 5
        %v4698 = vand.u32 %v4696, 31
        %v4699 = vsub.s32 32, %v4698
        %v4700 = vshrl.u32 683565275, %v4699
        %v4701 = vshll.u32 683565275, %v4698
        %v4702 = vshrl.u32 2475754826, %v4699
        %v4703 = vor.u32 %v4701, %v4702
        %v4704 = vshll.u32 2475754826, %v4698
        %v4705 = vshrl.u32 2131351028, %v4699
        %v4706 = vor.u32 %v4704, %v4705
        %v4707 = vshll.u32 2131351028, %v4698
        %v4708 = vshrl.u32 2102212464, %v4699
        %v4709 = vor.u32 %v4707, %v4708
        %v4710 = vshll.u32 2102212464, %v4698
        %v4711 = vshrl.u32 920167782, %v4699
        %v4712 = vor.u32 %v4710, %v4711
        %v4713 = vshll.u32 920167782, %v4698
        %v4714 = vshrl.u32 1326507024, %v4699
        %v4715 = vor.u32 %v4713, %v4714
        %vm4716 = vcmp.lt.s32.totalorder %v4697, 1
        %vm4717 = vcmp.lt.s32.totalorder %v4697, 2
        %vm4718 = vcmp.lt.s32.totalorder %v4697, 3
        %vm4719 = vcmp.lt.s32.totalorder %v4697, 4
        %v4720 = vsel %vm4716, %v4700, %v4703
        %v4721 = vsel %vm4719, %v4709, 2102212464
        %v4722 = vsel %vm4718, %v4706, %v4721
        %v4723 = vsel %vm4717, %v4720, %v4722
        %v4724 = vsel %vm4716, %v4703, %v4706
        %v4725 = vsel %vm4719, %v4712, 920167782
        %v4726 = vsel %vm4718, %v4709, %v4725
        %v4727 = vsel %vm4717, %v4724, %v4726
        %v4728 = vsel %vm4716, %v4706, %v4709
        %v4729 = vsel %vm4719, %v4715, 1326507024
        %v4730 = vsel %vm4718, %v4712, %v4729
        %v4731 = vsel %vm4717, %v4728, %v4730
        %v4732 = vshll.u32 %v4692, 8
        %v4733 = vand.u32 %v4732, 65535
        %v4734 = vshrl.u32 %v4732, 16
        %v4735 = vand.u32 %v4731, 65535
        %v4736 = vshrl.u32 %v4731, 16
        %v4737 = vmul.u32 %v4733, %v4735
        %v4738 = vmul.u32 %v4733, %v4736
        %v4739 = vmul.u32 %v4734, %v4735
        %v4740 = vmul.u32 %v4734, %v4736
        %v4741 = vshll.u32 %v4738, 16
        %v4742 = vshrl.u32 %v4738, 16
        %v4743 = vshll.u32 %v4739, 16
        %v4744 = vshrl.u32 %v4739, 16
        %vm4745 = vc.u32 %v4737, %v4741
        %v4746 = vsel %vm4745, 1, 0
        %v4747 = vadd.s32 %v4737, %v4741
        %v4748 = vadd.s32 %v4740, %v4746
        %vm4749 = vc.u32 %v4747, %v4743
        %v4750 = vsel %vm4749, 1, 0
        %v4751 = vadd.s32 %v4747, %v4743
        %v4752 = vadd.s32 %v4748, %v4750
        %v4753 = vadd.s32 %v4752, %v4742
        %v4754 = vadd.s32 %v4753, %v4744
        %v4755 = vand.u32 %v4732, 65535
        %v4756 = vshrl.u32 %v4732, 16
        %v4757 = vand.u32 %v4727, 65535
        %v4758 = vshrl.u32 %v4727, 16
        %v4759 = vmul.u32 %v4755, %v4757
        %v4760 = vmul.u32 %v4755, %v4758
        %v4761 = vmul.u32 %v4756, %v4757
        %v4762 = vmul.u32 %v4756, %v4758
        %v4763 = vshll.u32 %v4760, 16
        %v4764 = vshrl.u32 %v4760, 16
        %v4765 = vshll.u32 %v4761, 16
        %v4766 = vshrl.u32 %v4761, 16
        %vm4767 = vc.u32 %v4759, %v4763
        %v4768 = vsel %vm4767, 1, 0
        %v4769 = vadd.s32 %v4759, %v4763
        %v4770 = vadd.s32 %v4762, %v4768
        %vm4771 = vc.u32 %v4769, %v4765
        %v4772 = vsel %vm4771, 1, 0
        %v4773 = vadd.s32 %v4769, %v4765
        %v4774 = vadd.s32 %v4770, %v4772
        %v4775 = vadd.s32 %v4774, %v4764
        %v4776 = vadd.s32 %v4775, %v4766
        %v4777 = vmul.u32 %v4732, %v4723
        %v4778 = vadd.s32 %v4754, %v4773
        %vm4779 = vc.u32 %v4754, %v4773
        %v4780 = vadd.s32 %v4776, 1
        %v4781 = vsel %vm4779, %v4780, %v4776
        %v4782 = vadd.s32 %v4777, %v4781
        %v4783 = vadd.s32 %v4782, 536870912
        %v4784 = vshrl.u32 %v4783, 30
        %v4785 = vshll.u32 %v4784, 30
        %v4786 = vsub.s32 %v4782, %v4785
        %vm4787 = vcmp.lt.s32.totalorder %v4786, 0
        %v4788 = vsub.s32 0, %v4786
        %v4789 = vsel %vm4787, %v4788, %v4786
        %v4790 = vclz %v4789
        %v4791 = vsub.s32 %v4790, 2
        %vm4792 = vcmp.gt.s32.totalorder 0, %v4791
        %v4793 = vsel %vm4792, 0, %v4791
        %v4794 = vsub.s32 32, %v4793
        %v4795 = vshll.u32 %v4786, %v4793
        %v4796 = vshrl.u32 %v4778, %v4794
        %v4797 = vor.u32 %v4795, %v4796
        %v4798 = vsub.s32 4294967266, %v4793
        %v4799 = vadd.s32 %v4798, 127
        %v4800 = vshll.u32 %v4799, 23
        %v4801 = vor.u32 4788187, %v4800
        %v4802 = vand.u32 2147483647, %v4801
        %v4804 = vcvt.s32.f32 %v4797
        %v4805 = vmul.f32 %v4804, %v4802
        %v4806 = vxor.u32 %v4805, 2147483648
        %v4807 = vsel %vm4686, %v4806, %v4805
        %v4808 = vsub.s32 4, %v4784
        %v4809 = vsel %vm4686, %v4808, %v4784
        %v4810 = vsel %vm4685, %v340, %v4807
        %v4811 = vsel %vm4685, 0, %v4809
        %v4812 = vmul.f32 %v4810, %v4810
        %v4813 = vmul.f32 %v4812, -0.001358992
        %v4814 = vadd.f32 %v4813, 0.041655596
        %v4815 = vmul.f32 %v4812, %v4814
        %v4816 = vadd.f32 %v4815, -0.4999988
        %v4817 = vmul.f32 %v4812, %v4816
        %v4818 = vadd.f32 1.0, %v4817
        %v4819 = vmul.f32 %v4810, %v4810
        %v4820 = vmul.f32 %v4819, -0.00019511016
        %v4821 = vadd.f32 %v4820, 0.008332121
        %v4822 = vmul.f32 %v4819, %v4821
        %v4823 = vadd.f32 %v4822, -0.16666654
        %v4824 = vmul.f32 %v4819, %v4823
        %v4825 = vadd.f32 %v4824, 1.0
        %v4826 = vmul.f32 %v4825, %v4810
        %vm4827 = vweird.f32 %v340
        %v4828 = vadd.s32 %v4811, 3
        %v4829 = vand.u32 %v4828, 3
        %vm4830 = vcmp.lt.s32.totalorder %v4829, 2
        %vm4831 = vcmp.eq.s32.totalorder %v4829, 0
        %v4832 = vxor.u32 %v4826, 2147483648
        %v4833 = vsel %vm4831, %v4818, %v4832
        %vm4834 = vcmp.eq.s32.totalorder %v4829, 2
        %v4835 = vxor.u32 %v4818, 2147483648
        %v4836 = vsel %vm4834, %v4835, %v4826
        %v4837 = vsel %vm4830, %v4833, %v4836
        %v4838 = vsel %vm4827, nan, %v4837
        %v4839 = vand.u32 2147483647, %v341
        %vm4840 = vcmp.le.f32.partialorder %v4839, 0.7853982
        %vm4841 = vcmp.lt.s32.totalorder %v341, 0
        %v4842 = vand.u32 %v341, 2139095040
        %v4843 = vshrl.u32 %v4842, 23
        %v4844 = vsub.s32 %v4843, 127
        %v4845 = vand.u32 2147483647, %v341
        %v4846 = vand.u32 %v4845, 8388607
        %v4847 = vor.u32 %v4846, 8388608
        %v4848 = vsub.s32 0, %v4847
        %v4849 = vadd.s32 %v4844, 1
        %vm4850 = vcmp.gt.s32.totalorder %v4849, 0
        %v4851 = vsel %vm4850, %v4849, 0
        %v4852 = vshrl.u32 %v4851, 5
        %v4853 = vand.u32 %v4851, 31
        %v4854 = vsub.s32 32, %v4853
        %v4855 = vshrl.u32 683565275, %v4854
        %v4856 = vshll.u32 683565275, %v4853
        %v4857 = vshrl.u32 2475754826, %v4854
        %v4858 = vor.u32 %v4856, %v4857
        %v4859 = vshll.u32 2475754826, %v4853
        %v4860 = vshrl.u32 2131351028, %v4854
        %v4861 = vor.u32 %v4859, %v4860
        %v4862 = vshll.u32 2131351028, %v4853
        %v4863 = vshrl.u32 2102212464, %v4854
        %v4864 = vor.u32 %v4862, %v4863
        %v4865 = vshll.u32 2102212464, %v4853
        %v4866 = vshrl.u32 920167782, %v4854
        %v4867 = vor.u32 %v4865, %v4866
        %v4868 = vshll.u32 920167782, %v4853
        %v4869 = vshrl.u32 1326507024, %v4854
        %v4870 = vor.u32 %v4868, %v4869
        %vm4871 = vcmp.lt.s32.totalorder %v4852, 1
        %vm4872 = vcmp.lt.s32.totalorder %v4852, 2
        %vm4873 = vcmp.lt.s32.totalorder %v4852, 3
        %vm4874 = vcmp.lt.s32.totalorder %v4852, 4
        %v4875 = vsel %vm4871, %v4855, %v4858
        %v4876 = vsel %vm4874, %v4864, 2102212464
        %v4877 = vsel %vm4873, %v4861, %v4876
        %v4878 = vsel %vm4872, %v4875, %v4877
        %v4879 = vsel %vm4871, %v4858, %v4861
        %v4880 = vsel %vm4874, %v4867, 920167782
        %v4881 = vsel %vm4873, %v4864, %v4880
        %v4882 = vsel %vm4872, %v4879, %v4881
        %v4883 = vsel %vm4871, %v4861, %v4864
        %v4884 = vsel %vm4874, %v4870, 1326507024
        %v4885 = vsel %vm4873, %v4867, %v4884
        %v4886 = vsel %vm4872, %v4883, %v4885
        %v4887 = vshll.u32 %v4847, 8
        %v4888 = vand.u32 %v4887, 65535
        %v4889 = vshrl.u32 %v4887, 16
        %v4890 = vand.u32 %v4886, 65535
        %v4891 = vshrl.u32 %v4886, 16
        %v4892 = vmul.u32 %v4888, %v4890
        %v4893 = vmul.u32 %v4888, %v4891
        %v4894 = vmul.u32 %v4889, %v4890
        %v4895 = vmul.u32 %v4889, %v4891
        %v4896 = vshll.u32 %v4893, 16
        %v4897 = vshrl.u32 %v4893, 16
        %v4898 = vshll.u32 %v4894, 16
        %v4899 = vshrl.u32 %v4894, 16
        %vm4900 = vc.u32 %v4892, %v4896
        %v4901 = vsel %vm4900, 1, 0
        %v4902 = vadd.s32 %v4892, %v4896
        %v4903 = vadd.s32 %v4895, %v4901
        %vm4904 = vc.u32 %v4902, %v4898
        %v4905 = vsel %vm4904, 1, 0
        %v4906 = vadd.s32 %v4902, %v4898
        %v4907 = vadd.s32 %v4903, %v4905
        %v4908 = vadd.s32 %v4907, %v4897
        %v4909 = vadd.s32 %v4908, %v4899
        %v4910 = vand.u32 %v4887, 65535
        %v4911 = vshrl.u32 %v4887, 16
        %v4912 = vand.u32 %v4882, 65535
        %v4913 = vshrl.u32 %v4882, 16
        %v4914 = vmul.u32 %v4910, %v4912
        %v4915 = vmul.u32 %v4910, %v4913
        %v4916 = vmul.u32 %v4911, %v4912
        %v4917 = vmul.u32 %v4911, %v4913
        %v4918 = vshll.u32 %v4915, 16
        %v4919 = vshrl.u32 %v4915, 16
        %v4920 = vshll.u32 %v4916, 16
        %v4921 = vshrl.u32 %v4916, 16
        %vm4922 = vc.u32 %v4914, %v4918
        %v4923 = vsel %vm4922, 1, 0
        %v4924 = vadd.s32 %v4914, %v4918
        %v4925 = vadd.s32 %v4917, %v4923
        %vm4926 = vc.u32 %v4924, %v4920
        %v4927 = vsel %vm4926, 1, 0
        %v4928 = vadd.s32 %v4924, %v4920
        %v4929 = vadd.s32 %v4925, %v4927
        %v4930 = vadd.s32 %v4929, %v4919
        %v4931 = vadd.s32 %v4930, %v4921
        %v4932 = vmul.u32 %v4887, %v4878
        %v4933 = vadd.s32 %v4909, %v4928
        %vm4934 = vc.u32 %v4909, %v4928
        %v4935 = vadd.s32 %v4931, 1
        %v4936 = vsel %vm4934, %v4935, %v4931
        %v4937 = vadd.s32 %v4932, %v4936
        %v4938 = vadd.s32 %v4937, 536870912
        %v4939 = vshrl.u32 %v4938, 30
        %v4940 = vshll.u32 %v4939, 30
        %v4941 = vsub.s32 %v4937, %v4940
        %vm4942 = vcmp.lt.s32.totalorder %v4941, 0
        %v4943 = vsub.s32 0, %v4941
        %v4944 = vsel %vm4942, %v4943, %v4941
        %v4945 = vclz %v4944
        %v4946 = vsub.s32 %v4945, 2
        %vm4947 = vcmp.gt.s32.totalorder 0, %v4946
        %v4948 = vsel %vm4947, 0, %v4946
        %v4949 = vsub.s32 32, %v4948
        %v4950 = vshll.u32 %v4941, %v4948
        %v4951 = vshrl.u32 %v4933, %v4949
        %v4952 = vor.u32 %v4950, %v4951
        %v4953 = vsub.s32 4294967266, %v4948
        %v4954 = vadd.s32 %v4953, 127
        %v4955 = vshll.u32 %v4954, 23
        %v4956 = vor.u32 4788187, %v4955
        %v4957 = vand.u32 2147483647, %v4956
        %v4959 = vcvt.s32.f32 %v4952
        %v4960 = vmul.f32 %v4959, %v4957
        %v4961 = vxor.u32 %v4960, 2147483648
        %v4962 = vsel %vm4841, %v4961, %v4960
        %v4963 = vsub.s32 4, %v4939
        %v4964 = vsel %vm4841, %v4963, %v4939
        %v4965 = vsel %vm4840, %v341, %v4962
        %v4966 = vsel %vm4840, 0, %v4964
        %v4967 = vmul.f32 %v4965, %v4965
        %v4968 = vmul.f32 %v4967, -0.001358992
        %v4969 = vadd.f32 %v4968, 0.041655596
        %v4970 = vmul.f32 %v4967, %v4969
        %v4971 = vadd.f32 %v4970, -0.4999988
        %v4972 = vmul.f32 %v4967, %v4971
        %v4973 = vadd.f32 1.0, %v4972
        %v4974 = vmul.f32 %v4965, %v4965
        %v4975 = vmul.f32 %v4974, -0.00019511016
        %v4976 = vadd.f32 %v4975, 0.008332121
        %v4977 = vmul.f32 %v4974, %v4976
        %v4978 = vadd.f32 %v4977, -0.16666654
        %v4979 = vmul.f32 %v4974, %v4978
        %v4980 = vadd.f32 %v4979, 1.0
        %v4981 = vmul.f32 %v4980, %v4965
        %vm4982 = vweird.f32 %v341
        %v4983 = vadd.s32 %v4966, 3
        %v4984 = vand.u32 %v4983, 3
        %vm4985 = vcmp.lt.s32.totalorder %v4984, 2
        %vm4986 = vcmp.eq.s32.totalorder %v4984, 0
        %v4987 = vxor.u32 %v4981, 2147483648
        %v4988 = vsel %vm4986, %v4973, %v4987
        %vm4989 = vcmp.eq.s32.totalorder %v4984, 2
        %v4990 = vxor.u32 %v4973, 2147483648
        %v4991 = vsel %vm4989, %v4990, %v4981
        %v4992 = vsel %vm4985, %v4988, %v4991
        %v4993 = vsel %vm4982, nan, %v4992
        %v4994 = vand.u32 2147483647, %v342
        %vm4995 = vcmp.le.f32.partialorder %v4994, 0.7853982
        %vm4996 = vcmp.lt.s32.totalorder %v342, 0
        %v4997 = vand.u32 %v342, 2139095040
        %v4998 = vshrl.u32 %v4997, 23
        %v4999 = vsub.s32 %v4998, 127
        %v5000 = vand.u32 2147483647, %v342
        %v5001 = vand.u32 %v5000, 8388607
        %v5002 = vor.u32 %v5001, 8388608
        %v5003 = vsub.s32 0, %v5002
        %v5004 = vadd.s32 %v4999, 1
        %vm5005 = vcmp.gt.s32.totalorder %v5004, 0
        %v5006 = vsel %vm5005, %v5004, 0
        %v5007 = vshrl.u32 %v5006, 5
        %v5008 = vand.u32 %v5006, 31
        %v5009 = vsub.s32 32, %v5008
        %v5010 = vshrl.u32 683565275, %v5009
        %v5011 = vshll.u32 683565275, %v5008
        %v5012 = vshrl.u32 2475754826, %v5009
        %v5013 = vor.u32 %v5011, %v5012
        %v5014 = vshll.u32 2475754826, %v5008
        %v5015 = vshrl.u32 2131351028, %v5009
        %v5016 = vor.u32 %v5014, %v5015
        %v5017 = vshll.u32 2131351028, %v5008
        %v5018 = vshrl.u32 2102212464, %v5009
        %v5019 = vor.u32 %v5017, %v5018
        %v5020 = vshll.u32 2102212464, %v5008
        %v5021 = vshrl.u32 920167782, %v5009
        %v5022 = vor.u32 %v5020, %v5021
        %v5023 = vshll.u32 920167782, %v5008
        %v5024 = vshrl.u32 1326507024, %v5009
        %v5025 = vor.u32 %v5023, %v5024
        %vm5026 = vcmp.lt.s32.totalorder %v5007, 1
        %vm5027 = vcmp.lt.s32.totalorder %v5007, 2
        %vm5028 = vcmp.lt.s32.totalorder %v5007, 3
        %vm5029 = vcmp.lt.s32.totalorder %v5007, 4
        %v5030 = vsel %vm5026, %v5010, %v5013
        %v5031 = vsel %vm5029, %v5019, 2102212464
        %v5032 = vsel %vm5028, %v5016, %v5031
        %v5033 = vsel %vm5027, %v5030, %v5032
        %v5034 = vsel %vm5026, %v5013, %v5016
        %v5035 = vsel %vm5029, %v5022, 920167782
        %v5036 = vsel %vm5028, %v5019, %v5035
        %v5037 = vsel %vm5027, %v5034, %v5036
        %v5038 = vsel %vm5026, %v5016, %v5019
        %v5039 = vsel %vm5029, %v5025, 1326507024
        %v5040 = vsel %vm5028, %v5022, %v5039
        %v5041 = vsel %vm5027, %v5038, %v5040
        %v5042 = vshll.u32 %v5002, 8
        %v5043 = vand.u32 %v5042, 65535
        %v5044 = vshrl.u32 %v5042, 16
        %v5045 = vand.u32 %v5041, 65535
        %v5046 = vshrl.u32 %v5041, 16
        %v5047 = vmul.u32 %v5043, %v5045
        %v5048 = vmul.u32 %v5043, %v5046
        %v5049 = vmul.u32 %v5044, %v5045
        %v5050 = vmul.u32 %v5044, %v5046
        %v5051 = vshll.u32 %v5048, 16
        %v5052 = vshrl.u32 %v5048, 16
        %v5053 = vshll.u32 %v5049, 16
        %v5054 = vshrl.u32 %v5049, 16
        %vm5055 = vc.u32 %v5047, %v5051
        %v5056 = vsel %vm5055, 1, 0
        %v5057 = vadd.s32 %v5047, %v5051
        %v5058 = vadd.s32 %v5050, %v5056
        %vm5059 = vc.u32 %v5057, %v5053
        %v5060 = vsel %vm5059, 1, 0
        %v5061 = vadd.s32 %v5057, %v5053
        %v5062 = vadd.s32 %v5058, %v5060
        %v5063 = vadd.s32 %v5062, %v5052
        %v5064 = vadd.s32 %v5063, %v5054
        %v5065 = vand.u32 %v5042, 65535
        %v5066 = vshrl.u32 %v5042, 16
        %v5067 = vand.u32 %v5037, 65535
        %v5068 = vshrl.u32 %v5037, 16
        %v5069 = vmul.u32 %v5065, %v5067
        %v5070 = vmul.u32 %v5065, %v5068
        %v5071 = vmul.u32 %v5066, %v5067
        %v5072 = vmul.u32 %v5066, %v5068
        %v5073 = vshll.u32 %v5070, 16
        %v5074 = vshrl.u32 %v5070, 16
        %v5075 = vshll.u32 %v5071, 16
        %v5076 = vshrl.u32 %v5071, 16
        %vm5077 = vc.u32 %v5069, %v5073
        %v5078 = vsel %vm5077, 1, 0
        %v5079 = vadd.s32 %v5069, %v5073
        %v5080 = vadd.s32 %v5072, %v5078
        %vm5081 = vc.u32 %v5079, %v5075
        %v5082 = vsel %vm5081, 1, 0
        %v5083 = vadd.s32 %v5079, %v5075
        %v5084 = vadd.s32 %v5080, %v5082
        %v5085 = vadd.s32 %v5084, %v5074
        %v5086 = vadd.s32 %v5085, %v5076
        %v5087 = vmul.u32 %v5042, %v5033
        %v5088 = vadd.s32 %v5064, %v5083
        %vm5089 = vc.u32 %v5064, %v5083
        %v5090 = vadd.s32 %v5086, 1
        %v5091 = vsel %vm5089, %v5090, %v5086
        %v5092 = vadd.s32 %v5087, %v5091
        %v5093 = vadd.s32 %v5092, 536870912
        %v5094 = vshrl.u32 %v5093, 30
        %v5095 = vshll.u32 %v5094, 30
        %v5096 = vsub.s32 %v5092, %v5095
        %vm5097 = vcmp.lt.s32.totalorder %v5096, 0
        %v5098 = vsub.s32 0, %v5096
        %v5099 = vsel %vm5097, %v5098, %v5096
        %v5100 = vclz %v5099
        %v5101 = vsub.s32 %v5100, 2
        %vm5102 = vcmp.gt.s32.totalorder 0, %v5101
        %v5103 = vsel %vm5102, 0, %v5101
        %v5104 = vsub.s32 32, %v5103
        %v5105 = vshll.u32 %v5096, %v5103
        %v5106 = vshrl.u32 %v5088, %v5104
        %v5107 = vor.u32 %v5105, %v5106
        %v5108 = vsub.s32 4294967266, %v5103
        %v5109 = vadd.s32 %v5108, 127
        %v5110 = vshll.u32 %v5109, 23
        %v5111 = vor.u32 4788187, %v5110
        %v5112 = vand.u32 2147483647, %v5111
        %v5114 = vcvt.s32.f32 %v5107
        %v5115 = vmul.f32 %v5114, %v5112
        %v5116 = vxor.u32 %v5115, 2147483648
        %v5117 = vsel %vm4996, %v5116, %v5115
        %v5118 = vsub.s32 4, %v5094
        %v5119 = vsel %vm4996, %v5118, %v5094
        %v5120 = vsel %vm4995, %v342, %v5117
        %v5121 = vsel %vm4995, 0, %v5119
        %v5122 = vmul.f32 %v5120, %v5120
        %v5123 = vmul.f32 %v5122, -0.001358992
        %v5124 = vadd.f32 %v5123, 0.041655596
        %v5125 = vmul.f32 %v5122, %v5124
        %v5126 = vadd.f32 %v5125, -0.4999988
        %v5127 = vmul.f32 %v5122, %v5126
        %v5128 = vadd.f32 1.0, %v5127
        %v5129 = vmul.f32 %v5120, %v5120
        %v5130 = vmul.f32 %v5129, -0.00019511016
        %v5131 = vadd.f32 %v5130, 0.008332121
        %v5132 = vmul.f32 %v5129, %v5131
        %v5133 = vadd.f32 %v5132, -0.16666654
        %v5134 = vmul.f32 %v5129, %v5133
        %v5135 = vadd.f32 %v5134, 1.0
        %v5136 = vmul.f32 %v5135, %v5120
        %vm5137 = vweird.f32 %v342
        %v5138 = vadd.s32 %v5121, 3
        %v5139 = vand.u32 %v5138, 3
        %vm5140 = vcmp.lt.s32.totalorder %v5139, 2
        %vm5141 = vcmp.eq.s32.totalorder %v5139, 0
        %v5142 = vxor.u32 %v5136, 2147483648
        %v5143 = vsel %vm5141, %v5128, %v5142
        %vm5144 = vcmp.eq.s32.totalorder %v5139, 2
        %v5145 = vxor.u32 %v5128, 2147483648
        %v5146 = vsel %vm5144, %v5145, %v5136
        %v5147 = vsel %vm5140, %v5143, %v5146
        %v5148 = vsel %vm5137, nan, %v5147
        %v5149 = vand.u32 2147483647, %v343
        %vm5150 = vcmp.le.f32.partialorder %v5149, 0.7853982
        %vm5151 = vcmp.lt.s32.totalorder %v343, 0
        %v5152 = vand.u32 %v343, 2139095040
        %v5153 = vshrl.u32 %v5152, 23
        %v5154 = vsub.s32 %v5153, 127
        %v5155 = vand.u32 2147483647, %v343
        %v5156 = vand.u32 %v5155, 8388607
        %v5157 = vor.u32 %v5156, 8388608
        %v5158 = vsub.s32 0, %v5157
        %v5159 = vadd.s32 %v5154, 1
        %vm5160 = vcmp.gt.s32.totalorder %v5159, 0
        %v5161 = vsel %vm5160, %v5159, 0
        %v5162 = vshrl.u32 %v5161, 5
        %v5163 = vand.u32 %v5161, 31
        %v5164 = vsub.s32 32, %v5163
        %v5165 = vshrl.u32 683565275, %v5164
        %v5166 = vshll.u32 683565275, %v5163
        %v5167 = vshrl.u32 2475754826, %v5164
        %v5168 = vor.u32 %v5166, %v5167
        %v5169 = vshll.u32 2475754826, %v5163
        %v5170 = vshrl.u32 2131351028, %v5164
        %v5171 = vor.u32 %v5169, %v5170
        %v5172 = vshll.u32 2131351028, %v5163
        %v5173 = vshrl.u32 2102212464, %v5164
        %v5174 = vor.u32 %v5172, %v5173
        %v5175 = vshll.u32 2102212464, %v5163
        %v5176 = vshrl.u32 920167782, %v5164
        %v5177 = vor.u32 %v5175, %v5176
        %v5178 = vshll.u32 920167782, %v5163
        %v5179 = vshrl.u32 1326507024, %v5164
        %v5180 = vor.u32 %v5178, %v5179
        %vm5181 = vcmp.lt.s32.totalorder %v5162, 1
        %vm5182 = vcmp.lt.s32.totalorder %v5162, 2
        %vm5183 = vcmp.lt.s32.totalorder %v5162, 3
        %vm5184 = vcmp.lt.s32.totalorder %v5162, 4
        %v5185 = vsel %vm5181, %v5165, %v5168
        %v5186 = vsel %vm5184, %v5174, 2102212464
        %v5187 = vsel %vm5183, %v5171, %v5186
        %v5188 = vsel %vm5182, %v5185, %v5187
        %v5189 = vsel %vm5181, %v5168, %v5171
        %v5190 = vsel %vm5184, %v5177, 920167782
        %v5191 = vsel %vm5183, %v5174, %v5190
        %v5192 = vsel %vm5182, %v5189, %v5191
        %v5193 = vsel %vm5181, %v5171, %v5174
        %v5194 = vsel %vm5184, %v5180, 1326507024
        %v5195 = vsel %vm5183, %v5177, %v5194
        %v5196 = vsel %vm5182, %v5193, %v5195
        %v5197 = vshll.u32 %v5157, 8
        %v5198 = vand.u32 %v5197, 65535
        %v5199 = vshrl.u32 %v5197, 16
        %v5200 = vand.u32 %v5196, 65535
        %v5201 = vshrl.u32 %v5196, 16
        %v5202 = vmul.u32 %v5198, %v5200
        %v5203 = vmul.u32 %v5198, %v5201
        %v5204 = vmul.u32 %v5199, %v5200
        %v5205 = vmul.u32 %v5199, %v5201
        %v5206 = vshll.u32 %v5203, 16
        %v5207 = vshrl.u32 %v5203, 16
        %v5208 = vshll.u32 %v5204, 16
        %v5209 = vshrl.u32 %v5204, 16
        %vm5210 = vc.u32 %v5202, %v5206
        %v5211 = vsel %vm5210, 1, 0
        %v5212 = vadd.s32 %v5202, %v5206
        %v5213 = vadd.s32 %v5205, %v5211
        %vm5214 = vc.u32 %v5212, %v5208
        %v5215 = vsel %vm5214, 1, 0
        %v5216 = vadd.s32 %v5212, %v5208
        %v5217 = vadd.s32 %v5213, %v5215
        %v5218 = vadd.s32 %v5217, %v5207
        %v5219 = vadd.s32 %v5218, %v5209
        %v5220 = vand.u32 %v5197, 65535
        %v5221 = vshrl.u32 %v5197, 16
        %v5222 = vand.u32 %v5192, 65535
        %v5223 = vshrl.u32 %v5192, 16
        %v5224 = vmul.u32 %v5220, %v5222
        %v5225 = vmul.u32 %v5220, %v5223
        %v5226 = vmul.u32 %v5221, %v5222
        %v5227 = vmul.u32 %v5221, %v5223
        %v5228 = vshll.u32 %v5225, 16
        %v5229 = vshrl.u32 %v5225, 16
        %v5230 = vshll.u32 %v5226, 16
        %v5231 = vshrl.u32 %v5226, 16
        %vm5232 = vc.u32 %v5224, %v5228
        %v5233 = vsel %vm5232, 1, 0
        %v5234 = vadd.s32 %v5224, %v5228
        %v5235 = vadd.s32 %v5227, %v5233
        %vm5236 = vc.u32 %v5234, %v5230
        %v5237 = vsel %vm5236, 1, 0
        %v5238 = vadd.s32 %v5234, %v5230
        %v5239 = vadd.s32 %v5235, %v5237
        %v5240 = vadd.s32 %v5239, %v5229
        %v5241 = vadd.s32 %v5240, %v5231
        %v5242 = vmul.u32 %v5197, %v5188
        %v5243 = vadd.s32 %v5219, %v5238
        %vm5244 = vc.u32 %v5219, %v5238
        %v5245 = vadd.s32 %v5241, 1
        %v5246 = vsel %vm5244, %v5245, %v5241
        %v5247 = vadd.s32 %v5242, %v5246
        %v5248 = vadd.s32 %v5247, 536870912
        %v5249 = vshrl.u32 %v5248, 30
        %v5250 = vshll.u32 %v5249, 30
        %v5251 = vsub.s32 %v5247, %v5250
        %vm5252 = vcmp.lt.s32.totalorder %v5251, 0
        %v5253 = vsub.s32 0, %v5251
        %v5254 = vsel %vm5252, %v5253, %v5251
        %v5255 = vclz %v5254
        %v5256 = vsub.s32 %v5255, 2
        %vm5257 = vcmp.gt.s32.totalorder 0, %v5256
        %v5258 = vsel %vm5257, 0, %v5256
        %v5259 = vsub.s32 32, %v5258
        %v5260 = vshll.u32 %v5251, %v5258
        %v5261 = vshrl.u32 %v5243, %v5259
        %v5262 = vor.u32 %v5260, %v5261
        %v5263 = vsub.s32 4294967266, %v5258
        %v5264 = vadd.s32 %v5263, 127
        %v5265 = vshll.u32 %v5264, 23
        %v5266 = vor.u32 4788187, %v5265
        %v5267 = vand.u32 2147483647, %v5266
        %v5269 = vcvt.s32.f32 %v5262
        %v5270 = vmul.f32 %v5269, %v5267
        %v5271 = vxor.u32 %v5270, 2147483648
        %v5272 = vsel %vm5151, %v5271, %v5270
        %v5273 = vsub.s32 4, %v5249
        %v5274 = vsel %vm5151, %v5273, %v5249
        %v5275 = vsel %vm5150, %v343, %v5272
        %v5276 = vsel %vm5150, 0, %v5274
        %v5277 = vmul.f32 %v5275, %v5275
        %v5278 = vmul.f32 %v5277, -0.001358992
        %v5279 = vadd.f32 %v5278, 0.041655596
        %v5280 = vmul.f32 %v5277, %v5279
        %v5281 = vadd.f32 %v5280, -0.4999988
        %v5282 = vmul.f32 %v5277, %v5281
        %v5283 = vadd.f32 1.0, %v5282
        %v5284 = vmul.f32 %v5275, %v5275
        %v5285 = vmul.f32 %v5284, -0.00019511016
        %v5286 = vadd.f32 %v5285, 0.008332121
        %v5287 = vmul.f32 %v5284, %v5286
        %v5288 = vadd.f32 %v5287, -0.16666654
        %v5289 = vmul.f32 %v5284, %v5288
        %v5290 = vadd.f32 %v5289, 1.0
        %v5291 = vmul.f32 %v5290, %v5275
        %vm5292 = vweird.f32 %v343
        %v5293 = vadd.s32 %v5276, 3
        %v5294 = vand.u32 %v5293, 3
        %vm5295 = vcmp.lt.s32.totalorder %v5294, 2
        %vm5296 = vcmp.eq.s32.totalorder %v5294, 0
        %v5297 = vxor.u32 %v5291, 2147483648
        %v5298 = vsel %vm5296, %v5283, %v5297
        %vm5299 = vcmp.eq.s32.totalorder %v5294, 2
        %v5300 = vxor.u32 %v5283, 2147483648
        %v5301 = vsel %vm5299, %v5300, %v5291
        %v5302 = vsel %vm5295, %v5298, %v5301
        %v5303 = vsel %vm5292, nan, %v5302
        %5304 = vst [vmem:[%s164] sm:$0xff] %v498
        %5305 = vst [vmem:[%s164 + $0x8] sm:$0xff] %v653
        %5306 = vst [vmem:[%s164 + $0x10] sm:$0xff] %v808
        %5307 = vst [vmem:[%s164 + $0x18] sm:$0xff] %v963
        %5308 = vst [vmem:[%s164 + $0x20] sm:$0xff] %v1118
        %5309 = vst [vmem:[%s164 + $0x28] sm:$0xff] %v1273
        %5310 = vst [vmem:[%s164 + $0x30] sm:$0xff] %v1428
        %5311 = vst [vmem:[%s164 + $0x38] sm:$0xff] %v1583
        %5312 = vst [vmem:[%s164 + $0x40] sm:$0xff] %v1738
        %5313 = vst [vmem:[%s164 + $0x48] sm:$0xff] %v1893
        %5314 = vst [vmem:[%s164 + $0x50] sm:$0xff] %v2048
        %5315 = vst [vmem:[%s164 + $0x58] sm:$0xff] %v2203
        %5316 = vst [vmem:[%s164 + $0x60] sm:$0xff] %v2358
        %5317 = vst [vmem:[%s164 + $0x68] sm:$0xff] %v2513
        %5318 = vst [vmem:[%s164 + $0x70] sm:$0xff] %v2668
        %5319 = vst [vmem:[%s164 + $0x78] sm:$0xff] %v2823
        %5320 = vst [vmem:[%s164 + $0x80] sm:$0xff] %v2978
        %5321 = vst [vmem:[%s164 + $0x88] sm:$0xff] %v3133
        %5322 = vst [vmem:[%s164 + $0x90] sm:$0xff] %v3288
        %5323 = vst [vmem:[%s164 + $0x98] sm:$0xff] %v3443
        %5324 = vst [vmem:[%s164 + $0xa0] sm:$0xff] %v3598
        %5325 = vst [vmem:[%s164 + $0xa8] sm:$0xff] %v3753
        %5326 = vst [vmem:[%s164 + $0xb0] sm:$0xff] %v3908
        %5327 = vst [vmem:[%s164 + $0xb8] sm:$0xff] %v4063
        %5328 = vst [vmem:[%s164 + $0xc0] sm:$0xff] %v4218
        %5329 = vst [vmem:[%s164 + $0xc8] sm:$0xff] %v4373
        %5330 = vst [vmem:[%s164 + $0xd0] sm:$0xff] %v4528
        %5331 = vst [vmem:[%s164 + $0xd8] sm:$0xff] %v4683
        %5332 = vst [vmem:[%s164 + $0xe0] sm:$0xff] %v4838
        %5333 = vst [vmem:[%s164 + $0xe8] sm:$0xff] %v4993
        %5334 = vst [vmem:[%s164 + $0xf0] sm:$0xff] %v5148
        %5335 = vst [vmem:[%s164 + $0xf8] sm:$0xff] %v5303
        %s5336 = sand.u32 %s93, 1
        %s5337 = scalar_lea.sflag [#allocation3], %s5336
        %s5338 = sand.u32 %s93, 1
        %s5339 = smul.addr %s5338, 256
        %s5340 = scalar_lea.vmem [#allocation2], %s5339
        // Predicated region
        $region33: #{tpu_custom_call.1} parent=31 // pred_check
          %p5341 = pneg %p103
        $region34: #{tpu_custom_call.1} parent=31 // pred_check_branch
          %5343 = sbr.rel (%p5341) target = $region36
        $region35: #{tpu_custom_call.1} parent=31 // pred_region
          %s5344 = smul.u32 16, %s17
          %5346 = vsyncadd %s5337, 0
          %s5347 = smul.addr %s5344, 2
          %s5348 = smul.addr %s5347, 8
          %s5349 = scalar_lea.hbm %s3, %s5348
          %s5350 = sshll.u32 %s5340, 4
          %s5351 = int_to_ptr.vmem [resolvable:$true] %s5350
          %s5352 = sshll.u32 %s5349, 4
          %s5353 = int_to_ptr.hbm [resolvable:$true] %s5352
          %5358 = dma.vmem_to_hbm [thread:$0]  %s5351, 4096, %s5353, %s5337, 256, 256, 16
        $region36: #{tpu_custom_call.1} parent=31 // pred_fallthru
          _
      $region32: #{tpu_custom_call.1} parent=5 // pred_fallthru
        _
      %p5359 = scmp.le.s32.totalorder 2, %s12
      // Predicated region
      $region37: #{tpu_custom_call.1} parent=5 // pred_check
        %p5360 = pneg %p5359
      $region38: #{tpu_custom_call.1} parent=5 // pred_check_branch
        %5362 = sbr.rel (%p5360) target = $region40
      $region39: #{tpu_custom_call.1} parent=5 // pred_region
        %s5363 = ssub.s32 %s12, 2
        // Predicated region
        $region41: #{tpu_custom_call.1} parent=39 // pred_check
          %p5364 = pneg %p109
        $region42: #{tpu_custom_call.1} parent=39 // pred_check_branch
          %5366 = sbr.rel (%p5364) target = $region44
        $region43: #{tpu_custom_call.1} parent=39 // pred_region
          %s5367 = sand.u32 %s94, 1
          %s5368 = scalar_lea.sflag [#allocation3], %s5367
          %s5369 = sand.u32 %s94, 1
          %s5370 = smul.addr %s5369, 256
          %s5371 = scalar_lea.vmem [#allocation2], %s5370
          %5373 = dma.done %s5368, 4096
        $region44: #{tpu_custom_call.1} parent=39 // pred_fallthru
          _
      $region40: #{tpu_custom_call.1} parent=5 // pred_fallthru
        _
    $region6: #{tpu_custom_call.1} parent=1 // loop_footer
      %s16 = sadd.s32 1, %s12
    $region7: #{tpu_custom_call.1} parent=1 // loop_footer_branch
      %11 = sbr.rel target = $region3
    $region8: #{tpu_custom_call.1} parent=1 // loop_exit
      _
    %5374 = vsyncpa [#allocation3], 1
    %s5375 = scalar_lea.sflag [#allocation3], 1
    %5376 = vsyncpa %s5375, 1

</llo_original>
